<compile_context>
chip_gen: v6e
topology: v6e:2x2x1
jax: 0.10.0
libtpu: 0.0.40
codegen_flags: <defaults>
</compile_context>

<pallas_src>
import jax
import jax.numpy as jnp
from jax import lax
from jax.experimental import pallas as pl
from jax.experimental.pallas import tpu as pltpu

# ---- hyper-params from the PyTorch script ----
HIDDEN_SIZE = 128
NUM_HIDDEN_INPUT = 768
NUM_MAPS1 = 48
NUM_MAPS2 = 64
WAKE_WORDS = ("hey", "computer")          # stand-in for config_datos['wake_words']
NUM_LABELS = len(WAKE_WORDS) + 1          # = 3
BN_EPS = 1e-5

# ---- static geometry for the (B, 1, 63, 40) input (T=63 frames, 40 mels) ----
# After the in-forward permute the convs see (B, 1, 40, 63).
OH0, OW0 = 21, 24        # conv0 output (only rows 0..19 are needed by the pool)
PH1, PW1 = 10, 12        # after first MaxPool2d(2)
PH2, PW2 = 2, 6          # after second MaxPool2d(2)  -> 64*2*6 = 768 features
M0 = 4 * PH1 * PW1       # 480 conv0 GEMM rows, ordered as 4 pool blocks of 120
FBUF_ROWS = 2 + 7 * PW1 + 2   # 88: parity-split conv1 input buffer (+ margins)


# ---------------- the single fused Pallas kernel ----------------
def cnn_kernel(patches_ref, w0_ref, b0_ref, bn1s_ref, bn1b_ref,
               w1_ref, b1_ref, bn2s_ref, bn2b_ref, mask_ref,
               wl1_ref, bl1_ref, wl2_ref, bl2_ref,
               out_ref, fe_ref, fo_ref):
    f32, bf16 = jnp.float32, jnp.bfloat16

    # ---- conv0 as one MXU GEMM (+bias+ReLU) --------------------------------
    # patch rows are ordered (kH, kW, r, c): four contiguous 120-row blocks,
    # one per element of every 2x2 pool window.
    y0 = jnp.dot(patches_ref[0], w0_ref[...], preferred_element_type=f32)
    y0 = jnp.maximum(y0 + b0_ref[...], 0.0)                        # (480, 48)

    # ---- fused MaxPool2d(2) + eval BatchNorm1 ------------------------------
    m1 = jnp.maximum(jnp.maximum(y0[0:120], y0[120:240]),
                     jnp.maximum(y0[240:360], y0[360:480]))        # (120, 48)
    y1 = m1 * bn1s_ref[...] + bn1b_ref[...]                        # rows = h*12 + w

    # ---- scatter the pooled map into H-parity-split, zero-margined buffers -
    # Buffer row = 2 + g*12 + w, where group g holds padded conv1-input row
    # hp = 2g (even buffer) / 2g+1 (odd buffer); groups 0 and 6 stay zero
    # (H padding), margins absorb W-halo overreads (masked anyway).
    fe_ref[...] = jnp.zeros((FBUF_ROWS, NUM_MAPS1), f32)
    fo_ref[...] = jnp.zeros((FBUF_ROWS, NUM_MAPS1), f32)
    for h in range(PH1):                                           # 10 rows
        blk = y1[h * PW1:(h + 1) * PW1, :]                         # (12, 48)
        base = 2 + (h // 2 + 1) * PW1
        if h % 2 == 0:
            fe_ref[base:base + PW1, :] = blk
        else:
            fo_ref[base:base + PW1, :] = blk

    # ---- conv1 as 25 accumulated (48,48)@(48,64) MXU dots ------------------
    # Output rows = oh2*12 + ow2 with oh2 in 0..3 (row 4 is dropped by pool2).
    acc = jnp.zeros((4 * PW1, NUM_MAPS2), f32)                     # (48, 64)
    for i in range(5):                                             # kH tap
        src = fe_ref if i % 2 == 0 else fo_ref
        r0 = i // 2
        for j in range(5):                                         # kW tap
            start = 2 + r0 * PW1 + (j - 2)
            lhs = src[start:start + 48, :] * mask_ref[j]           # zero W halo
            acc = acc + jnp.dot(lhs.astype(bf16), w1_ref[i, j],
                                preferred_element_type=f32)
    z = jnp.maximum(acc + b1_ref[...], 0.0)                        # (48, 64)

    # ---- fused MaxPool2d(2) + BatchNorm2 + NCHW flatten + Linear(768,128) --
    mh0 = jnp.maximum(z[0:12], z[12:24])                           # pooled row 0
    mh1 = jnp.maximum(z[24:36], z[36:48])                          # pooled row 1
    h1 = jnp.zeros((1, HIDDEN_SIZE), f32)
    for p in range(PH2 * PW2):                                     # p = h2*6 + w2
        src = mh0 if p < PW2 else mh1
        c2 = p % PW2
        row = jnp.maximum(src[2 * c2:2 * c2 + 1, :],
                          src[2 * c2 + 1:2 * c2 + 2, :])           # (1, 64)
        row = row * bn2s_ref[...] + bn2b_ref[...]
        # wl1 was pre-permuted per pooled position p, so summing these 12
        # small dots reproduces PyTorch's NCHW view(-1, 768) @ W1^T exactly.
        h1 = h1 + jnp.dot(row.astype(bf16), wl1_ref[p],
                          preferred_element_type=f32)

    hidden = jnp.maximum(h1 + bl1_ref[...], 0.0)                   # Dropout = id
    logits = jnp.dot(hidden.astype(bf16), wl2_ref[...],
                     preferred_element_type=f32) + bl2_ref[...]
    out_ref[0] = logits                                            # (1, 3)


# ---------------- host glue ----------------
def _conv0_patches(x):
    """im2col for conv0, rows pre-ordered as (kH, kW, r, c) pool blocks."""
    B = x.shape[0]
    xs = jnp.transpose(x[:, :1], (0, 1, 3, 2))[:, 0]               # (B, 40, 63)
    xp = jnp.pad(xs, ((0, 0), (4, 4), (0, 0)))                     # (B, 48, 63)
    cols = []
    for i in range(8):                                             # kH
        for j in range(16):                                        # kW
            cols.append(lax.slice(xp, (0, i, j),
                                  (B, i + 2 * (OH0 - 1) + 1, j + 2 * (OW0 - 1) + 1),
                                  (1, 2, 2)))                      # (B, 21, 24)
    pstd = jnp.stack(cols, axis=-1)                                # (B, 21, 24, 128)
    # keep only the 20 conv rows the floor pool consumes; reorder rows into
    # 4 contiguous pool blocks: m = kH*240 + kW*120 + r*12 + c
    p4 = pstd[:, :2 * PH1].reshape(B, PH1, 2, PW1, 2, 128)
    p4 = jnp.transpose(p4, (0, 2, 4, 1, 3, 5)).reshape(B, M0, 128)
    return p4.astype(jnp.bfloat16)


def prepare_params(p):
    """One-time repack of PyTorch-layout parameters into kernel layouts."""
    bf16, f32 = jnp.bfloat16, jnp.float32
    kp = {}
    # conv0 (48,1,8,16) -> (128, 48); K index = i*16 + j matches the im2col.
    kp["w0"] = jnp.transpose(p["w0"], (2, 3, 1, 0)).reshape(128, NUM_MAPS1).astype(bf16)
    kp["b0"] = p["b0"].reshape(1, NUM_MAPS1).astype(f32)
    kp["bn1s"] = p["bn1_scale"].reshape(1, NUM_MAPS1).astype(f32)
    kp["bn1b"] = p["bn1_shift"].reshape(1, NUM_MAPS1).astype(f32)
    # conv1 (64,48,5,5) -> (5,5,48,64): w1[i,j] is the (Cin, Cout) tap matrix.
    kp["w1"] = jnp.transpose(p["w1"], (2, 3, 1, 0)).astype(bf16)
    kp["b1"] = p["b1"].reshape(1, NUM_MAPS2).astype(f32)
    kp["bn2s"] = p["bn2_scale"].reshape(1, NUM_MAPS2).astype(f32)
    kp["bn2b"] = p["bn2_shift"].reshape(1, NUM_MAPS2).astype(f32)
    # conv1 W-halo masks: tap j contributes 0 where ow2 + j - 2 is outside [0,11].
    ow2 = jnp.arange(4 * PW1, dtype=jnp.int32).reshape(4 * PW1, 1) % PW1
    kp["mask"] = jnp.stack(
        [((ow2 + (j - 2) >= 0) & (ow2 + (j - 2) <= PW1 - 1)).astype(f32)
         for j in range(5)], axis=0)                               # (5, 48, 1)
    # Linear1 (768,128): permute rows so in-kernel accumulation over the 12
    # pooled positions matches PyTorch's NCHW view(-1, 768) ordering.
    wl1c = p["wl1"].reshape(NUM_MAPS2, PH2 * PW2, HIDDEN_SIZE)     # [c, p, n]
    kp["wl1"] = jnp.transpose(wl1c, (1, 0, 2)).astype(bf16)        # (12, 64, 128)
    kp["bl1"] = p["bl1"].reshape(1, HIDDEN_SIZE).astype(f32)
    kp["wl2"] = p["wl2"].astype(bf16)                              # (128, 3)
    kp["bl2"] = p["bl2"].reshape(1, NUM_LABELS).astype(f32)
    return kp


@jax.jit
def cnn_forward(x, kp):
    B = x.shape[0]
    patches = _conv0_patches(x)                                    # (B, 480, 128) bf16

    grid_spec = pltpu.PrefetchScalarGridSpec(
        num_scalar_prefetch=0,
        grid=(B,),
        in_specs=[
            pl.BlockSpec((1, M0, 128), lambda b: (b, 0, 0)),                  # patches
            pl.BlockSpec((128, NUM_MAPS1), lambda b: (0, 0)),                 # w0
            pl.BlockSpec((1, NUM_MAPS1), lambda b: (0, 0)),                   # b0
            pl.BlockSpec((1, NUM_MAPS1), lambda b: (0, 0)),                   # bn1 scale
            pl.BlockSpec((1, NUM_MAPS1), lambda b: (0, 0)),                   # bn1 shift
            pl.BlockSpec((5, 5, NUM_MAPS1, NUM_MAPS2), lambda b: (0, 0, 0, 0)),  # w1
            pl.BlockSpec((1, NUM_MAPS2), lambda b: (0, 0)),                   # b1
            pl.BlockSpec((1, NUM_MAPS2), lambda b: (0, 0)),                   # bn2 scale
            pl.BlockSpec((1, NUM_MAPS2), lambda b: (0, 0)),                   # bn2 shift
            pl.BlockSpec((5, 4 * PW1, 1), lambda b: (0, 0, 0)),               # W-halo mask
            pl.BlockSpec((PH2 * PW2, NUM_MAPS2, HIDDEN_SIZE), lambda b: (0, 0, 0)),  # wl1
            pl.BlockSpec((1, HIDDEN_SIZE), lambda b: (0, 0)),                 # bl1
            pl.BlockSpec((HIDDEN_SIZE, NUM_LABELS), lambda b: (0, 0)),        # wl2
            pl.BlockSpec((1, NUM_LABELS), lambda b: (0, 0)),                  # bl2
        ],
        out_specs=pl.BlockSpec((1, 1, NUM_LABELS), lambda b: (b, 0, 0)),
        scratch_shapes=[
            pltpu.VMEM((FBUF_ROWS, NUM_MAPS1), jnp.float32),       # even-row buffer
            pltpu.VMEM((FBUF_ROWS, NUM_MAPS1), jnp.float32),       # odd-row buffer
        ],
    )
    out = pl.pallas_call(
        cnn_kernel,
        out_shape=jax.ShapeDtypeStruct((B, 1, NUM_LABELS), jnp.float32),
        grid_spec=grid_spec,
        compiler_params=pltpu.CompilerParams(
            dimension_semantics=("parallel",)),                    # v7x: 2 TCs over batch
    )(patches, kp["w0"], kp["b0"], kp["bn1s"], kp["bn1b"],
      kp["w1"], kp["b1"], kp["bn2s"], kp["bn2b"], kp["mask"],
      kp["wl1"], kp["bl1"], kp["wl2"], kp["bl2"])
    return out.reshape(B, NUM_LABELS)


# ---------------- pure-JAX reference (f32) for a sanity check ----------------
def cnn_reference(x, p):
    dn = ('NCHW', 'OIHW', 'NCHW')
    xc = jnp.transpose(x[:, :1], (0, 1, 3, 2))
    y = lax.conv_general_dilated(xc, p["w0"], (2, 2), ((4, 4), (0, 0)),
                                 dimension_numbers=dn)
    y = jnp.maximum(y + p["b0"].reshape(1, -1, 1, 1), 0.0)
    y = lax.reduce_window(y, -jnp.inf, lax.max, (1, 1, 2, 2), (1, 1, 2, 2), 'VALID')
    y = y * p["bn1_scale"].reshape(1, -1, 1, 1) + p["bn1_shift"].reshape(1, -1, 1, 1)
    y = lax.conv_general_dilated(y, p["w1"], (2, 1), ((2, 2), (2, 2)),
                                 dimension_numbers=dn)
    y = jnp.maximum(y + p["b1"].reshape(1, -1, 1, 1), 0.0)
    y = lax.reduce_window(y, -jnp.inf, lax.max, (1, 1, 2, 2), (1, 1, 2, 2), 'VALID')
    y = y * p["bn2_scale"].reshape(1, -1, 1, 1) + p["bn2_shift"].reshape(1, -1, 1, 1)
    feat = y.reshape(y.shape[0], -1)
    h = jnp.maximum(feat @ p["wl1"] + p["bl1"], 0.0)
    return h @ p["wl2"] + p["bl2"]


def init_params(key):
    ks = jax.random.split(key, 16)

    def n(k, shape, s=0.05):
        return jax.random.normal(k, shape, jnp.float32) * s

    p = {}
    p["w0"] = n(ks[0], (NUM_MAPS1, 1, 8, 16))
    p["b0"] = n(ks[1], (NUM_MAPS1,))
    p["w1"] = n(ks[2], (NUM_MAPS2, NUM_MAPS1, 5, 5))
    p["b1"] = n(ks[3], (NUM_MAPS2,))

    def bn_fold(kg, kb, km, kv, c):  # eval-mode BatchNorm2d folded to scale/shift
        gamma = 1.0 + n(kg, (c,), 0.1)
        beta = n(kb, (c,), 0.1)
        rmean = n(km, (c,), 0.1)
        rvar = 1.0 + jnp.abs(n(kv, (c,), 0.1))
        scale = gamma * jax.lax.rsqrt(rvar + BN_EPS)
        return scale, beta - rmean * scale

    p["bn1_scale"], p["bn1_shift"] = bn_fold(ks[4], ks[5], ks[6], ks[7], NUM_MAPS1)
    p["bn2_scale"], p["bn2_shift"] = bn_fold(ks[8], ks[9], ks[10], ks[11], NUM_MAPS2)

    p["wl1"] = n(ks[12], (NUM_HIDDEN_INPUT, HIDDEN_SIZE))
    p["bl1"] = n(ks[13], (HIDDEN_SIZE,))
    p["wl2"] = n(ks[14], (HIDDEN_SIZE, NUM_LABELS))
    p["bl2"] = n(ks[15], (NUM_LABELS,))
    return p


if __name__ == "__main__":
    key = jax.random.PRNGKey(0)
    pkey, xkey = jax.random.split(key)
    params = init_params(pkey)
    kparams = prepare_params(params)

    # (batch=2, channels=1, time=63, mel=40): after the in-forward permute the
    # convs see (B,1,40,63) and the flattened features are exactly 768/sample.
    x = jax.random.normal(xkey, (2, 1, 63, 40), jnp.float32)

    out = cnn_forward(x, kparams)
    jax.block_until_ready(out)
    assert out.shape == (2, NUM_LABELS), out.shape

    ref = cnn_reference(x, params)
    if not jnp.allclose(out, ref, atol=5e-2, rtol=5e-2):
        raise AssertionError(
            f"kernel deviates from reference, max abs err={jnp.max(jnp.abs(out - ref))}")
    print("KERNEL_OK")
</pallas_src>

<mosaic_0001>
module attributes {stable_mosaic.version = 11 : i64} {
  func.func @cnn_kernel(%arg0: i32, %arg1: memref<1x480x128xbf16, #tpu.memory_space<vmem>>, %arg2: memref<128x48xbf16, #tpu.memory_space<vmem>>, %arg3: memref<1x48xf32, #tpu.memory_space<vmem>>, %arg4: memref<1x48xf32, #tpu.memory_space<vmem>>, %arg5: memref<1x48xf32, #tpu.memory_space<vmem>>, %arg6: memref<5x5x48x64xbf16, #tpu.memory_space<vmem>>, %arg7: memref<1x64xf32, #tpu.memory_space<vmem>>, %arg8: memref<1x64xf32, #tpu.memory_space<vmem>>, %arg9: memref<1x64xf32, #tpu.memory_space<vmem>>, %arg10: memref<5x48x1xf32, #tpu.memory_space<vmem>>, %arg11: memref<12x64x128xbf16, #tpu.memory_space<vmem>>, %arg12: memref<1x128xf32, #tpu.memory_space<vmem>>, %arg13: memref<128x3xbf16, #tpu.memory_space<vmem>>, %arg14: memref<1x3xf32, #tpu.memory_space<vmem>>, %arg15: memref<1x1x3xf32, #tpu.memory_space<vmem>>, %arg16: memref<88x48xf32, #tpu.memory_space<vmem>>, %arg17: memref<88x48xf32, #tpu.memory_space<vmem>>) attributes {dimension_semantics = [#tpu.dimension_semantics<parallel>], iteration_bounds = array<i64: 2>, scalar_prefetch = 0 : i64, scratch_operands = 2 : i64, tpu.core_type = #tpu.core_type<tc>, window_params = [{transform_indices = @transform_0, window_bounds = array<i64: 1, 480, 128>}, {pipeline_mode = #tpu.pipeline_mode<synchronous>, transform_indices = @transform_1, window_bounds = array<i64: 128, 48>}, {pipeline_mode = #tpu.pipeline_mode<synchronous>, transform_indices = @transform_2, window_bounds = array<i64: 1, 48>}, {pipeline_mode = #tpu.pipeline_mode<synchronous>, transform_indices = @transform_3, window_bounds = array<i64: 1, 48>}, {pipeline_mode = #tpu.pipeline_mode<synchronous>, transform_indices = @transform_4, window_bounds = array<i64: 1, 48>}, {pipeline_mode = #tpu.pipeline_mode<synchronous>, transform_indices = @transform_5, window_bounds = array<i64: 5, 5, 48, 64>}, {pipeline_mode = #tpu.pipeline_mode<synchronous>, transform_indices = @transform_6, window_bounds = array<i64: 1, 64>}, {pipeline_mode = #tpu.pipeline_mode<synchronous>, transform_indices = @transform_7, window_bounds = array<i64: 1, 64>}, {pipeline_mode = #tpu.pipeline_mode<synchronous>, transform_indices = @transform_8, window_bounds = array<i64: 1, 64>}, {pipeline_mode = #tpu.pipeline_mode<synchronous>, transform_indices = @transform_9, window_bounds = array<i64: 5, 48, 1>}, {pipeline_mode = #tpu.pipeline_mode<synchronous>, transform_indices = @transform_10, window_bounds = array<i64: 12, 64, 128>}, {pipeline_mode = #tpu.pipeline_mode<synchronous>, transform_indices = @transform_11, window_bounds = array<i64: 1, 128>}, {pipeline_mode = #tpu.pipeline_mode<synchronous>, transform_indices = @transform_12, window_bounds = array<i64: 128, 3>}, {pipeline_mode = #tpu.pipeline_mode<synchronous>, transform_indices = @transform_13, window_bounds = array<i64: 1, 3>}, {transform_indices = @transform_14, window_bounds = array<i64: 1, 1, 3>}]} {
    %c0 = arith.constant 0 : index
    %c0_0 = arith.constant 0 : index
    %c0_1 = arith.constant 0 : index
    %0 = vector.load %arg1[%c0, %c0_0, %c0_1] : memref<1x480x128xbf16, #tpu.memory_space<vmem>>, vector<1x480x128xbf16>
    %1 = vector.shape_cast %0 : vector<1x480x128xbf16> to vector<480x128xbf16>
    %c0_2 = arith.constant 0 : index
    %c0_3 = arith.constant 0 : index
    %2 = vector.load %arg2[%c0_2, %c0_3] : memref<128x48xbf16, #tpu.memory_space<vmem>>, vector<128x48xbf16>
    %cst = arith.constant dense<0.000000e+00> : vector<480x48xf32>
    %3 = tpu.matmul %1, %2, %cst {dimension_numbers = #tpu.dot_dimension_numbers<[1], [0], [0], [1], [0, 0, 1, 1], [], []>} : vector<480x128xbf16>, vector<128x48xbf16>, vector<480x48xf32> -> vector<480x48xf32>
    %c0_4 = arith.constant 0 : index
    %c0_5 = arith.constant 0 : index
    %4 = vector.load %arg3[%c0_4, %c0_5] : memref<1x48xf32, #tpu.memory_space<vmem>>, vector<1x48xf32>
    %5 = vector.broadcast %4 : vector<1x48xf32> to vector<480x48xf32>
    %6 = arith.addf %3, %5 : vector<480x48xf32>
    %cst_6 = arith.constant 0.000000e+00 : f32
    %7 = vector.broadcast %cst_6 : f32 to vector<480x48xf32>
    %8 = arith.maximumf %6, %7 : vector<480x48xf32>
    %9 = vector.extract_strided_slice %8 {offsets = [0, 0], sizes = [120, 48], strides = [1, 1]} : vector<480x48xf32> to vector<120x48xf32>
    %10 = vector.extract_strided_slice %8 {offsets = [120, 0], sizes = [120, 48], strides = [1, 1]} : vector<480x48xf32> to vector<120x48xf32>
    %11 = arith.maximumf %9, %10 : vector<120x48xf32>
    %12 = vector.extract_strided_slice %8 {offsets = [240, 0], sizes = [120, 48], strides = [1, 1]} : vector<480x48xf32> to vector<120x48xf32>
    %13 = vector.extract_strided_slice %8 {offsets = [360, 0], sizes = [120, 48], strides = [1, 1]} : vector<480x48xf32> to vector<120x48xf32>
    %14 = arith.maximumf %12, %13 : vector<120x48xf32>
    %15 = arith.maximumf %11, %14 : vector<120x48xf32>
    %c0_7 = arith.constant 0 : index
    %c0_8 = arith.constant 0 : index
    %16 = vector.load %arg4[%c0_7, %c0_8] : memref<1x48xf32, #tpu.memory_space<vmem>>, vector<1x48xf32>
    %17 = vector.broadcast %16 : vector<1x48xf32> to vector<120x48xf32>
    %18 = arith.mulf %15, %17 : vector<120x48xf32>
    %c0_9 = arith.constant 0 : index
    %c0_10 = arith.constant 0 : index
    %19 = vector.load %arg5[%c0_9, %c0_10] : memref<1x48xf32, #tpu.memory_space<vmem>>, vector<1x48xf32>
    %20 = vector.broadcast %19 : vector<1x48xf32> to vector<120x48xf32>
    %21 = arith.addf %18, %20 : vector<120x48xf32>
    %cst_11 = arith.constant 0.000000e+00 : f32
    %22 = vector.broadcast %cst_11 : f32 to vector<88x48xf32>
    %c0_12 = arith.constant 0 : index
    %c0_13 = arith.constant 0 : index
    %23 = vector.load %arg16[%c0_12, %c0_13] : memref<88x48xf32, #tpu.memory_space<vmem>>, vector<88x48xf32>
    tpu.vector_store %arg16[%c0_12, %c0_13], %22 {strides = array<i32>} : memref<88x48xf32, #tpu.memory_space<vmem>>, vector<88x48xf32>,
    %cst_14 = arith.constant 0.000000e+00 : f32
    %24 = vector.broadcast %cst_14 : f32 to vector<88x48xf32>
    %c0_15 = arith.constant 0 : index
    %c0_16 = arith.constant 0 : index
    %25 = vector.load %arg17[%c0_15, %c0_16] : memref<88x48xf32, #tpu.memory_space<vmem>>, vector<88x48xf32>
    tpu.vector_store %arg17[%c0_15, %c0_16], %24 {strides = array<i32>} : memref<88x48xf32, #tpu.memory_space<vmem>>, vector<88x48xf32>,
    %26 = vector.extract_strided_slice %21 {offsets = [0, 0], sizes = [12, 48], strides = [1, 1]} : vector<120x48xf32> to vector<12x48xf32>
    %c14 = arith.constant 14 : index
    %c0_17 = arith.constant 0 : index
    %27 = vector.load %arg16[%c14, %c0_17] : memref<88x48xf32, #tpu.memory_space<vmem>>, vector<12x48xf32>
    tpu.vector_store %arg16[%c14, %c0_17], %26 {strides = array<i32>} : memref<88x48xf32, #tpu.memory_space<vmem>>, vector<12x48xf32>,
    %28 = vector.extract_strided_slice %21 {offsets = [12, 0], sizes = [12, 48], strides = [1, 1]} : vector<120x48xf32> to vector<12x48xf32>
    %c14_18 = arith.constant 14 : index
    %c0_19 = arith.constant 0 : index
    %29 = vector.load %arg17[%c14_18, %c0_19] : memref<88x48xf32, #tpu.memory_space<vmem>>, vector<12x48xf32>
    tpu.vector_store %arg17[%c14_18, %c0_19], %28 {strides = array<i32>} : memref<88x48xf32, #tpu.memory_space<vmem>>, vector<12x48xf32>,
    %30 = vector.extract_strided_slice %21 {offsets = [24, 0], sizes = [12, 48], strides = [1, 1]} : vector<120x48xf32> to vector<12x48xf32>
    %c26 = arith.constant 26 : index
    %c0_20 = arith.constant 0 : index
    %31 = vector.load %arg16[%c26, %c0_20] : memref<88x48xf32, #tpu.memory_space<vmem>>, vector<12x48xf32>
    tpu.vector_store %arg16[%c26, %c0_20], %30 {strides = array<i32>} : memref<88x48xf32, #tpu.memory_space<vmem>>, vector<12x48xf32>,
    %32 = vector.extract_strided_slice %21 {offsets = [36, 0], sizes = [12, 48], strides = [1, 1]} : vector<120x48xf32> to vector<12x48xf32>
    %c26_21 = arith.constant 26 : index
    %c0_22 = arith.constant 0 : index
    %33 = vector.load %arg17[%c26_21, %c0_22] : memref<88x48xf32, #tpu.memory_space<vmem>>, vector<12x48xf32>
    tpu.vector_store %arg17[%c26_21, %c0_22], %32 {strides = array<i32>} : memref<88x48xf32, #tpu.memory_space<vmem>>, vector<12x48xf32>,
    %34 = vector.extract_strided_slice %21 {offsets = [48, 0], sizes = [12, 48], strides = [1, 1]} : vector<120x48xf32> to vector<12x48xf32>
    %c38 = arith.constant 38 : index
    %c0_23 = arith.constant 0 : index
    %35 = vector.load %arg16[%c38, %c0_23] : memref<88x48xf32, #tpu.memory_space<vmem>>, vector<12x48xf32>
    tpu.vector_store %arg16[%c38, %c0_23], %34 {strides = array<i32>} : memref<88x48xf32, #tpu.memory_space<vmem>>, vector<12x48xf32>,
    %36 = vector.extract_strided_slice %21 {offsets = [60, 0], sizes = [12, 48], strides = [1, 1]} : vector<120x48xf32> to vector<12x48xf32>
    %c38_24 = arith.constant 38 : index
    %c0_25 = arith.constant 0 : index
    %37 = vector.load %arg17[%c38_24, %c0_25] : memref<88x48xf32, #tpu.memory_space<vmem>>, vector<12x48xf32>
    tpu.vector_store %arg17[%c38_24, %c0_25], %36 {strides = array<i32>} : memref<88x48xf32, #tpu.memory_space<vmem>>, vector<12x48xf32>,
    %38 = vector.extract_strided_slice %21 {offsets = [72, 0], sizes = [12, 48], strides = [1, 1]} : vector<120x48xf32> to vector<12x48xf32>
    %c50 = arith.constant 50 : index
    %c0_26 = arith.constant 0 : index
    %39 = vector.load %arg16[%c50, %c0_26] : memref<88x48xf32, #tpu.memory_space<vmem>>, vector<12x48xf32>
    tpu.vector_store %arg16[%c50, %c0_26], %38 {strides = array<i32>} : memref<88x48xf32, #tpu.memory_space<vmem>>, vector<12x48xf32>,
    %40 = vector.extract_strided_slice %21 {offsets = [84, 0], sizes = [12, 48], strides = [1, 1]} : vector<120x48xf32> to vector<12x48xf32>
    %c50_27 = arith.constant 50 : index
    %c0_28 = arith.constant 0 : index
    %41 = vector.load %arg17[%c50_27, %c0_28] : memref<88x48xf32, #tpu.memory_space<vmem>>, vector<12x48xf32>
    tpu.vector_store %arg17[%c50_27, %c0_28], %40 {strides = array<i32>} : memref<88x48xf32, #tpu.memory_space<vmem>>, vector<12x48xf32>,
    %42 = vector.extract_strided_slice %21 {offsets = [96, 0], sizes = [12, 48], strides = [1, 1]} : vector<120x48xf32> to vector<12x48xf32>
    %c62 = arith.constant 62 : index
    %c0_29 = arith.constant 0 : index
    %43 = vector.load %arg16[%c62, %c0_29] : memref<88x48xf32, #tpu.memory_space<vmem>>, vector<12x48xf32>
    tpu.vector_store %arg16[%c62, %c0_29], %42 {strides = array<i32>} : memref<88x48xf32, #tpu.memory_space<vmem>>, vector<12x48xf32>,
    %44 = vector.extract_strided_slice %21 {offsets = [108, 0], sizes = [12, 48], strides = [1, 1]} : vector<120x48xf32> to vector<12x48xf32>
    %c62_30 = arith.constant 62 : index
    %c0_31 = arith.constant 0 : index
    %45 = vector.load %arg17[%c62_30, %c0_31] : memref<88x48xf32, #tpu.memory_space<vmem>>, vector<12x48xf32>
    tpu.vector_store %arg17[%c62_30, %c0_31], %44 {strides = array<i32>} : memref<88x48xf32, #tpu.memory_space<vmem>>, vector<12x48xf32>,
    %cst_32 = arith.constant 0.000000e+00 : f32
    %46 = vector.broadcast %cst_32 : f32 to vector<48x64xf32>
    %c0_33 = arith.constant 0 : index
    %c0_34 = arith.constant 0 : index
    %47 = vector.load %arg16[%c0_33, %c0_34] : memref<88x48xf32, #tpu.memory_space<vmem>>, vector<48x48xf32>
    %c0_35 = arith.constant 0 : index
    %c0_36 = arith.constant 0 : index
    %c0_37 = arith.constant 0 : index
    %48 = vector.load %arg10[%c0_35, %c0_36, %c0_37] : memref<5x48x1xf32, #tpu.memory_space<vmem>>, vector<1x48x1xf32>
    %49 = vector.shape_cast %48 : vector<1x48x1xf32> to vector<48x1xf32>
    %50 = vector.broadcast %49 : vector<48x1xf32> to vector<48x48xf32>
    %51 = arith.mulf %47, %50 : vector<48x48xf32>
    %52 = arith.truncf %51 : vector<48x48xf32> to vector<48x48xbf16>
    %c0_38 = arith.constant 0 : index
    %c0_39 = arith.constant 0 : index
    %c0_40 = arith.constant 0 : index
    %c0_41 = arith.constant 0 : index
    %53 = vector.load %arg6[%c0_38, %c0_39, %c0_40, %c0_41] : memref<5x5x48x64xbf16, #tpu.memory_space<vmem>>, vector<1x1x48x64xbf16>
    %54 = vector.shape_cast %53 : vector<1x1x48x64xbf16> to vector<48x64xbf16>
    %cst_42 = arith.constant dense<0.000000e+00> : vector<48x64xf32>
    %55 = tpu.matmul %52, %54, %cst_42 {dimension_numbers = #tpu.dot_dimension_numbers<[1], [0], [0], [1], [0, 0, 1, 1], [], []>} : vector<48x48xbf16>, vector<48x64xbf16>, vector<48x64xf32> -> vector<48x64xf32>
    %56 = arith.addf %46, %55 : vector<48x64xf32>
    %c1 = arith.constant 1 : index
    %c0_43 = arith.constant 0 : index
    %57 = vector.load %arg16[%c1, %c0_43] : memref<88x48xf32, #tpu.memory_space<vmem>>, vector<48x48xf32>
    %c1_44 = arith.constant 1 : index
    %c0_45 = arith.constant 0 : index
    %c0_46 = arith.constant 0 : index
    %58 = vector.load %arg10[%c1_44, %c0_45, %c0_46] : memref<5x48x1xf32, #tpu.memory_space<vmem>>, vector<1x48x1xf32>
    %59 = vector.shape_cast %58 : vector<1x48x1xf32> to vector<48x1xf32>
    %60 = vector.broadcast %59 : vector<48x1xf32> to vector<48x48xf32>
    %61 = arith.mulf %57, %60 : vector<48x48xf32>
    %62 = arith.truncf %61 : vector<48x48xf32> to vector<48x48xbf16>
    %c0_47 = arith.constant 0 : index
    %c1_48 = arith.constant 1 : index
    %c0_49 = arith.constant 0 : index
    %c0_50 = arith.constant 0 : index
    %63 = vector.load %arg6[%c0_47, %c1_48, %c0_49, %c0_50] : memref<5x5x48x64xbf16, #tpu.memory_space<vmem>>, vector<1x1x48x64xbf16>
    %64 = vector.shape_cast %63 : vector<1x1x48x64xbf16> to vector<48x64xbf16>
    %cst_51 = arith.constant dense<0.000000e+00> : vector<48x64xf32>
    %65 = tpu.matmul %62, %64, %cst_51 {dimension_numbers = #tpu.dot_dimension_numbers<[1], [0], [0], [1], [0, 0, 1, 1], [], []>} : vector<48x48xbf16>, vector<48x64xbf16>, vector<48x64xf32> -> vector<48x64xf32>
    %66 = arith.addf %56, %65 : vector<48x64xf32>
    %c2 = arith.constant 2 : index
    %c0_52 = arith.constant 0 : index
    %67 = vector.load %arg16[%c2, %c0_52] : memref<88x48xf32, #tpu.memory_space<vmem>>, vector<48x48xf32>
    %c2_53 = arith.constant 2 : index
    %c0_54 = arith.constant 0 : index
    %c0_55 = arith.constant 0 : index
    %68 = vector.load %arg10[%c2_53, %c0_54, %c0_55] : memref<5x48x1xf32, #tpu.memory_space<vmem>>, vector<1x48x1xf32>
    %69 = vector.shape_cast %68 : vector<1x48x1xf32> to vector<48x1xf32>
    %70 = vector.broadcast %69 : vector<48x1xf32> to vector<48x48xf32>
    %71 = arith.mulf %67, %70 : vector<48x48xf32>
    %72 = arith.truncf %71 : vector<48x48xf32> to vector<48x48xbf16>
    %c0_56 = arith.constant 0 : index
    %c2_57 = arith.constant 2 : index
    %c0_58 = arith.constant 0 : index
    %c0_59 = arith.constant 0 : index
    %73 = vector.load %arg6[%c0_56, %c2_57, %c0_58, %c0_59] : memref<5x5x48x64xbf16, #tpu.memory_space<vmem>>, vector<1x1x48x64xbf16>
    %74 = vector.shape_cast %73 : vector<1x1x48x64xbf16> to vector<48x64xbf16>
    %cst_60 = arith.constant dense<0.000000e+00> : vector<48x64xf32>
    %75 = tpu.matmul %72, %74, %cst_60 {dimension_numbers = #tpu.dot_dimension_numbers<[1], [0], [0], [1], [0, 0, 1, 1], [], []>} : vector<48x48xbf16>, vector<48x64xbf16>, vector<48x64xf32> -> vector<48x64xf32>
    %76 = arith.addf %66, %75 : vector<48x64xf32>
    %c3 = arith.constant 3 : index
    %c0_61 = arith.constant 0 : index
    %77 = vector.load %arg16[%c3, %c0_61] : memref<88x48xf32, #tpu.memory_space<vmem>>, vector<48x48xf32>
    %c3_62 = arith.constant 3 : index
    %c0_63 = arith.constant 0 : index
    %c0_64 = arith.constant 0 : index
    %78 = vector.load %arg10[%c3_62, %c0_63, %c0_64] : memref<5x48x1xf32, #tpu.memory_space<vmem>>, vector<1x48x1xf32>
    %79 = vector.shape_cast %78 : vector<1x48x1xf32> to vector<48x1xf32>
    %80 = vector.broadcast %79 : vector<48x1xf32> to vector<48x48xf32>
    %81 = arith.mulf %77, %80 : vector<48x48xf32>
    %82 = arith.truncf %81 : vector<48x48xf32> to vector<48x48xbf16>
    %c0_65 = arith.constant 0 : index
    %c3_66 = arith.constant 3 : index
    %c0_67 = arith.constant 0 : index
    %c0_68 = arith.constant 0 : index
    %83 = vector.load %arg6[%c0_65, %c3_66, %c0_67, %c0_68] : memref<5x5x48x64xbf16, #tpu.memory_space<vmem>>, vector<1x1x48x64xbf16>
    %84 = vector.shape_cast %83 : vector<1x1x48x64xbf16> to vector<48x64xbf16>
    %cst_69 = arith.constant dense<0.000000e+00> : vector<48x64xf32>
    %85 = tpu.matmul %82, %84, %cst_69 {dimension_numbers = #tpu.dot_dimension_numbers<[1], [0], [0], [1], [0, 0, 1, 1], [], []>} : vector<48x48xbf16>, vector<48x64xbf16>, vector<48x64xf32> -> vector<48x64xf32>
    %86 = arith.addf %76, %85 : vector<48x64xf32>
    %c4 = arith.constant 4 : index
    %c0_70 = arith.constant 0 : index
    %87 = vector.load %arg16[%c4, %c0_70] : memref<88x48xf32, #tpu.memory_space<vmem>>, vector<48x48xf32>
    %c4_71 = arith.constant 4 : index
    %c0_72 = arith.constant 0 : index
    %c0_73 = arith.constant 0 : index
    %88 = vector.load %arg10[%c4_71, %c0_72, %c0_73] : memref<5x48x1xf32, #tpu.memory_space<vmem>>, vector<1x48x1xf32>
    %89 = vector.shape_cast %88 : vector<1x48x1xf32> to vector<48x1xf32>
    %90 = vector.broadcast %89 : vector<48x1xf32> to vector<48x48xf32>
    %91 = arith.mulf %87, %90 : vector<48x48xf32>
    %92 = arith.truncf %91 : vector<48x48xf32> to vector<48x48xbf16>
    %c0_74 = arith.constant 0 : index
    %c4_75 = arith.constant 4 : index
    %c0_76 = arith.constant 0 : index
    %c0_77 = arith.constant 0 : index
    %93 = vector.load %arg6[%c0_74, %c4_75, %c0_76, %c0_77] : memref<5x5x48x64xbf16, #tpu.memory_space<vmem>>, vector<1x1x48x64xbf16>
    %94 = vector.shape_cast %93 : vector<1x1x48x64xbf16> to vector<48x64xbf16>
    %cst_78 = arith.constant dense<0.000000e+00> : vector<48x64xf32>
    %95 = tpu.matmul %92, %94, %cst_78 {dimension_numbers = #tpu.dot_dimension_numbers<[1], [0], [0], [1], [0, 0, 1, 1], [], []>} : vector<48x48xbf16>, vector<48x64xbf16>, vector<48x64xf32> -> vector<48x64xf32>
    %96 = arith.addf %86, %95 : vector<48x64xf32>
    %c0_79 = arith.constant 0 : index
    %c0_80 = arith.constant 0 : index
    %97 = vector.load %arg17[%c0_79, %c0_80] : memref<88x48xf32, #tpu.memory_space<vmem>>, vector<48x48xf32>
    %c0_81 = arith.constant 0 : index
    %c0_82 = arith.constant 0 : index
    %c0_83 = arith.constant 0 : index
    %98 = vector.load %arg10[%c0_81, %c0_82, %c0_83] : memref<5x48x1xf32, #tpu.memory_space<vmem>>, vector<1x48x1xf32>
    %99 = vector.shape_cast %98 : vector<1x48x1xf32> to vector<48x1xf32>
    %100 = vector.broadcast %99 : vector<48x1xf32> to vector<48x48xf32>
    %101 = arith.mulf %97, %100 : vector<48x48xf32>
    %102 = arith.truncf %101 : vector<48x48xf32> to vector<48x48xbf16>
    %c1_84 = arith.constant 1 : index
    %c0_85 = arith.constant 0 : index
    %c0_86 = arith.constant 0 : index
    %c0_87 = arith.constant 0 : index
    %103 = vector.load %arg6[%c1_84, %c0_85, %c0_86, %c0_87] : memref<5x5x48x64xbf16, #tpu.memory_space<vmem>>, vector<1x1x48x64xbf16>
    %104 = vector.shape_cast %103 : vector<1x1x48x64xbf16> to vector<48x64xbf16>
    %cst_88 = arith.constant dense<0.000000e+00> : vector<48x64xf32>
    %105 = tpu.matmul %102, %104, %cst_88 {dimension_numbers = #tpu.dot_dimension_numbers<[1], [0], [0], [1], [0, 0, 1, 1], [], []>} : vector<48x48xbf16>, vector<48x64xbf16>, vector<48x64xf32> -> vector<48x64xf32>
    %106 = arith.addf %96, %105 : vector<48x64xf32>
    %c1_89 = arith.constant 1 : index
    %c0_90 = arith.constant 0 : index
    %107 = vector.load %arg17[%c1_89, %c0_90] : memref<88x48xf32, #tpu.memory_space<vmem>>, vector<48x48xf32>
    %c1_91 = arith.constant 1 : index
    %c0_92 = arith.constant 0 : index
    %c0_93 = arith.constant 0 : index
    %108 = vector.load %arg10[%c1_91, %c0_92, %c0_93] : memref<5x48x1xf32, #tpu.memory_space<vmem>>, vector<1x48x1xf32>
    %109 = vector.shape_cast %108 : vector<1x48x1xf32> to vector<48x1xf32>
    %110 = vector.broadcast %109 : vector<48x1xf32> to vector<48x48xf32>
    %111 = arith.mulf %107, %110 : vector<48x48xf32>
    %112 = arith.truncf %111 : vector<48x48xf32> to vector<48x48xbf16>
    %c1_94 = arith.constant 1 : index
    %c1_95 = arith.constant 1 : index
    %c0_96 = arith.constant 0 : index
    %c0_97 = arith.constant 0 : index
    %113 = vector.load %arg6[%c1_94, %c1_95, %c0_96, %c0_97] : memref<5x5x48x64xbf16, #tpu.memory_space<vmem>>, vector<1x1x48x64xbf16>
    %114 = vector.shape_cast %113 : vector<1x1x48x64xbf16> to vector<48x64xbf16>
    %cst_98 = arith.constant dense<0.000000e+00> : vector<48x64xf32>
    %115 = tpu.matmul %112, %114, %cst_98 {dimension_numbers = #tpu.dot_dimension_numbers<[1], [0], [0], [1], [0, 0, 1, 1], [], []>} : vector<48x48xbf16>, vector<48x64xbf16>, vector<48x64xf32> -> vector<48x64xf32>
    %116 = arith.addf %106, %115 : vector<48x64xf32>
    %c2_99 = arith.constant 2 : index
    %c0_100 = arith.constant 0 : index
    %117 = vector.load %arg17[%c2_99, %c0_100] : memref<88x48xf32, #tpu.memory_space<vmem>>, vector<48x48xf32>
    %c2_101 = arith.constant 2 : index
    %c0_102 = arith.constant 0 : index
    %c0_103 = arith.constant 0 : index
    %118 = vector.load %arg10[%c2_101, %c0_102, %c0_103] : memref<5x48x1xf32, #tpu.memory_space<vmem>>, vector<1x48x1xf32>
    %119 = vector.shape_cast %118 : vector<1x48x1xf32> to vector<48x1xf32>
    %120 = vector.broadcast %119 : vector<48x1xf32> to vector<48x48xf32>
    %121 = arith.mulf %117, %120 : vector<48x48xf32>
    %122 = arith.truncf %121 : vector<48x48xf32> to vector<48x48xbf16>
    %c1_104 = arith.constant 1 : index
    %c2_105 = arith.constant 2 : index
    %c0_106 = arith.constant 0 : index
    %c0_107 = arith.constant 0 : index
    %123 = vector.load %arg6[%c1_104, %c2_105, %c0_106, %c0_107] : memref<5x5x48x64xbf16, #tpu.memory_space<vmem>>, vector<1x1x48x64xbf16>
    %124 = vector.shape_cast %123 : vector<1x1x48x64xbf16> to vector<48x64xbf16>
    %cst_108 = arith.constant dense<0.000000e+00> : vector<48x64xf32>
    %125 = tpu.matmul %122, %124, %cst_108 {dimension_numbers = #tpu.dot_dimension_numbers<[1], [0], [0], [1], [0, 0, 1, 1], [], []>} : vector<48x48xbf16>, vector<48x64xbf16>, vector<48x64xf32> -> vector<48x64xf32>
    %126 = arith.addf %116, %125 : vector<48x64xf32>
    %c3_109 = arith.constant 3 : index
    %c0_110 = arith.constant 0 : index
    %127 = vector.load %arg17[%c3_109, %c0_110] : memref<88x48xf32, #tpu.memory_space<vmem>>, vector<48x48xf32>
    %c3_111 = arith.constant 3 : index
    %c0_112 = arith.constant 0 : index
    %c0_113 = arith.constant 0 : index
    %128 = vector.load %arg10[%c3_111, %c0_112, %c0_113] : memref<5x48x1xf32, #tpu.memory_space<vmem>>, vector<1x48x1xf32>
    %129 = vector.shape_cast %128 : vector<1x48x1xf32> to vector<48x1xf32>
    %130 = vector.broadcast %129 : vector<48x1xf32> to vector<48x48xf32>
    %131 = arith.mulf %127, %130 : vector<48x48xf32>
    %132 = arith.truncf %131 : vector<48x48xf32> to vector<48x48xbf16>
    %c1_114 = arith.constant 1 : index
    %c3_115 = arith.constant 3 : index
    %c0_116 = arith.constant 0 : index
    %c0_117 = arith.constant 0 : index
    %133 = vector.load %arg6[%c1_114, %c3_115, %c0_116, %c0_117] : memref<5x5x48x64xbf16, #tpu.memory_space<vmem>>, vector<1x1x48x64xbf16>
    %134 = vector.shape_cast %133 : vector<1x1x48x64xbf16> to vector<48x64xbf16>
    %cst_118 = arith.constant dense<0.000000e+00> : vector<48x64xf32>
    %135 = tpu.matmul %132, %134, %cst_118 {dimension_numbers = #tpu.dot_dimension_numbers<[1], [0], [0], [1], [0, 0, 1, 1], [], []>} : vector<48x48xbf16>, vector<48x64xbf16>, vector<48x64xf32> -> vector<48x64xf32>
    %136 = arith.addf %126, %135 : vector<48x64xf32>
    %c4_119 = arith.constant 4 : index
    %c0_120 = arith.constant 0 : index
    %137 = vector.load %arg17[%c4_119, %c0_120] : memref<88x48xf32, #tpu.memory_space<vmem>>, vector<48x48xf32>
    %c4_121 = arith.constant 4 : index
    %c0_122 = arith.constant 0 : index
    %c0_123 = arith.constant 0 : index
    %138 = vector.load %arg10[%c4_121, %c0_122, %c0_123] : memref<5x48x1xf32, #tpu.memory_space<vmem>>, vector<1x48x1xf32>
    %139 = vector.shape_cast %138 : vector<1x48x1xf32> to vector<48x1xf32>
    %140 = vector.broadcast %139 : vector<48x1xf32> to vector<48x48xf32>
    %141 = arith.mulf %137, %140 : vector<48x48xf32>
    %142 = arith.truncf %141 : vector<48x48xf32> to vector<48x48xbf16>
    %c1_124 = arith.constant 1 : index
    %c4_125 = arith.constant 4 : index
    %c0_126 = arith.constant 0 : index
    %c0_127 = arith.constant 0 : index
    %143 = vector.load %arg6[%c1_124, %c4_125, %c0_126, %c0_127] : memref<5x5x48x64xbf16, #tpu.memory_space<vmem>>, vector<1x1x48x64xbf16>
    %144 = vector.shape_cast %143 : vector<1x1x48x64xbf16> to vector<48x64xbf16>
    %cst_128 = arith.constant dense<0.000000e+00> : vector<48x64xf32>
    %145 = tpu.matmul %142, %144, %cst_128 {dimension_numbers = #tpu.dot_dimension_numbers<[1], [0], [0], [1], [0, 0, 1, 1], [], []>} : vector<48x48xbf16>, vector<48x64xbf16>, vector<48x64xf32> -> vector<48x64xf32>
    %146 = arith.addf %136, %145 : vector<48x64xf32>
    %c12 = arith.constant 12 : index
    %c0_129 = arith.constant 0 : index
    %147 = vector.load %arg16[%c12, %c0_129] : memref<88x48xf32, #tpu.memory_space<vmem>>, vector<48x48xf32>
    %c0_130 = arith.constant 0 : index
    %c0_131 = arith.constant 0 : index
    %c0_132 = arith.constant 0 : index
    %148 = vector.load %arg10[%c0_130, %c0_131, %c0_132] : memref<5x48x1xf32, #tpu.memory_space<vmem>>, vector<1x48x1xf32>
    %149 = vector.shape_cast %148 : vector<1x48x1xf32> to vector<48x1xf32>
    %150 = vector.broadcast %149 : vector<48x1xf32> to vector<48x48xf32>
    %151 = arith.mulf %147, %150 : vector<48x48xf32>
    %152 = arith.truncf %151 : vector<48x48xf32> to vector<48x48xbf16>
    %c2_133 = arith.constant 2 : index
    %c0_134 = arith.constant 0 : index
    %c0_135 = arith.constant 0 : index
    %c0_136 = arith.constant 0 : index
    %153 = vector.load %arg6[%c2_133, %c0_134, %c0_135, %c0_136] : memref<5x5x48x64xbf16, #tpu.memory_space<vmem>>, vector<1x1x48x64xbf16>
    %154 = vector.shape_cast %153 : vector<1x1x48x64xbf16> to vector<48x64xbf16>
    %cst_137 = arith.constant dense<0.000000e+00> : vector<48x64xf32>
    %155 = tpu.matmul %152, %154, %cst_137 {dimension_numbers = #tpu.dot_dimension_numbers<[1], [0], [0], [1], [0, 0, 1, 1], [], []>} : vector<48x48xbf16>, vector<48x64xbf16>, vector<48x64xf32> -> vector<48x64xf32>
    %156 = arith.addf %146, %155 : vector<48x64xf32>
    %c13 = arith.constant 13 : index
    %c0_138 = arith.constant 0 : index
    %157 = vector.load %arg16[%c13, %c0_138] : memref<88x48xf32, #tpu.memory_space<vmem>>, vector<48x48xf32>
    %c1_139 = arith.constant 1 : index
    %c0_140 = arith.constant 0 : index
    %c0_141 = arith.constant 0 : index
    %158 = vector.load %arg10[%c1_139, %c0_140, %c0_141] : memref<5x48x1xf32, #tpu.memory_space<vmem>>, vector<1x48x1xf32>
    %159 = vector.shape_cast %158 : vector<1x48x1xf32> to vector<48x1xf32>
    %160 = vector.broadcast %159 : vector<48x1xf32> to vector<48x48xf32>
    %161 = arith.mulf %157, %160 : vector<48x48xf32>
    %162 = arith.truncf %161 : vector<48x48xf32> to vector<48x48xbf16>
    %c2_142 = arith.constant 2 : index
    %c1_143 = arith.constant 1 : index
    %c0_144 = arith.constant 0 : index
    %c0_145 = arith.constant 0 : index
    %163 = vector.load %arg6[%c2_142, %c1_143, %c0_144, %c0_145] : memref<5x5x48x64xbf16, #tpu.memory_space<vmem>>, vector<1x1x48x64xbf16>
    %164 = vector.shape_cast %163 : vector<1x1x48x64xbf16> to vector<48x64xbf16>
    %cst_146 = arith.constant dense<0.000000e+00> : vector<48x64xf32>
    %165 = tpu.matmul %162, %164, %cst_146 {dimension_numbers = #tpu.dot_dimension_numbers<[1], [0], [0], [1], [0, 0, 1, 1], [], []>} : vector<48x48xbf16>, vector<48x64xbf16>, vector<48x64xf32> -> vector<48x64xf32>
    %166 = arith.addf %156, %165 : vector<48x64xf32>
    %c14_147 = arith.constant 14 : index
    %c0_148 = arith.constant 0 : index
    %167 = vector.load %arg16[%c14_147, %c0_148] : memref<88x48xf32, #tpu.memory_space<vmem>>, vector<48x48xf32>
    %c2_149 = arith.constant 2 : index
    %c0_150 = arith.constant 0 : index
    %c0_151 = arith.constant 0 : index
    %168 = vector.load %arg10[%c2_149, %c0_150, %c0_151] : memref<5x48x1xf32, #tpu.memory_space<vmem>>, vector<1x48x1xf32>
    %169 = vector.shape_cast %168 : vector<1x48x1xf32> to vector<48x1xf32>
    %170 = vector.broadcast %169 : vector<48x1xf32> to vector<48x48xf32>
    %171 = arith.mulf %167, %170 : vector<48x48xf32>
    %172 = arith.truncf %171 : vector<48x48xf32> to vector<48x48xbf16>
    %c2_152 = arith.constant 2 : index
    %c2_153 = arith.constant 2 : index
    %c0_154 = arith.constant 0 : index
    %c0_155 = arith.constant 0 : index
    %173 = vector.load %arg6[%c2_152, %c2_153, %c0_154, %c0_155] : memref<5x5x48x64xbf16, #tpu.memory_space<vmem>>, vector<1x1x48x64xbf16>
    %174 = vector.shape_cast %173 : vector<1x1x48x64xbf16> to vector<48x64xbf16>
    %cst_156 = arith.constant dense<0.000000e+00> : vector<48x64xf32>
    %175 = tpu.matmul %172, %174, %cst_156 {dimension_numbers = #tpu.dot_dimension_numbers<[1], [0], [0], [1], [0, 0, 1, 1], [], []>} : vector<48x48xbf16>, vector<48x64xbf16>, vector<48x64xf32> -> vector<48x64xf32>
    %176 = arith.addf %166, %175 : vector<48x64xf32>
    %c15 = arith.constant 15 : index
    %c0_157 = arith.constant 0 : index
    %177 = vector.load %arg16[%c15, %c0_157] : memref<88x48xf32, #tpu.memory_space<vmem>>, vector<48x48xf32>
    %c3_158 = arith.constant 3 : index
    %c0_159 = arith.constant 0 : index
    %c0_160 = arith.constant 0 : index
    %178 = vector.load %arg10[%c3_158, %c0_159, %c0_160] : memref<5x48x1xf32, #tpu.memory_space<vmem>>, vector<1x48x1xf32>
    %179 = vector.shape_cast %178 : vector<1x48x1xf32> to vector<48x1xf32>
    %180 = vector.broadcast %179 : vector<48x1xf32> to vector<48x48xf32>
    %181 = arith.mulf %177, %180 : vector<48x48xf32>
    %182 = arith.truncf %181 : vector<48x48xf32> to vector<48x48xbf16>
    %c2_161 = arith.constant 2 : index
    %c3_162 = arith.constant 3 : index
    %c0_163 = arith.constant 0 : index
    %c0_164 = arith.constant 0 : index
    %183 = vector.load %arg6[%c2_161, %c3_162, %c0_163, %c0_164] : memref<5x5x48x64xbf16, #tpu.memory_space<vmem>>, vector<1x1x48x64xbf16>
    %184 = vector.shape_cast %183 : vector<1x1x48x64xbf16> to vector<48x64xbf16>
    %cst_165 = arith.constant dense<0.000000e+00> : vector<48x64xf32>
    %185 = tpu.matmul %182, %184, %cst_165 {dimension_numbers = #tpu.dot_dimension_numbers<[1], [0], [0], [1], [0, 0, 1, 1], [], []>} : vector<48x48xbf16>, vector<48x64xbf16>, vector<48x64xf32> -> vector<48x64xf32>
    %186 = arith.addf %176, %185 : vector<48x64xf32>
    %c16 = arith.constant 16 : index
    %c0_166 = arith.constant 0 : index
    %187 = vector.load %arg16[%c16, %c0_166] : memref<88x48xf32, #tpu.memory_space<vmem>>, vector<48x48xf32>
    %c4_167 = arith.constant 4 : index
    %c0_168 = arith.constant 0 : index
    %c0_169 = arith.constant 0 : index
    %188 = vector.load %arg10[%c4_167, %c0_168, %c0_169] : memref<5x48x1xf32, #tpu.memory_space<vmem>>, vector<1x48x1xf32>
    %189 = vector.shape_cast %188 : vector<1x48x1xf32> to vector<48x1xf32>
    %190 = vector.broadcast %189 : vector<48x1xf32> to vector<48x48xf32>
    %191 = arith.mulf %187, %190 : vector<48x48xf32>
    %192 = arith.truncf %191 : vector<48x48xf32> to vector<48x48xbf16>
    %c2_170 = arith.constant 2 : index
    %c4_171 = arith.constant 4 : index
    %c0_172 = arith.constant 0 : index
    %c0_173 = arith.constant 0 : index
    %193 = vector.load %arg6[%c2_170, %c4_171, %c0_172, %c0_173] : memref<5x5x48x64xbf16, #tpu.memory_space<vmem>>, vector<1x1x48x64xbf16>
    %194 = vector.shape_cast %193 : vector<1x1x48x64xbf16> to vector<48x64xbf16>
    %cst_174 = arith.constant dense<0.000000e+00> : vector<48x64xf32>
    %195 = tpu.matmul %192, %194, %cst_174 {dimension_numbers = #tpu.dot_dimension_numbers<[1], [0], [0], [1], [0, 0, 1, 1], [], []>} : vector<48x48xbf16>, vector<48x64xbf16>, vector<48x64xf32> -> vector<48x64xf32>
    %196 = arith.addf %186, %195 : vector<48x64xf32>
    %c12_175 = arith.constant 12 : index
    %c0_176 = arith.constant 0 : index
    %197 = vector.load %arg17[%c12_175, %c0_176] : memref<88x48xf32, #tpu.memory_space<vmem>>, vector<48x48xf32>
    %c0_177 = arith.constant 0 : index
    %c0_178 = arith.constant 0 : index
    %c0_179 = arith.constant 0 : index
    %198 = vector.load %arg10[%c0_177, %c0_178, %c0_179] : memref<5x48x1xf32, #tpu.memory_space<vmem>>, vector<1x48x1xf32>
    %199 = vector.shape_cast %198 : vector<1x48x1xf32> to vector<48x1xf32>
    %200 = vector.broadcast %199 : vector<48x1xf32> to vector<48x48xf32>
    %201 = arith.mulf %197, %200 : vector<48x48xf32>
    %202 = arith.truncf %201 : vector<48x48xf32> to vector<48x48xbf16>
    %c3_180 = arith.constant 3 : index
    %c0_181 = arith.constant 0 : index
    %c0_182 = arith.constant 0 : index
    %c0_183 = arith.constant 0 : index
    %203 = vector.load %arg6[%c3_180, %c0_181, %c0_182, %c0_183] : memref<5x5x48x64xbf16, #tpu.memory_space<vmem>>, vector<1x1x48x64xbf16>
    %204 = vector.shape_cast %203 : vector<1x1x48x64xbf16> to vector<48x64xbf16>
    %cst_184 = arith.constant dense<0.000000e+00> : vector<48x64xf32>
    %205 = tpu.matmul %202, %204, %cst_184 {dimension_numbers = #tpu.dot_dimension_numbers<[1], [0], [0], [1], [0, 0, 1, 1], [], []>} : vector<48x48xbf16>, vector<48x64xbf16>, vector<48x64xf32> -> vector<48x64xf32>
    %206 = arith.addf %196, %205 : vector<48x64xf32>
    %c13_185 = arith.constant 13 : index
    %c0_186 = arith.constant 0 : index
    %207 = vector.load %arg17[%c13_185, %c0_186] : memref<88x48xf32, #tpu.memory_space<vmem>>, vector<48x48xf32>
    %c1_187 = arith.constant 1 : index
    %c0_188 = arith.constant 0 : index
    %c0_189 = arith.constant 0 : index
    %208 = vector.load %arg10[%c1_187, %c0_188, %c0_189] : memref<5x48x1xf32, #tpu.memory_space<vmem>>, vector<1x48x1xf32>
    %209 = vector.shape_cast %208 : vector<1x48x1xf32> to vector<48x1xf32>
    %210 = vector.broadcast %209 : vector<48x1xf32> to vector<48x48xf32>
    %211 = arith.mulf %207, %210 : vector<48x48xf32>
    %212 = arith.truncf %211 : vector<48x48xf32> to vector<48x48xbf16>
    %c3_190 = arith.constant 3 : index
    %c1_191 = arith.constant 1 : index
    %c0_192 = arith.constant 0 : index
    %c0_193 = arith.constant 0 : index
    %213 = vector.load %arg6[%c3_190, %c1_191, %c0_192, %c0_193] : memref<5x5x48x64xbf16, #tpu.memory_space<vmem>>, vector<1x1x48x64xbf16>
    %214 = vector.shape_cast %213 : vector<1x1x48x64xbf16> to vector<48x64xbf16>
    %cst_194 = arith.constant dense<0.000000e+00> : vector<48x64xf32>
    %215 = tpu.matmul %212, %214, %cst_194 {dimension_numbers = #tpu.dot_dimension_numbers<[1], [0], [0], [1], [0, 0, 1, 1], [], []>} : vector<48x48xbf16>, vector<48x64xbf16>, vector<48x64xf32> -> vector<48x64xf32>
    %216 = arith.addf %206, %215 : vector<48x64xf32>
    %c14_195 = arith.constant 14 : index
    %c0_196 = arith.constant 0 : index
    %217 = vector.load %arg17[%c14_195, %c0_196] : memref<88x48xf32, #tpu.memory_space<vmem>>, vector<48x48xf32>
    %c2_197 = arith.constant 2 : index
    %c0_198 = arith.constant 0 : index
    %c0_199 = arith.constant 0 : index
    %218 = vector.load %arg10[%c2_197, %c0_198, %c0_199] : memref<5x48x1xf32, #tpu.memory_space<vmem>>, vector<1x48x1xf32>
    %219 = vector.shape_cast %218 : vector<1x48x1xf32> to vector<48x1xf32>
    %220 = vector.broadcast %219 : vector<48x1xf32> to vector<48x48xf32>
    %221 = arith.mulf %217, %220 : vector<48x48xf32>
    %222 = arith.truncf %221 : vector<48x48xf32> to vector<48x48xbf16>
    %c3_200 = arith.constant 3 : index
    %c2_201 = arith.constant 2 : index
    %c0_202 = arith.constant 0 : index
    %c0_203 = arith.constant 0 : index
    %223 = vector.load %arg6[%c3_200, %c2_201, %c0_202, %c0_203] : memref<5x5x48x64xbf16, #tpu.memory_space<vmem>>, vector<1x1x48x64xbf16>
    %224 = vector.shape_cast %223 : vector<1x1x48x64xbf16> to vector<48x64xbf16>
    %cst_204 = arith.constant dense<0.000000e+00> : vector<48x64xf32>
    %225 = tpu.matmul %222, %224, %cst_204 {dimension_numbers = #tpu.dot_dimension_numbers<[1], [0], [0], [1], [0, 0, 1, 1], [], []>} : vector<48x48xbf16>, vector<48x64xbf16>, vector<48x64xf32> -> vector<48x64xf32>
    %226 = arith.addf %216, %225 : vector<48x64xf32>
    %c15_205 = arith.constant 15 : index
    %c0_206 = arith.constant 0 : index
    %227 = vector.load %arg17[%c15_205, %c0_206] : memref<88x48xf32, #tpu.memory_space<vmem>>, vector<48x48xf32>
    %c3_207 = arith.constant 3 : index
    %c0_208 = arith.constant 0 : index
    %c0_209 = arith.constant 0 : index
    %228 = vector.load %arg10[%c3_207, %c0_208, %c0_209] : memref<5x48x1xf32, #tpu.memory_space<vmem>>, vector<1x48x1xf32>
    %229 = vector.shape_cast %228 : vector<1x48x1xf32> to vector<48x1xf32>
    %230 = vector.broadcast %229 : vector<48x1xf32> to vector<48x48xf32>
    %231 = arith.mulf %227, %230 : vector<48x48xf32>
    %232 = arith.truncf %231 : vector<48x48xf32> to vector<48x48xbf16>
    %c3_210 = arith.constant 3 : index
    %c3_211 = arith.constant 3 : index
    %c0_212 = arith.constant 0 : index
    %c0_213 = arith.constant 0 : index
    %233 = vector.load %arg6[%c3_210, %c3_211, %c0_212, %c0_213] : memref<5x5x48x64xbf16, #tpu.memory_space<vmem>>, vector<1x1x48x64xbf16>
    %234 = vector.shape_cast %233 : vector<1x1x48x64xbf16> to vector<48x64xbf16>
    %cst_214 = arith.constant dense<0.000000e+00> : vector<48x64xf32>
    %235 = tpu.matmul %232, %234, %cst_214 {dimension_numbers = #tpu.dot_dimension_numbers<[1], [0], [0], [1], [0, 0, 1, 1], [], []>} : vector<48x48xbf16>, vector<48x64xbf16>, vector<48x64xf32> -> vector<48x64xf32>
    %236 = arith.addf %226, %235 : vector<48x64xf32>
    %c16_215 = arith.constant 16 : index
    %c0_216 = arith.constant 0 : index
    %237 = vector.load %arg17[%c16_215, %c0_216] : memref<88x48xf32, #tpu.memory_space<vmem>>, vector<48x48xf32>
    %c4_217 = arith.constant 4 : index
    %c0_218 = arith.constant 0 : index
    %c0_219 = arith.constant 0 : index
    %238 = vector.load %arg10[%c4_217, %c0_218, %c0_219] : memref<5x48x1xf32, #tpu.memory_space<vmem>>, vector<1x48x1xf32>
    %239 = vector.shape_cast %238 : vector<1x48x1xf32> to vector<48x1xf32>
    %240 = vector.broadcast %239 : vector<48x1xf32> to vector<48x48xf32>
    %241 = arith.mulf %237, %240 : vector<48x48xf32>
    %242 = arith.truncf %241 : vector<48x48xf32> to vector<48x48xbf16>
    %c3_220 = arith.constant 3 : index
    %c4_221 = arith.constant 4 : index
    %c0_222 = arith.constant 0 : index
    %c0_223 = arith.constant 0 : index
    %243 = vector.load %arg6[%c3_220, %c4_221, %c0_222, %c0_223] : memref<5x5x48x64xbf16, #tpu.memory_space<vmem>>, vector<1x1x48x64xbf16>
    %244 = vector.shape_cast %243 : vector<1x1x48x64xbf16> to vector<48x64xbf16>
    %cst_224 = arith.constant dense<0.000000e+00> : vector<48x64xf32>
    %245 = tpu.matmul %242, %244, %cst_224 {dimension_numbers = #tpu.dot_dimension_numbers<[1], [0], [0], [1], [0, 0, 1, 1], [], []>} : vector<48x48xbf16>, vector<48x64xbf16>, vector<48x64xf32> -> vector<48x64xf32>
    %246 = arith.addf %236, %245 : vector<48x64xf32>
    %c24 = arith.constant 24 : index
    %c0_225 = arith.constant 0 : index
    %247 = vector.load %arg16[%c24, %c0_225] : memref<88x48xf32, #tpu.memory_space<vmem>>, vector<48x48xf32>
    %c0_226 = arith.constant 0 : index
    %c0_227 = arith.constant 0 : index
    %c0_228 = arith.constant 0 : index
    %248 = vector.load %arg10[%c0_226, %c0_227, %c0_228] : memref<5x48x1xf32, #tpu.memory_space<vmem>>, vector<1x48x1xf32>
    %249 = vector.shape_cast %248 : vector<1x48x1xf32> to vector<48x1xf32>
    %250 = vector.broadcast %249 : vector<48x1xf32> to vector<48x48xf32>
    %251 = arith.mulf %247, %250 : vector<48x48xf32>
    %252 = arith.truncf %251 : vector<48x48xf32> to vector<48x48xbf16>
    %c4_229 = arith.constant 4 : index
    %c0_230 = arith.constant 0 : index
    %c0_231 = arith.constant 0 : index
    %c0_232 = arith.constant 0 : index
    %253 = vector.load %arg6[%c4_229, %c0_230, %c0_231, %c0_232] : memref<5x5x48x64xbf16, #tpu.memory_space<vmem>>, vector<1x1x48x64xbf16>
    %254 = vector.shape_cast %253 : vector<1x1x48x64xbf16> to vector<48x64xbf16>
    %cst_233 = arith.constant dense<0.000000e+00> : vector<48x64xf32>
    %255 = tpu.matmul %252, %254, %cst_233 {dimension_numbers = #tpu.dot_dimension_numbers<[1], [0], [0], [1], [0, 0, 1, 1], [], []>} : vector<48x48xbf16>, vector<48x64xbf16>, vector<48x64xf32> -> vector<48x64xf32>
    %256 = arith.addf %246, %255 : vector<48x64xf32>
    %c25 = arith.constant 25 : index
    %c0_234 = arith.constant 0 : index
    %257 = vector.load %arg16[%c25, %c0_234] : memref<88x48xf32, #tpu.memory_space<vmem>>, vector<48x48xf32>
    %c1_235 = arith.constant 1 : index
    %c0_236 = arith.constant 0 : index
    %c0_237 = arith.constant 0 : index
    %258 = vector.load %arg10[%c1_235, %c0_236, %c0_237] : memref<5x48x1xf32, #tpu.memory_space<vmem>>, vector<1x48x1xf32>
    %259 = vector.shape_cast %258 : vector<1x48x1xf32> to vector<48x1xf32>
    %260 = vector.broadcast %259 : vector<48x1xf32> to vector<48x48xf32>
    %261 = arith.mulf %257, %260 : vector<48x48xf32>
    %262 = arith.truncf %261 : vector<48x48xf32> to vector<48x48xbf16>
    %c4_238 = arith.constant 4 : index
    %c1_239 = arith.constant 1 : index
    %c0_240 = arith.constant 0 : index
    %c0_241 = arith.constant 0 : index
    %263 = vector.load %arg6[%c4_238, %c1_239, %c0_240, %c0_241] : memref<5x5x48x64xbf16, #tpu.memory_space<vmem>>, vector<1x1x48x64xbf16>
    %264 = vector.shape_cast %263 : vector<1x1x48x64xbf16> to vector<48x64xbf16>
    %cst_242 = arith.constant dense<0.000000e+00> : vector<48x64xf32>
    %265 = tpu.matmul %262, %264, %cst_242 {dimension_numbers = #tpu.dot_dimension_numbers<[1], [0], [0], [1], [0, 0, 1, 1], [], []>} : vector<48x48xbf16>, vector<48x64xbf16>, vector<48x64xf32> -> vector<48x64xf32>
    %266 = arith.addf %256, %265 : vector<48x64xf32>
    %c26_243 = arith.constant 26 : index
    %c0_244 = arith.constant 0 : index
    %267 = vector.load %arg16[%c26_243, %c0_244] : memref<88x48xf32, #tpu.memory_space<vmem>>, vector<48x48xf32>
    %c2_245 = arith.constant 2 : index
    %c0_246 = arith.constant 0 : index
    %c0_247 = arith.constant 0 : index
    %268 = vector.load %arg10[%c2_245, %c0_246, %c0_247] : memref<5x48x1xf32, #tpu.memory_space<vmem>>, vector<1x48x1xf32>
    %269 = vector.shape_cast %268 : vector<1x48x1xf32> to vector<48x1xf32>
    %270 = vector.broadcast %269 : vector<48x1xf32> to vector<48x48xf32>
    %271 = arith.mulf %267, %270 : vector<48x48xf32>
    %272 = arith.truncf %271 : vector<48x48xf32> to vector<48x48xbf16>
    %c4_248 = arith.constant 4 : index
    %c2_249 = arith.constant 2 : index
    %c0_250 = arith.constant 0 : index
    %c0_251 = arith.constant 0 : index
    %273 = vector.load %arg6[%c4_248, %c2_249, %c0_250, %c0_251] : memref<5x5x48x64xbf16, #tpu.memory_space<vmem>>, vector<1x1x48x64xbf16>
    %274 = vector.shape_cast %273 : vector<1x1x48x64xbf16> to vector<48x64xbf16>
    %cst_252 = arith.constant dense<0.000000e+00> : vector<48x64xf32>
    %275 = tpu.matmul %272, %274, %cst_252 {dimension_numbers = #tpu.dot_dimension_numbers<[1], [0], [0], [1], [0, 0, 1, 1], [], []>} : vector<48x48xbf16>, vector<48x64xbf16>, vector<48x64xf32> -> vector<48x64xf32>
    %276 = arith.addf %266, %275 : vector<48x64xf32>
    %c27 = arith.constant 27 : index
    %c0_253 = arith.constant 0 : index
    %277 = vector.load %arg16[%c27, %c0_253] : memref<88x48xf32, #tpu.memory_space<vmem>>, vector<48x48xf32>
    %c3_254 = arith.constant 3 : index
    %c0_255 = arith.constant 0 : index
    %c0_256 = arith.constant 0 : index
    %278 = vector.load %arg10[%c3_254, %c0_255, %c0_256] : memref<5x48x1xf32, #tpu.memory_space<vmem>>, vector<1x48x1xf32>
    %279 = vector.shape_cast %278 : vector<1x48x1xf32> to vector<48x1xf32>
    %280 = vector.broadcast %279 : vector<48x1xf32> to vector<48x48xf32>
    %281 = arith.mulf %277, %280 : vector<48x48xf32>
    %282 = arith.truncf %281 : vector<48x48xf32> to vector<48x48xbf16>
    %c4_257 = arith.constant 4 : index
    %c3_258 = arith.constant 3 : index
    %c0_259 = arith.constant 0 : index
    %c0_260 = arith.constant 0 : index
    %283 = vector.load %arg6[%c4_257, %c3_258, %c0_259, %c0_260] : memref<5x5x48x64xbf16, #tpu.memory_space<vmem>>, vector<1x1x48x64xbf16>
    %284 = vector.shape_cast %283 : vector<1x1x48x64xbf16> to vector<48x64xbf16>
    %cst_261 = arith.constant dense<0.000000e+00> : vector<48x64xf32>
    %285 = tpu.matmul %282, %284, %cst_261 {dimension_numbers = #tpu.dot_dimension_numbers<[1], [0], [0], [1], [0, 0, 1, 1], [], []>} : vector<48x48xbf16>, vector<48x64xbf16>, vector<48x64xf32> -> vector<48x64xf32>
    %286 = arith.addf %276, %285 : vector<48x64xf32>
    %c28 = arith.constant 28 : index
    %c0_262 = arith.constant 0 : index
    %287 = vector.load %arg16[%c28, %c0_262] : memref<88x48xf32, #tpu.memory_space<vmem>>, vector<48x48xf32>
    %c4_263 = arith.constant 4 : index
    %c0_264 = arith.constant 0 : index
    %c0_265 = arith.constant 0 : index
    %288 = vector.load %arg10[%c4_263, %c0_264, %c0_265] : memref<5x48x1xf32, #tpu.memory_space<vmem>>, vector<1x48x1xf32>
    %289 = vector.shape_cast %288 : vector<1x48x1xf32> to vector<48x1xf32>
    %290 = vector.broadcast %289 : vector<48x1xf32> to vector<48x48xf32>
    %291 = arith.mulf %287, %290 : vector<48x48xf32>
    %292 = arith.truncf %291 : vector<48x48xf32> to vector<48x48xbf16>
    %c4_266 = arith.constant 4 : index
    %c4_267 = arith.constant 4 : index
    %c0_268 = arith.constant 0 : index
    %c0_269 = arith.constant 0 : index
    %293 = vector.load %arg6[%c4_266, %c4_267, %c0_268, %c0_269] : memref<5x5x48x64xbf16, #tpu.memory_space<vmem>>, vector<1x1x48x64xbf16>
    %294 = vector.shape_cast %293 : vector<1x1x48x64xbf16> to vector<48x64xbf16>
    %cst_270 = arith.constant dense<0.000000e+00> : vector<48x64xf32>
    %295 = tpu.matmul %292, %294, %cst_270 {dimension_numbers = #tpu.dot_dimension_numbers<[1], [0], [0], [1], [0, 0, 1, 1], [], []>} : vector<48x48xbf16>, vector<48x64xbf16>, vector<48x64xf32> -> vector<48x64xf32>
    %296 = arith.addf %286, %295 : vector<48x64xf32>
    %c0_271 = arith.constant 0 : index
    %c0_272 = arith.constant 0 : index
    %297 = vector.load %arg7[%c0_271, %c0_272] : memref<1x64xf32, #tpu.memory_space<vmem>>, vector<1x64xf32>
    %298 = vector.broadcast %297 : vector<1x64xf32> to vector<48x64xf32>
    %299 = arith.addf %296, %298 : vector<48x64xf32>
    %cst_273 = arith.constant 0.000000e+00 : f32
    %300 = vector.broadcast %cst_273 : f32 to vector<48x64xf32>
    %301 = arith.maximumf %299, %300 : vector<48x64xf32>
    %302 = vector.extract_strided_slice %301 {offsets = [0, 0], sizes = [12, 64], strides = [1, 1]} : vector<48x64xf32> to vector<12x64xf32>
    %303 = vector.extract_strided_slice %301 {offsets = [12, 0], sizes = [12, 64], strides = [1, 1]} : vector<48x64xf32> to vector<12x64xf32>
    %304 = arith.maximumf %302, %303 : vector<12x64xf32>
    %305 = vector.extract_strided_slice %301 {offsets = [24, 0], sizes = [12, 64], strides = [1, 1]} : vector<48x64xf32> to vector<12x64xf32>
    %306 = vector.extract_strided_slice %301 {offsets = [36, 0], sizes = [12, 64], strides = [1, 1]} : vector<48x64xf32> to vector<12x64xf32>
    %307 = arith.maximumf %305, %306 : vector<12x64xf32>
    %cst_274 = arith.constant 0.000000e+00 : f32
    %308 = vector.broadcast %cst_274 : f32 to vector<1x128xf32>
    %309 = vector.extract_strided_slice %304 {offsets = [0, 0], sizes = [1, 64], strides = [1, 1]} : vector<12x64xf32> to vector<1x64xf32>
    %310 = vector.extract_strided_slice %304 {offsets = [1, 0], sizes = [1, 64], strides = [1, 1]} : vector<12x64xf32> to vector<1x64xf32>
    %311 = arith.maximumf %309, %310 : vector<1x64xf32>
    %c0_275 = arith.constant 0 : index
    %c0_276 = arith.constant 0 : index
    %312 = vector.load %arg8[%c0_275, %c0_276] : memref<1x64xf32, #tpu.memory_space<vmem>>, vector<1x64xf32>
    %313 = arith.mulf %311, %312 : vector<1x64xf32>
    %c0_277 = arith.constant 0 : index
    %c0_278 = arith.constant 0 : index
    %314 = vector.load %arg9[%c0_277, %c0_278] : memref<1x64xf32, #tpu.memory_space<vmem>>, vector<1x64xf32>
    %315 = arith.addf %313, %314 : vector<1x64xf32>
    %316 = arith.truncf %315 : vector<1x64xf32> to vector<1x64xbf16>
    %c0_279 = arith.constant 0 : index
    %c0_280 = arith.constant 0 : index
    %c0_281 = arith.constant 0 : index
    %317 = vector.load %arg11[%c0_279, %c0_280, %c0_281] : memref<12x64x128xbf16, #tpu.memory_space<vmem>>, vector<1x64x128xbf16>
    %318 = vector.shape_cast %317 : vector<1x64x128xbf16> to vector<64x128xbf16>
    %cst_282 = arith.constant dense<0.000000e+00> : vector<1x128xf32>
    %319 = tpu.matmul %316, %318, %cst_282 {dimension_numbers = #tpu.dot_dimension_numbers<[1], [0], [0], [1], [0, 0, 1, 1], [], []>} : vector<1x64xbf16>, vector<64x128xbf16>, vector<1x128xf32> -> vector<1x128xf32>
    %320 = arith.addf %308, %319 : vector<1x128xf32>
    %321 = vector.extract_strided_slice %304 {offsets = [2, 0], sizes = [1, 64], strides = [1, 1]} : vector<12x64xf32> to vector<1x64xf32>
    %322 = vector.extract_strided_slice %304 {offsets = [3, 0], sizes = [1, 64], strides = [1, 1]} : vector<12x64xf32> to vector<1x64xf32>
    %323 = arith.maximumf %321, %322 : vector<1x64xf32>
    %c0_283 = arith.constant 0 : index
    %c0_284 = arith.constant 0 : index
    %324 = vector.load %arg8[%c0_283, %c0_284] : memref<1x64xf32, #tpu.memory_space<vmem>>, vector<1x64xf32>
    %325 = arith.mulf %323, %324 : vector<1x64xf32>
    %c0_285 = arith.constant 0 : index
    %c0_286 = arith.constant 0 : index
    %326 = vector.load %arg9[%c0_285, %c0_286] : memref<1x64xf32, #tpu.memory_space<vmem>>, vector<1x64xf32>
    %327 = arith.addf %325, %326 : vector<1x64xf32>
    %328 = arith.truncf %327 : vector<1x64xf32> to vector<1x64xbf16>
    %c1_287 = arith.constant 1 : index
    %c0_288 = arith.constant 0 : index
    %c0_289 = arith.constant 0 : index
    %329 = vector.load %arg11[%c1_287, %c0_288, %c0_289] : memref<12x64x128xbf16, #tpu.memory_space<vmem>>, vector<1x64x128xbf16>
    %330 = vector.shape_cast %329 : vector<1x64x128xbf16> to vector<64x128xbf16>
    %cst_290 = arith.constant dense<0.000000e+00> : vector<1x128xf32>
    %331 = tpu.matmul %328, %330, %cst_290 {dimension_numbers = #tpu.dot_dimension_numbers<[1], [0], [0], [1], [0, 0, 1, 1], [], []>} : vector<1x64xbf16>, vector<64x128xbf16>, vector<1x128xf32> -> vector<1x128xf32>
    %332 = arith.addf %320, %331 : vector<1x128xf32>
    %333 = vector.extract_strided_slice %304 {offsets = [4, 0], sizes = [1, 64], strides = [1, 1]} : vector<12x64xf32> to vector<1x64xf32>
    %334 = vector.extract_strided_slice %304 {offsets = [5, 0], sizes = [1, 64], strides = [1, 1]} : vector<12x64xf32> to vector<1x64xf32>
    %335 = arith.maximumf %333, %334 : vector<1x64xf32>
    %c0_291 = arith.constant 0 : index
    %c0_292 = arith.constant 0 : index
    %336 = vector.load %arg8[%c0_291, %c0_292] : memref<1x64xf32, #tpu.memory_space<vmem>>, vector<1x64xf32>
    %337 = arith.mulf %335, %336 : vector<1x64xf32>
    %c0_293 = arith.constant 0 : index
    %c0_294 = arith.constant 0 : index
    %338 = vector.load %arg9[%c0_293, %c0_294] : memref<1x64xf32, #tpu.memory_space<vmem>>, vector<1x64xf32>
    %339 = arith.addf %337, %338 : vector<1x64xf32>
    %340 = arith.truncf %339 : vector<1x64xf32> to vector<1x64xbf16>
    %c2_295 = arith.constant 2 : index
    %c0_296 = arith.constant 0 : index
    %c0_297 = arith.constant 0 : index
    %341 = vector.load %arg11[%c2_295, %c0_296, %c0_297] : memref<12x64x128xbf16, #tpu.memory_space<vmem>>, vector<1x64x128xbf16>
    %342 = vector.shape_cast %341 : vector<1x64x128xbf16> to vector<64x128xbf16>
    %cst_298 = arith.constant dense<0.000000e+00> : vector<1x128xf32>
    %343 = tpu.matmul %340, %342, %cst_298 {dimension_numbers = #tpu.dot_dimension_numbers<[1], [0], [0], [1], [0, 0, 1, 1], [], []>} : vector<1x64xbf16>, vector<64x128xbf16>, vector<1x128xf32> -> vector<1x128xf32>
    %344 = arith.addf %332, %343 : vector<1x128xf32>
    %345 = vector.extract_strided_slice %304 {offsets = [6, 0], sizes = [1, 64], strides = [1, 1]} : vector<12x64xf32> to vector<1x64xf32>
    %346 = vector.extract_strided_slice %304 {offsets = [7, 0], sizes = [1, 64], strides = [1, 1]} : vector<12x64xf32> to vector<1x64xf32>
    %347 = arith.maximumf %345, %346 : vector<1x64xf32>
    %c0_299 = arith.constant 0 : index
    %c0_300 = arith.constant 0 : index
    %348 = vector.load %arg8[%c0_299, %c0_300] : memref<1x64xf32, #tpu.memory_space<vmem>>, vector<1x64xf32>
    %349 = arith.mulf %347, %348 : vector<1x64xf32>
    %c0_301 = arith.constant 0 : index
    %c0_302 = arith.constant 0 : index
    %350 = vector.load %arg9[%c0_301, %c0_302] : memref<1x64xf32, #tpu.memory_space<vmem>>, vector<1x64xf32>
    %351 = arith.addf %349, %350 : vector<1x64xf32>
    %352 = arith.truncf %351 : vector<1x64xf32> to vector<1x64xbf16>
    %c3_303 = arith.constant 3 : index
    %c0_304 = arith.constant 0 : index
    %c0_305 = arith.constant 0 : index
    %353 = vector.load %arg11[%c3_303, %c0_304, %c0_305] : memref<12x64x128xbf16, #tpu.memory_space<vmem>>, vector<1x64x128xbf16>
    %354 = vector.shape_cast %353 : vector<1x64x128xbf16> to vector<64x128xbf16>
    %cst_306 = arith.constant dense<0.000000e+00> : vector<1x128xf32>
    %355 = tpu.matmul %352, %354, %cst_306 {dimension_numbers = #tpu.dot_dimension_numbers<[1], [0], [0], [1], [0, 0, 1, 1], [], []>} : vector<1x64xbf16>, vector<64x128xbf16>, vector<1x128xf32> -> vector<1x128xf32>
    %356 = arith.addf %344, %355 : vector<1x128xf32>
    %357 = vector.extract_strided_slice %304 {offsets = [8, 0], sizes = [1, 64], strides = [1, 1]} : vector<12x64xf32> to vector<1x64xf32>
    %358 = vector.extract_strided_slice %304 {offsets = [9, 0], sizes = [1, 64], strides = [1, 1]} : vector<12x64xf32> to vector<1x64xf32>
    %359 = arith.maximumf %357, %358 : vector<1x64xf32>
    %c0_307 = arith.constant 0 : index
    %c0_308 = arith.constant 0 : index
    %360 = vector.load %arg8[%c0_307, %c0_308] : memref<1x64xf32, #tpu.memory_space<vmem>>, vector<1x64xf32>
    %361 = arith.mulf %359, %360 : vector<1x64xf32>
    %c0_309 = arith.constant 0 : index
    %c0_310 = arith.constant 0 : index
    %362 = vector.load %arg9[%c0_309, %c0_310] : memref<1x64xf32, #tpu.memory_space<vmem>>, vector<1x64xf32>
    %363 = arith.addf %361, %362 : vector<1x64xf32>
    %364 = arith.truncf %363 : vector<1x64xf32> to vector<1x64xbf16>
    %c4_311 = arith.constant 4 : index
    %c0_312 = arith.constant 0 : index
    %c0_313 = arith.constant 0 : index
    %365 = vector.load %arg11[%c4_311, %c0_312, %c0_313] : memref<12x64x128xbf16, #tpu.memory_space<vmem>>, vector<1x64x128xbf16>
    %366 = vector.shape_cast %365 : vector<1x64x128xbf16> to vector<64x128xbf16>
    %cst_314 = arith.constant dense<0.000000e+00> : vector<1x128xf32>
    %367 = tpu.matmul %364, %366, %cst_314 {dimension_numbers = #tpu.dot_dimension_numbers<[1], [0], [0], [1], [0, 0, 1, 1], [], []>} : vector<1x64xbf16>, vector<64x128xbf16>, vector<1x128xf32> -> vector<1x128xf32>
    %368 = arith.addf %356, %367 : vector<1x128xf32>
    %369 = vector.extract_strided_slice %304 {offsets = [10, 0], sizes = [1, 64], strides = [1, 1]} : vector<12x64xf32> to vector<1x64xf32>
    %370 = vector.extract_strided_slice %304 {offsets = [11, 0], sizes = [1, 64], strides = [1, 1]} : vector<12x64xf32> to vector<1x64xf32>
    %371 = arith.maximumf %369, %370 : vector<1x64xf32>
    %c0_315 = arith.constant 0 : index
    %c0_316 = arith.constant 0 : index
    %372 = vector.load %arg8[%c0_315, %c0_316] : memref<1x64xf32, #tpu.memory_space<vmem>>, vector<1x64xf32>
    %373 = arith.mulf %371, %372 : vector<1x64xf32>
    %c0_317 = arith.constant 0 : index
    %c0_318 = arith.constant 0 : index
    %374 = vector.load %arg9[%c0_317, %c0_318] : memref<1x64xf32, #tpu.memory_space<vmem>>, vector<1x64xf32>
    %375 = arith.addf %373, %374 : vector<1x64xf32>
    %376 = arith.truncf %375 : vector<1x64xf32> to vector<1x64xbf16>
    %c5 = arith.constant 5 : index
    %c0_319 = arith.constant 0 : index
    %c0_320 = arith.constant 0 : index
    %377 = vector.load %arg11[%c5, %c0_319, %c0_320] : memref<12x64x128xbf16, #tpu.memory_space<vmem>>, vector<1x64x128xbf16>
    %378 = vector.shape_cast %377 : vector<1x64x128xbf16> to vector<64x128xbf16>
    %cst_321 = arith.constant dense<0.000000e+00> : vector<1x128xf32>
    %379 = tpu.matmul %376, %378, %cst_321 {dimension_numbers = #tpu.dot_dimension_numbers<[1], [0], [0], [1], [0, 0, 1, 1], [], []>} : vector<1x64xbf16>, vector<64x128xbf16>, vector<1x128xf32> -> vector<1x128xf32>
    %380 = arith.addf %368, %379 : vector<1x128xf32>
    %381 = vector.extract_strided_slice %307 {offsets = [0, 0], sizes = [1, 64], strides = [1, 1]} : vector<12x64xf32> to vector<1x64xf32>
    %382 = vector.extract_strided_slice %307 {offsets = [1, 0], sizes = [1, 64], strides = [1, 1]} : vector<12x64xf32> to vector<1x64xf32>
    %383 = arith.maximumf %381, %382 : vector<1x64xf32>
    %c0_322 = arith.constant 0 : index
    %c0_323 = arith.constant 0 : index
    %384 = vector.load %arg8[%c0_322, %c0_323] : memref<1x64xf32, #tpu.memory_space<vmem>>, vector<1x64xf32>
    %385 = arith.mulf %383, %384 : vector<1x64xf32>
    %c0_324 = arith.constant 0 : index
    %c0_325 = arith.constant 0 : index
    %386 = vector.load %arg9[%c0_324, %c0_325] : memref<1x64xf32, #tpu.memory_space<vmem>>, vector<1x64xf32>
    %387 = arith.addf %385, %386 : vector<1x64xf32>
    %388 = arith.truncf %387 : vector<1x64xf32> to vector<1x64xbf16>
    %c6 = arith.constant 6 : index
    %c0_326 = arith.constant 0 : index
    %c0_327 = arith.constant 0 : index
    %389 = vector.load %arg11[%c6, %c0_326, %c0_327] : memref<12x64x128xbf16, #tpu.memory_space<vmem>>, vector<1x64x128xbf16>
    %390 = vector.shape_cast %389 : vector<1x64x128xbf16> to vector<64x128xbf16>
    %cst_328 = arith.constant dense<0.000000e+00> : vector<1x128xf32>
    %391 = tpu.matmul %388, %390, %cst_328 {dimension_numbers = #tpu.dot_dimension_numbers<[1], [0], [0], [1], [0, 0, 1, 1], [], []>} : vector<1x64xbf16>, vector<64x128xbf16>, vector<1x128xf32> -> vector<1x128xf32>
    %392 = arith.addf %380, %391 : vector<1x128xf32>
    %393 = vector.extract_strided_slice %307 {offsets = [2, 0], sizes = [1, 64], strides = [1, 1]} : vector<12x64xf32> to vector<1x64xf32>
    %394 = vector.extract_strided_slice %307 {offsets = [3, 0], sizes = [1, 64], strides = [1, 1]} : vector<12x64xf32> to vector<1x64xf32>
    %395 = arith.maximumf %393, %394 : vector<1x64xf32>
    %c0_329 = arith.constant 0 : index
    %c0_330 = arith.constant 0 : index
    %396 = vector.load %arg8[%c0_329, %c0_330] : memref<1x64xf32, #tpu.memory_space<vmem>>, vector<1x64xf32>
    %397 = arith.mulf %395, %396 : vector<1x64xf32>
    %c0_331 = arith.constant 0 : index
    %c0_332 = arith.constant 0 : index
    %398 = vector.load %arg9[%c0_331, %c0_332] : memref<1x64xf32, #tpu.memory_space<vmem>>, vector<1x64xf32>
    %399 = arith.addf %397, %398 : vector<1x64xf32>
    %400 = arith.truncf %399 : vector<1x64xf32> to vector<1x64xbf16>
    %c7 = arith.constant 7 : index
    %c0_333 = arith.constant 0 : index
    %c0_334 = arith.constant 0 : index
    %401 = vector.load %arg11[%c7, %c0_333, %c0_334] : memref<12x64x128xbf16, #tpu.memory_space<vmem>>, vector<1x64x128xbf16>
    %402 = vector.shape_cast %401 : vector<1x64x128xbf16> to vector<64x128xbf16>
    %cst_335 = arith.constant dense<0.000000e+00> : vector<1x128xf32>
    %403 = tpu.matmul %400, %402, %cst_335 {dimension_numbers = #tpu.dot_dimension_numbers<[1], [0], [0], [1], [0, 0, 1, 1], [], []>} : vector<1x64xbf16>, vector<64x128xbf16>, vector<1x128xf32> -> vector<1x128xf32>
    %404 = arith.addf %392, %403 : vector<1x128xf32>
    %405 = vector.extract_strided_slice %307 {offsets = [4, 0], sizes = [1, 64], strides = [1, 1]} : vector<12x64xf32> to vector<1x64xf32>
    %406 = vector.extract_strided_slice %307 {offsets = [5, 0], sizes = [1, 64], strides = [1, 1]} : vector<12x64xf32> to vector<1x64xf32>
    %407 = arith.maximumf %405, %406 : vector<1x64xf32>
    %c0_336 = arith.constant 0 : index
    %c0_337 = arith.constant 0 : index
    %408 = vector.load %arg8[%c0_336, %c0_337] : memref<1x64xf32, #tpu.memory_space<vmem>>, vector<1x64xf32>
    %409 = arith.mulf %407, %408 : vector<1x64xf32>
    %c0_338 = arith.constant 0 : index
    %c0_339 = arith.constant 0 : index
    %410 = vector.load %arg9[%c0_338, %c0_339] : memref<1x64xf32, #tpu.memory_space<vmem>>, vector<1x64xf32>
    %411 = arith.addf %409, %410 : vector<1x64xf32>
    %412 = arith.truncf %411 : vector<1x64xf32> to vector<1x64xbf16>
    %c8 = arith.constant 8 : index
    %c0_340 = arith.constant 0 : index
    %c0_341 = arith.constant 0 : index
    %413 = vector.load %arg11[%c8, %c0_340, %c0_341] : memref<12x64x128xbf16, #tpu.memory_space<vmem>>, vector<1x64x128xbf16>
    %414 = vector.shape_cast %413 : vector<1x64x128xbf16> to vector<64x128xbf16>
    %cst_342 = arith.constant dense<0.000000e+00> : vector<1x128xf32>
    %415 = tpu.matmul %412, %414, %cst_342 {dimension_numbers = #tpu.dot_dimension_numbers<[1], [0], [0], [1], [0, 0, 1, 1], [], []>} : vector<1x64xbf16>, vector<64x128xbf16>, vector<1x128xf32> -> vector<1x128xf32>
    %416 = arith.addf %404, %415 : vector<1x128xf32>
    %417 = vector.extract_strided_slice %307 {offsets = [6, 0], sizes = [1, 64], strides = [1, 1]} : vector<12x64xf32> to vector<1x64xf32>
    %418 = vector.extract_strided_slice %307 {offsets = [7, 0], sizes = [1, 64], strides = [1, 1]} : vector<12x64xf32> to vector<1x64xf32>
    %419 = arith.maximumf %417, %418 : vector<1x64xf32>
    %c0_343 = arith.constant 0 : index
    %c0_344 = arith.constant 0 : index
    %420 = vector.load %arg8[%c0_343, %c0_344] : memref<1x64xf32, #tpu.memory_space<vmem>>, vector<1x64xf32>
    %421 = arith.mulf %419, %420 : vector<1x64xf32>
    %c0_345 = arith.constant 0 : index
    %c0_346 = arith.constant 0 : index
    %422 = vector.load %arg9[%c0_345, %c0_346] : memref<1x64xf32, #tpu.memory_space<vmem>>, vector<1x64xf32>
    %423 = arith.addf %421, %422 : vector<1x64xf32>
    %424 = arith.truncf %423 : vector<1x64xf32> to vector<1x64xbf16>
    %c9 = arith.constant 9 : index
    %c0_347 = arith.constant 0 : index
    %c0_348 = arith.constant 0 : index
    %425 = vector.load %arg11[%c9, %c0_347, %c0_348] : memref<12x64x128xbf16, #tpu.memory_space<vmem>>, vector<1x64x128xbf16>
    %426 = vector.shape_cast %425 : vector<1x64x128xbf16> to vector<64x128xbf16>
    %cst_349 = arith.constant dense<0.000000e+00> : vector<1x128xf32>
    %427 = tpu.matmul %424, %426, %cst_349 {dimension_numbers = #tpu.dot_dimension_numbers<[1], [0], [0], [1], [0, 0, 1, 1], [], []>} : vector<1x64xbf16>, vector<64x128xbf16>, vector<1x128xf32> -> vector<1x128xf32>
    %428 = arith.addf %416, %427 : vector<1x128xf32>
    %429 = vector.extract_strided_slice %307 {offsets = [8, 0], sizes = [1, 64], strides = [1, 1]} : vector<12x64xf32> to vector<1x64xf32>
    %430 = vector.extract_strided_slice %307 {offsets = [9, 0], sizes = [1, 64], strides = [1, 1]} : vector<12x64xf32> to vector<1x64xf32>
    %431 = arith.maximumf %429, %430 : vector<1x64xf32>
    %c0_350 = arith.constant 0 : index
    %c0_351 = arith.constant 0 : index
    %432 = vector.load %arg8[%c0_350, %c0_351] : memref<1x64xf32, #tpu.memory_space<vmem>>, vector<1x64xf32>
    %433 = arith.mulf %431, %432 : vector<1x64xf32>
    %c0_352 = arith.constant 0 : index
    %c0_353 = arith.constant 0 : index
    %434 = vector.load %arg9[%c0_352, %c0_353] : memref<1x64xf32, #tpu.memory_space<vmem>>, vector<1x64xf32>
    %435 = arith.addf %433, %434 : vector<1x64xf32>
    %436 = arith.truncf %435 : vector<1x64xf32> to vector<1x64xbf16>
    %c10 = arith.constant 10 : index
    %c0_354 = arith.constant 0 : index
    %c0_355 = arith.constant 0 : index
    %437 = vector.load %arg11[%c10, %c0_354, %c0_355] : memref<12x64x128xbf16, #tpu.memory_space<vmem>>, vector<1x64x128xbf16>
    %438 = vector.shape_cast %437 : vector<1x64x128xbf16> to vector<64x128xbf16>
    %cst_356 = arith.constant dense<0.000000e+00> : vector<1x128xf32>
    %439 = tpu.matmul %436, %438, %cst_356 {dimension_numbers = #tpu.dot_dimension_numbers<[1], [0], [0], [1], [0, 0, 1, 1], [], []>} : vector<1x64xbf16>, vector<64x128xbf16>, vector<1x128xf32> -> vector<1x128xf32>
    %440 = arith.addf %428, %439 : vector<1x128xf32>
    %441 = vector.extract_strided_slice %307 {offsets = [10, 0], sizes = [1, 64], strides = [1, 1]} : vector<12x64xf32> to vector<1x64xf32>
    %442 = vector.extract_strided_slice %307 {offsets = [11, 0], sizes = [1, 64], strides = [1, 1]} : vector<12x64xf32> to vector<1x64xf32>
    %443 = arith.maximumf %441, %442 : vector<1x64xf32>
    %c0_357 = arith.constant 0 : index
    %c0_358 = arith.constant 0 : index
    %444 = vector.load %arg8[%c0_357, %c0_358] : memref<1x64xf32, #tpu.memory_space<vmem>>, vector<1x64xf32>
    %445 = arith.mulf %443, %444 : vector<1x64xf32>
    %c0_359 = arith.constant 0 : index
    %c0_360 = arith.constant 0 : index
    %446 = vector.load %arg9[%c0_359, %c0_360] : memref<1x64xf32, #tpu.memory_space<vmem>>, vector<1x64xf32>
    %447 = arith.addf %445, %446 : vector<1x64xf32>
    %448 = arith.truncf %447 : vector<1x64xf32> to vector<1x64xbf16>
    %c11 = arith.constant 11 : index
    %c0_361 = arith.constant 0 : index
    %c0_362 = arith.constant 0 : index
    %449 = vector.load %arg11[%c11, %c0_361, %c0_362] : memref<12x64x128xbf16, #tpu.memory_space<vmem>>, vector<1x64x128xbf16>
    %450 = vector.shape_cast %449 : vector<1x64x128xbf16> to vector<64x128xbf16>
    %cst_363 = arith.constant dense<0.000000e+00> : vector<1x128xf32>
    %451 = tpu.matmul %448, %450, %cst_363 {dimension_numbers = #tpu.dot_dimension_numbers<[1], [0], [0], [1], [0, 0, 1, 1], [], []>} : vector<1x64xbf16>, vector<64x128xbf16>, vector<1x128xf32> -> vector<1x128xf32>
    %452 = arith.addf %440, %451 : vector<1x128xf32>
    %c0_364 = arith.constant 0 : index
    %c0_365 = arith.constant 0 : index
    %453 = vector.load %arg12[%c0_364, %c0_365] : memref<1x128xf32, #tpu.memory_space<vmem>>, vector<1x128xf32>
    %454 = arith.addf %452, %453 : vector<1x128xf32>
    %cst_366 = arith.constant 0.000000e+00 : f32
    %455 = vector.broadcast %cst_366 : f32 to vector<1x128xf32>
    %456 = arith.maximumf %454, %455 : vector<1x128xf32>
    %457 = arith.truncf %456 : vector<1x128xf32> to vector<1x128xbf16>
    %c0_367 = arith.constant 0 : index
    %c0_368 = arith.constant 0 : index
    %458 = vector.load %arg13[%c0_367, %c0_368] : memref<128x3xbf16, #tpu.memory_space<vmem>>, vector<128x3xbf16>
    %cst_369 = arith.constant dense<0.000000e+00> : vector<1x3xf32>
    %459 = tpu.matmul %457, %458, %cst_369 {dimension_numbers = #tpu.dot_dimension_numbers<[1], [0], [0], [1], [0, 0, 1, 1], [], []>} : vector<1x128xbf16>, vector<128x3xbf16>, vector<1x3xf32> -> vector<1x3xf32>
    %c0_370 = arith.constant 0 : index
    %c0_371 = arith.constant 0 : index
    %460 = vector.load %arg14[%c0_370, %c0_371] : memref<1x3xf32, #tpu.memory_space<vmem>>, vector<1x3xf32>
    %461 = arith.addf %459, %460 : vector<1x3xf32>
    %c0_372 = arith.constant 0 : index
    %c0_373 = arith.constant 0 : index
    %c0_374 = arith.constant 0 : index
    %462 = vector.load %arg15[%c0_372, %c0_373, %c0_374] : memref<1x1x3xf32, #tpu.memory_space<vmem>>, vector<1x1x3xf32>
    %463 = vector.shape_cast %462 : vector<1x1x3xf32> to vector<1x3xf32>
    %464 = vector.shape_cast %461 : vector<1x3xf32> to vector<1x1x3xf32>
    tpu.vector_store %arg15[%c0_372, %c0_373, %c0_374], %464 {strides = array<i32>} : memref<1x1x3xf32, #tpu.memory_space<vmem>>, vector<1x1x3xf32>,
    return
  }
  func.func @transform_0(%arg0: i32) -> (i32, i32, i32) {
    %c0_i32 = arith.constant 0 : i32
    %c0_i32_0 = arith.constant 0 : i32
    %c0_i32_1 = arith.constant 0 : i32
    return %arg0, %c0_i32, %c0_i32_0 : i32, i32, i32
  }
  func.func @transform_1(%arg0: i32) -> (i32, i32) {
    %c0_i32 = arith.constant 0 : i32
    %c0_i32_0 = arith.constant 0 : i32
    %c0_i32_1 = arith.constant 0 : i32
    return %c0_i32, %c0_i32_0 : i32, i32
  }
  func.func @transform_2(%arg0: i32) -> (i32, i32) {
    %c0_i32 = arith.constant 0 : i32
    %c0_i32_0 = arith.constant 0 : i32
    %c0_i32_1 = arith.constant 0 : i32
    return %c0_i32, %c0_i32_0 : i32, i32
  }
  func.func @transform_3(%arg0: i32) -> (i32, i32) {
    %c0_i32 = arith.constant 0 : i32
    %c0_i32_0 = arith.constant 0 : i32
    %c0_i32_1 = arith.constant 0 : i32
    return %c0_i32, %c0_i32_0 : i32, i32
  }
  func.func @transform_4(%arg0: i32) -> (i32, i32) {
    %c0_i32 = arith.constant 0 : i32
    %c0_i32_0 = arith.constant 0 : i32
    %c0_i32_1 = arith.constant 0 : i32
    return %c0_i32, %c0_i32_0 : i32, i32
  }
  func.func @transform_5(%arg0: i32) -> (i32, i32, i32, i32) {
    %c0_i32 = arith.constant 0 : i32
    %c0_i32_0 = arith.constant 0 : i32
    %c0_i32_1 = arith.constant 0 : i32
    %c0_i32_2 = arith.constant 0 : i32
    %c0_i32_3 = arith.constant 0 : i32
    return %c0_i32, %c0_i32_0, %c0_i32_1, %c0_i32_2 : i32, i32, i32, i32
  }
  func.func @transform_6(%arg0: i32) -> (i32, i32) {
    %c0_i32 = arith.constant 0 : i32
    %c0_i32_0 = arith.constant 0 : i32
    %c0_i32_1 = arith.constant 0 : i32
    return %c0_i32, %c0_i32_0 : i32, i32
  }
  func.func @transform_7(%arg0: i32) -> (i32, i32) {
    %c0_i32 = arith.constant 0 : i32
    %c0_i32_0 = arith.constant 0 : i32
    %c0_i32_1 = arith.constant 0 : i32
    return %c0_i32, %c0_i32_0 : i32, i32
  }
  func.func @transform_8(%arg0: i32) -> (i32, i32) {
    %c0_i32 = arith.constant 0 : i32
    %c0_i32_0 = arith.constant 0 : i32
    %c0_i32_1 = arith.constant 0 : i32
    return %c0_i32, %c0_i32_0 : i32, i32
  }
  func.func @transform_9(%arg0: i32) -> (i32, i32, i32) {
    %c0_i32 = arith.constant 0 : i32
    %c0_i32_0 = arith.constant 0 : i32
    %c0_i32_1 = arith.constant 0 : i32
    %c0_i32_2 = arith.constant 0 : i32
    return %c0_i32, %c0_i32_0, %c0_i32_1 : i32, i32, i32
  }
  func.func @transform_10(%arg0: i32) -> (i32, i32, i32) {
    %c0_i32 = arith.constant 0 : i32
    %c0_i32_0 = arith.constant 0 : i32
    %c0_i32_1 = arith.constant 0 : i32
    %c0_i32_2 = arith.constant 0 : i32
    return %c0_i32, %c0_i32_0, %c0_i32_1 : i32, i32, i32
  }
  func.func @transform_11(%arg0: i32) -> (i32, i32) {
    %c0_i32 = arith.constant 0 : i32
    %c0_i32_0 = arith.constant 0 : i32
    %c0_i32_1 = arith.constant 0 : i32
    return %c0_i32, %c0_i32_0 : i32, i32
  }
  func.func @transform_12(%arg0: i32) -> (i32, i32) {
    %c0_i32 = arith.constant 0 : i32
    %c0_i32_0 = arith.constant 0 : i32
    %c0_i32_1 = arith.constant 0 : i32
    return %c0_i32, %c0_i32_0 : i32, i32
  }
  func.func @transform_13(%arg0: i32) -> (i32, i32) {
    %c0_i32 = arith.constant 0 : i32
    %c0_i32_0 = arith.constant 0 : i32
    %c0_i32_1 = arith.constant 0 : i32
    return %c0_i32, %c0_i32_0 : i32, i32
  }
  func.func @transform_14(%arg0: i32) -> (i32, i32, i32) {
    %c0_i32 = arith.constant 0 : i32
    %c0_i32_0 = arith.constant 0 : i32
    %c0_i32_1 = arith.constant 0 : i32
    return %arg0, %c0_i32, %c0_i32_0 : i32, i32, i32
  }
}

</mosaic_0001>

<llo_original>
// kernel: cnn_forward.1
$region0: #{cnn_forward.1}
  #allocation0 [shape = 'u32[]', space=smem, size = 0x4, offset = 0x4, fixed_abs, tag = 'smem constant byte address 0x4 - core index']
  #allocation1 [shape = 'u32[144,128]{1,0:T(1,128)}', space=vmem, size = 0x12000, scoped, tag = 'internal scratch']
  #allocation2 [shape = 'f32[88,48]{1,0:T(8,128)}', space=vmem, size = 0xb000, scoped, tag = 'scratch operand']
  #allocation3 [shape = 'f32[88,48]{1,0:T(8,128)}', space=vmem, size = 0xb000, scoped, tag = 'scratch operand']
  %s0 = inlined_call_operand.vmem [shape: bf16[2,480,128], index: 0, kind: input, shape index: {}]
  %s1 = inlined_call_operand.vmem [shape: bf16[128,48], index: 1, kind: input, shape index: {}]
  %s2 = inlined_call_operand.vmem [shape: f32[1,48], index: 2, kind: input, shape index: {}]
  %s3 = inlined_call_operand.vmem [shape: f32[1,48], index: 3, kind: input, shape index: {}]
  %s4 = inlined_call_operand.vmem [shape: f32[1,48], index: 4, kind: input, shape index: {}]
  %s5 = inlined_call_operand.vmem [shape: bf16[5,5,48,64], index: 5, kind: input, shape index: {}]
  %s6 = inlined_call_operand.vmem [shape: f32[1,64], index: 6, kind: input, shape index: {}]
  %s7 = inlined_call_operand.vmem [shape: f32[1,64], index: 7, kind: input, shape index: {}]
  %s8 = inlined_call_operand.vmem [shape: f32[1,64], index: 8, kind: input, shape index: {}]
  %s9 = inlined_call_operand.vmem [shape: f32[5,48,1], index: 9, kind: input, shape index: {}]
  %s10 = inlined_call_operand.vmem [shape: bf16[12,64,128], index: 10, kind: input, shape index: {}]
  %s11 = inlined_call_operand.vmem [shape: f32[1,128], index: 11, kind: input, shape index: {}]
  %s12 = inlined_call_operand.vmem [shape: bf16[128,3], index: 12, kind: input, shape index: {}]
  %s13 = inlined_call_operand.vmem [shape: f32[1,3], index: 13, kind: input, shape index: {}]
  %s14 = inlined_call_operand.hbm [shape: f32[2,1,3], index: 14, kind: output, shape index: {}]
  %s15 = sld [smem:[#allocation0]]
  $region89: #{cnn_forward.1} parent=0
    _
  %s17 = ssub.s32 1, %s15
  %s18 = scalar_select 0, %s17, %s15
  $region1: #{cnn_forward.1} parent=0
    #allocation4 [shape = 'u8[1024]{0}', space=vmem, size = 0x400, scoped, tag = 'output window, operand 0']
    #allocation5 [shape = 's32[2]{0}', space=sflag, size = 0x8, scoped, tag = 'scoped memory for cnn_forward.1']
    %19 = vsyncpa [#allocation5], 0
    %s20 = scalar_lea.sflag [#allocation5], 1
    %21 = vsyncpa %s20, 0
    loop: start=0, step=1, limit=4
    $region2: #{cnn_forward.1} parent=1 // loop_pre_header
      _
    $region3: #{cnn_forward.1} parent=1 // loop_header
      %s23 = sphi 0, %s27
      %p24 = scmp.ge.s32.totalorder %s23, 4
      %s33 = sphi 0, %s35
      %s36 = sphi 0, %s33
      %s37 = sphi 0, %s36
      %s53 = sphi 0, %s37
      %s57 = sphi 0, %s57
      %s59 = sphi 0, %s57
      %s60 = sphi 0, %s59
      %s74 = sphi 0, %s60
      %s78 = sphi 0, %s78
      %s80 = sphi 0, %s78
      %s81 = sphi 0, %s80
      %s95 = sphi 0, %s81
      %s99 = sphi 0, %s99
      %s101 = sphi 0, %s99
      %s102 = sphi 0, %s101
      %s116 = sphi 0, %s102
      %s120 = sphi 0, %s120
      %s122 = sphi 0, %s120
      %s123 = sphi 0, %s122
      %s137 = sphi 0, %s123
      %s141 = sphi 0, %s141
      %s143 = sphi 0, %s141
      %s144 = sphi 0, %s143
      %s158 = sphi 0, %s144
      %s162 = sphi 0, %s162
      %s164 = sphi 0, %s162
      %s165 = sphi 0, %s164
      %s179 = sphi 0, %s165
      %s183 = sphi 0, %s183
      %s185 = sphi 0, %s183
      %s186 = sphi 0, %s185
      %s200 = sphi 0, %s186
      %s204 = sphi 0, %s204
      %s206 = sphi 0, %s204
      %s207 = sphi 0, %s206
      %s221 = sphi 0, %s207
      %s225 = sphi 0, %s225
      %s227 = sphi 0, %s225
      %s228 = sphi 0, %s227
      %s242 = sphi 0, %s228
      %s246 = sphi 0, %s246
      %s248 = sphi 0, %s246
      %s249 = sphi 0, %s248
      %s263 = sphi 0, %s249
      %s267 = sphi 0, %s267
      %s269 = sphi 0, %s267
      %s270 = sphi 0, %s269
      %s284 = sphi 0, %s270
      %s288 = sphi 0, %s288
      %s290 = sphi 0, %s288
      %s291 = sphi 0, %s290
      %s305 = sphi 0, %s291
      %s309 = sphi 0, %s309
      %s311 = sphi 0, %s309
      %s312 = sphi 0, %s311
      %s326 = sphi 0, %s312
      %s332 = sphi 0, %s334
      %s335 = sphi 0, %s332
      %s336 = sphi 0, %s335
      %s352 = sphi 0, %s336
    $region4: #{cnn_forward.1} parent=1 // loop_header_branch
      %26 = sbr.rel (%p24) target = $region8
    $region5: #{cnn_forward.1} parent=1 // loop_body
      %s28 = ssub.s32 %s23, 1
      %s29 = ssub.s32 %s23, 2
      %s30 = sadd.s32 %s23, 1
      %s31 = ssub.s32 %s23, %s30
      %p32 = scmp.eq.s32.totalorder %s31, 0
      %s34 = sadd.s32 %s33, 1
      %s35 = scalar_select %p32, %s33, %s34
      %p38 = pneg %p32
      %p39 = scmp.eq.s32.totalorder %s23, 1
      %p40 = por %p38, %p39
      %p41 = scmp.ne.s32.totalorder %s33, %s36
      %p42 = scmp.eq.s32.totalorder %s23, 0
      %p43 = por %p41, %p42
      %p44 = scmp.ne.s32.totalorder %s33, %s36
      %p45 = scmp.eq.s32.totalorder %s28, 1
      %p46 = por %p44, %p45
      %p47 = scmp.ne.s32.totalorder %s36, %s37
      %p48 = scmp.eq.s32.totalorder %s28, 0
      %p49 = por %p47, %p48
      %p50 = scmp.ne.s32.totalorder %s36, %s37
      %p51 = scmp.eq.s32.totalorder %s29, 1
      %p52 = por %p50, %p51
      %p54 = scmp.ne.s32.totalorder %s37, %s53
      %p55 = scmp.eq.s32.totalorder %s29, 0
      %p56 = por %p54, %p55
      %s58 = sadd.s32 %s57, 1
      %p61 = scmp.eq.s32.totalorder %s23, 1
      %p62 = scmp.ne.s32.totalorder %s57, %s59
      %p63 = scmp.eq.s32.totalorder %s23, 0
      %p64 = por %p62, %p63
      %p65 = scmp.ne.s32.totalorder %s57, %s59
      %p66 = scmp.eq.s32.totalorder %s28, 1
      %p67 = por %p65, %p66
      %p68 = scmp.ne.s32.totalorder %s59, %s60
      %p69 = scmp.eq.s32.totalorder %s28, 0
      %p70 = por %p68, %p69
      %p71 = scmp.ne.s32.totalorder %s59, %s60
      %p72 = scmp.eq.s32.totalorder %s29, 1
      %p73 = por %p71, %p72
      %p75 = scmp.ne.s32.totalorder %s60, %s74
      %p76 = scmp.eq.s32.totalorder %s29, 0
      %p77 = por %p75, %p76
      %s79 = sadd.s32 %s78, 1
      %p82 = scmp.eq.s32.totalorder %s23, 1
      %p83 = scmp.ne.s32.totalorder %s78, %s80
      %p84 = scmp.eq.s32.totalorder %s23, 0
      %p85 = por %p83, %p84
      %p86 = scmp.ne.s32.totalorder %s78, %s80
      %p87 = scmp.eq.s32.totalorder %s28, 1
      %p88 = por %p86, %p87
      %p89 = scmp.ne.s32.totalorder %s80, %s81
      %p90 = scmp.eq.s32.totalorder %s28, 0
      %p91 = por %p89, %p90
      %p92 = scmp.ne.s32.totalorder %s80, %s81
      %p93 = scmp.eq.s32.totalorder %s29, 1
      %p94 = por %p92, %p93
      %p96 = scmp.ne.s32.totalorder %s81, %s95
      %p97 = scmp.eq.s32.totalorder %s29, 0
      %p98 = por %p96, %p97
      %s100 = sadd.s32 %s99, 1
      %p103 = scmp.eq.s32.totalorder %s23, 1
      %p104 = scmp.ne.s32.totalorder %s99, %s101
      %p105 = scmp.eq.s32.totalorder %s23, 0
      %p106 = por %p104, %p105
      %p107 = scmp.ne.s32.totalorder %s99, %s101
      %p108 = scmp.eq.s32.totalorder %s28, 1
      %p109 = por %p107, %p108
      %p110 = scmp.ne.s32.totalorder %s101, %s102
      %p111 = scmp.eq.s32.totalorder %s28, 0
      %p112 = por %p110, %p111
      %p113 = scmp.ne.s32.totalorder %s101, %s102
      %p114 = scmp.eq.s32.totalorder %s29, 1
      %p115 = por %p113, %p114
      %p117 = scmp.ne.s32.totalorder %s102, %s116
      %p118 = scmp.eq.s32.totalorder %s29, 0
      %p119 = por %p117, %p118
      %s121 = sadd.s32 %s120, 1
      %p124 = scmp.eq.s32.totalorder %s23, 1
      %p125 = scmp.ne.s32.totalorder %s120, %s122
      %p126 = scmp.eq.s32.totalorder %s23, 0
      %p127 = por %p125, %p126
      %p128 = scmp.ne.s32.totalorder %s120, %s122
      %p129 = scmp.eq.s32.totalorder %s28, 1
      %p130 = por %p128, %p129
      %p131 = scmp.ne.s32.totalorder %s122, %s123
      %p132 = scmp.eq.s32.totalorder %s28, 0
      %p133 = por %p131, %p132
      %p134 = scmp.ne.s32.totalorder %s122, %s123
      %p135 = scmp.eq.s32.totalorder %s29, 1
      %p136 = por %p134, %p135
      %p138 = scmp.ne.s32.totalorder %s123, %s137
      %p139 = scmp.eq.s32.totalorder %s29, 0
      %p140 = por %p138, %p139
      %s142 = sadd.s32 %s141, 1
      %p145 = scmp.eq.s32.totalorder %s23, 1
      %p146 = scmp.ne.s32.totalorder %s141, %s143
      %p147 = scmp.eq.s32.totalorder %s23, 0
      %p148 = por %p146, %p147
      %p149 = scmp.ne.s32.totalorder %s141, %s143
      %p150 = scmp.eq.s32.totalorder %s28, 1
      %p151 = por %p149, %p150
      %p152 = scmp.ne.s32.totalorder %s143, %s144
      %p153 = scmp.eq.s32.totalorder %s28, 0
      %p154 = por %p152, %p153
      %p155 = scmp.ne.s32.totalorder %s143, %s144
      %p156 = scmp.eq.s32.totalorder %s29, 1
      %p157 = por %p155, %p156
      %p159 = scmp.ne.s32.totalorder %s144, %s158
      %p160 = scmp.eq.s32.totalorder %s29, 0
      %p161 = por %p159, %p160
      %s163 = sadd.s32 %s162, 1
      %p166 = scmp.eq.s32.totalorder %s23, 1
      %p167 = scmp.ne.s32.totalorder %s162, %s164
      %p168 = scmp.eq.s32.totalorder %s23, 0
      %p169 = por %p167, %p168
      %p170 = scmp.ne.s32.totalorder %s162, %s164
      %p171 = scmp.eq.s32.totalorder %s28, 1
      %p172 = por %p170, %p171
      %p173 = scmp.ne.s32.totalorder %s164, %s165
      %p174 = scmp.eq.s32.totalorder %s28, 0
      %p175 = por %p173, %p174
      %p176 = scmp.ne.s32.totalorder %s164, %s165
      %p177 = scmp.eq.s32.totalorder %s29, 1
      %p178 = por %p176, %p177
      %p180 = scmp.ne.s32.totalorder %s165, %s179
      %p181 = scmp.eq.s32.totalorder %s29, 0
      %p182 = por %p180, %p181
      %s184 = sadd.s32 %s183, 1
      %p187 = scmp.eq.s32.totalorder %s23, 1
      %p188 = scmp.ne.s32.totalorder %s183, %s185
      %p189 = scmp.eq.s32.totalorder %s23, 0
      %p190 = por %p188, %p189
      %p191 = scmp.ne.s32.totalorder %s183, %s185
      %p192 = scmp.eq.s32.totalorder %s28, 1
      %p193 = por %p191, %p192
      %p194 = scmp.ne.s32.totalorder %s185, %s186
      %p195 = scmp.eq.s32.totalorder %s28, 0
      %p196 = por %p194, %p195
      %p197 = scmp.ne.s32.totalorder %s185, %s186
      %p198 = scmp.eq.s32.totalorder %s29, 1
      %p199 = por %p197, %p198
      %p201 = scmp.ne.s32.totalorder %s186, %s200
      %p202 = scmp.eq.s32.totalorder %s29, 0
      %p203 = por %p201, %p202
      %s205 = sadd.s32 %s204, 1
      %p208 = scmp.eq.s32.totalorder %s23, 1
      %p209 = scmp.ne.s32.totalorder %s204, %s206
      %p210 = scmp.eq.s32.totalorder %s23, 0
      %p211 = por %p209, %p210
      %p212 = scmp.ne.s32.totalorder %s204, %s206
      %p213 = scmp.eq.s32.totalorder %s28, 1
      %p214 = por %p212, %p213
      %p215 = scmp.ne.s32.totalorder %s206, %s207
      %p216 = scmp.eq.s32.totalorder %s28, 0
      %p217 = por %p215, %p216
      %p218 = scmp.ne.s32.totalorder %s206, %s207
      %p219 = scmp.eq.s32.totalorder %s29, 1
      %p220 = por %p218, %p219
      %p222 = scmp.ne.s32.totalorder %s207, %s221
      %p223 = scmp.eq.s32.totalorder %s29, 0
      %p224 = por %p222, %p223
      %s226 = sadd.s32 %s225, 1
      %p229 = scmp.eq.s32.totalorder %s23, 1
      %p230 = scmp.ne.s32.totalorder %s225, %s227
      %p231 = scmp.eq.s32.totalorder %s23, 0
      %p232 = por %p230, %p231
      %p233 = scmp.ne.s32.totalorder %s225, %s227
      %p234 = scmp.eq.s32.totalorder %s28, 1
      %p235 = por %p233, %p234
      %p236 = scmp.ne.s32.totalorder %s227, %s228
      %p237 = scmp.eq.s32.totalorder %s28, 0
      %p238 = por %p236, %p237
      %p239 = scmp.ne.s32.totalorder %s227, %s228
      %p240 = scmp.eq.s32.totalorder %s29, 1
      %p241 = por %p239, %p240
      %p243 = scmp.ne.s32.totalorder %s228, %s242
      %p244 = scmp.eq.s32.totalorder %s29, 0
      %p245 = por %p243, %p244
      %s247 = sadd.s32 %s246, 1
      %p250 = scmp.eq.s32.totalorder %s23, 1
      %p251 = scmp.ne.s32.totalorder %s246, %s248
      %p252 = scmp.eq.s32.totalorder %s23, 0
      %p253 = por %p251, %p252
      %p254 = scmp.ne.s32.totalorder %s246, %s248
      %p255 = scmp.eq.s32.totalorder %s28, 1
      %p256 = por %p254, %p255
      %p257 = scmp.ne.s32.totalorder %s248, %s249
      %p258 = scmp.eq.s32.totalorder %s28, 0
      %p259 = por %p257, %p258
      %p260 = scmp.ne.s32.totalorder %s248, %s249
      %p261 = scmp.eq.s32.totalorder %s29, 1
      %p262 = por %p260, %p261
      %p264 = scmp.ne.s32.totalorder %s249, %s263
      %p265 = scmp.eq.s32.totalorder %s29, 0
      %p266 = por %p264, %p265
      %s268 = sadd.s32 %s267, 1
      %p271 = scmp.eq.s32.totalorder %s23, 1
      %p272 = scmp.ne.s32.totalorder %s267, %s269
      %p273 = scmp.eq.s32.totalorder %s23, 0
      %p274 = por %p272, %p273
      %p275 = scmp.ne.s32.totalorder %s267, %s269
      %p276 = scmp.eq.s32.totalorder %s28, 1
      %p277 = por %p275, %p276
      %p278 = scmp.ne.s32.totalorder %s269, %s270
      %p279 = scmp.eq.s32.totalorder %s28, 0
      %p280 = por %p278, %p279
      %p281 = scmp.ne.s32.totalorder %s269, %s270
      %p282 = scmp.eq.s32.totalorder %s29, 1
      %p283 = por %p281, %p282
      %p285 = scmp.ne.s32.totalorder %s270, %s284
      %p286 = scmp.eq.s32.totalorder %s29, 0
      %p287 = por %p285, %p286
      %s289 = sadd.s32 %s288, 1
      %p292 = scmp.eq.s32.totalorder %s23, 1
      %p293 = scmp.ne.s32.totalorder %s288, %s290
      %p294 = scmp.eq.s32.totalorder %s23, 0
      %p295 = por %p293, %p294
      %p296 = scmp.ne.s32.totalorder %s288, %s290
      %p297 = scmp.eq.s32.totalorder %s28, 1
      %p298 = por %p296, %p297
      %p299 = scmp.ne.s32.totalorder %s290, %s291
      %p300 = scmp.eq.s32.totalorder %s28, 0
      %p301 = por %p299, %p300
      %p302 = scmp.ne.s32.totalorder %s290, %s291
      %p303 = scmp.eq.s32.totalorder %s29, 1
      %p304 = por %p302, %p303
      %p306 = scmp.ne.s32.totalorder %s291, %s305
      %p307 = scmp.eq.s32.totalorder %s29, 0
      %p308 = por %p306, %p307
      %s310 = sadd.s32 %s309, 1
      %p313 = scmp.eq.s32.totalorder %s23, 1
      %p314 = scmp.ne.s32.totalorder %s309, %s311
      %p315 = scmp.eq.s32.totalorder %s23, 0
      %p316 = por %p314, %p315
      %p317 = scmp.ne.s32.totalorder %s309, %s311
      %p318 = scmp.eq.s32.totalorder %s28, 1
      %p319 = por %p317, %p318
      %p320 = scmp.ne.s32.totalorder %s311, %s312
      %p321 = scmp.eq.s32.totalorder %s28, 0
      %p322 = por %p320, %p321
      %p323 = scmp.ne.s32.totalorder %s311, %s312
      %p324 = scmp.eq.s32.totalorder %s29, 1
      %p325 = por %p323, %p324
      %p327 = scmp.ne.s32.totalorder %s312, %s326
      %p328 = scmp.eq.s32.totalorder %s29, 0
      %p329 = por %p327, %p328
      %s330 = ssub.s32 %s23, %s30
      %p331 = scmp.eq.s32.totalorder %s330, 0
      %s333 = sadd.s32 %s332, 1
      %s334 = scalar_select %p331, %s332, %s333
      %p337 = pneg %p331
      %p338 = scmp.eq.s32.totalorder %s23, 1
      %p339 = por %p337, %p338
      %p340 = scmp.ne.s32.totalorder %s332, %s335
      %p341 = scmp.eq.s32.totalorder %s23, 0
      %p342 = por %p340, %p341
      %p343 = scmp.ne.s32.totalorder %s332, %s335
      %p344 = scmp.eq.s32.totalorder %s28, 1
      %p345 = por %p343, %p344
      %p346 = scmp.ne.s32.totalorder %s335, %s336
      %p347 = scmp.eq.s32.totalorder %s28, 0
      %p348 = por %p346, %p347
      %p349 = scmp.ne.s32.totalorder %s335, %s336
      %p350 = scmp.eq.s32.totalorder %s29, 1
      %p351 = por %p349, %p350
      %p353 = scmp.ne.s32.totalorder %s336, %s352
      %p354 = scmp.eq.s32.totalorder %s29, 0
      %p355 = por %p353, %p354
      %p356 = scmp.le.s32.totalorder 1, %s23
      %p357 = scmp.lt.s32.totalorder %s23, 3
      %p358 = pnand %p356, %p357
      %p359 = pneg %p358
      // Predicated region
      $region9: #{cnn_forward.1} parent=5 // pred_check
        _
      $region10: #{cnn_forward.1} parent=5 // pred_check_branch
        %361 = sbr.rel (%p358) target = $region12
      $region11: #{cnn_forward.1} parent=5 // pred_region
        %s362 = ssub.s32 %s23, 1
        // Predicated region
        $region13: #{cnn_forward.1} parent=11 // pred_check
          %p363 = pneg %p70
        $region14: #{cnn_forward.1} parent=11 // pred_check_branch
          %365 = sbr.rel (%p363) target = $region16
        $region15: #{cnn_forward.1} parent=11 // pred_region
          _
        $region16: #{cnn_forward.1} parent=11 // pred_fallthru
          _
        // Predicated region
        $region17: #{cnn_forward.1} parent=11 // pred_check
          %p366 = pneg %p91
        $region18: #{cnn_forward.1} parent=11 // pred_check_branch
          %368 = sbr.rel (%p366) target = $region20
        $region19: #{cnn_forward.1} parent=11 // pred_region
          _
        $region20: #{cnn_forward.1} parent=11 // pred_fallthru
          _
        // Predicated region
        $region21: #{cnn_forward.1} parent=11 // pred_check
          %p369 = pneg %p112
        $region22: #{cnn_forward.1} parent=11 // pred_check_branch
          %371 = sbr.rel (%p369) target = $region24
        $region23: #{cnn_forward.1} parent=11 // pred_region
          _
        $region24: #{cnn_forward.1} parent=11 // pred_fallthru
          _
        // Predicated region
        $region25: #{cnn_forward.1} parent=11 // pred_check
          %p372 = pneg %p133
        $region26: #{cnn_forward.1} parent=11 // pred_check_branch
          %374 = sbr.rel (%p372) target = $region28
        $region27: #{cnn_forward.1} parent=11 // pred_region
          _
        $region28: #{cnn_forward.1} parent=11 // pred_fallthru
          _
        // Predicated region
        $region29: #{cnn_forward.1} parent=11 // pred_check
          %p375 = pneg %p154
        $region30: #{cnn_forward.1} parent=11 // pred_check_branch
          %377 = sbr.rel (%p375) target = $region32
        $region31: #{cnn_forward.1} parent=11 // pred_region
          _
        $region32: #{cnn_forward.1} parent=11 // pred_fallthru
          _
        // Predicated region
        $region33: #{cnn_forward.1} parent=11 // pred_check
          %p378 = pneg %p175
        $region34: #{cnn_forward.1} parent=11 // pred_check_branch
          %380 = sbr.rel (%p378) target = $region36
        $region35: #{cnn_forward.1} parent=11 // pred_region
          _
        $region36: #{cnn_forward.1} parent=11 // pred_fallthru
          _
        // Predicated region
        $region37: #{cnn_forward.1} parent=11 // pred_check
          %p381 = pneg %p196
        $region38: #{cnn_forward.1} parent=11 // pred_check_branch
          %383 = sbr.rel (%p381) target = $region40
        $region39: #{cnn_forward.1} parent=11 // pred_region
          _
        $region40: #{cnn_forward.1} parent=11 // pred_fallthru
          _
        // Predicated region
        $region41: #{cnn_forward.1} parent=11 // pred_check
          %p384 = pneg %p217
        $region42: #{cnn_forward.1} parent=11 // pred_check_branch
          %386 = sbr.rel (%p384) target = $region44
        $region43: #{cnn_forward.1} parent=11 // pred_region
          _
        $region44: #{cnn_forward.1} parent=11 // pred_fallthru
          _
        // Predicated region
        $region45: #{cnn_forward.1} parent=11 // pred_check
          %p387 = pneg %p238
        $region46: #{cnn_forward.1} parent=11 // pred_check_branch
          %389 = sbr.rel (%p387) target = $region48
        $region47: #{cnn_forward.1} parent=11 // pred_region
          _
        $region48: #{cnn_forward.1} parent=11 // pred_fallthru
          _
        // Predicated region
        $region49: #{cnn_forward.1} parent=11 // pred_check
          %p390 = pneg %p259
        $region50: #{cnn_forward.1} parent=11 // pred_check_branch
          %392 = sbr.rel (%p390) target = $region52
        $region51: #{cnn_forward.1} parent=11 // pred_region
          _
        $region52: #{cnn_forward.1} parent=11 // pred_fallthru
          _
        // Predicated region
        $region53: #{cnn_forward.1} parent=11 // pred_check
          %p393 = pneg %p280
        $region54: #{cnn_forward.1} parent=11 // pred_check_branch
          %395 = sbr.rel (%p393) target = $region56
        $region55: #{cnn_forward.1} parent=11 // pred_region
          _
        $region56: #{cnn_forward.1} parent=11 // pred_fallthru
          _
        // Predicated region
        $region57: #{cnn_forward.1} parent=11 // pred_check
          %p396 = pneg %p301
        $region58: #{cnn_forward.1} parent=11 // pred_check_branch
          %398 = sbr.rel (%p396) target = $region60
        $region59: #{cnn_forward.1} parent=11 // pred_region
          _
        $region60: #{cnn_forward.1} parent=11 // pred_fallthru
          _
        // Predicated region
        $region61: #{cnn_forward.1} parent=11 // pred_check
          %p399 = pneg %p322
        $region62: #{cnn_forward.1} parent=11 // pred_check_branch
          %401 = sbr.rel (%p399) target = $region64
        $region63: #{cnn_forward.1} parent=11 // pred_region
          _
        $region64: #{cnn_forward.1} parent=11 // pred_fallthru
          _
      $region12: #{cnn_forward.1} parent=5 // pred_fallthru
        _
      %p402 = scmp.lt.s32.totalorder %s23, 2
      // Predicated region
      $region65: #{cnn_forward.1} parent=5 // pred_check
        %p403 = pneg %p402
      $region66: #{cnn_forward.1} parent=5 // pred_check_branch
        %405 = sbr.rel (%p403) target = $region68
      $region67: #{cnn_forward.1} parent=5 // pred_region
        // Predicated region
        $region69: #{cnn_forward.1} parent=67 // pred_check
          %p406 = pneg %p43
        $region70: #{cnn_forward.1} parent=67 // pred_check_branch
          %408 = sbr.rel (%p406) target = $region72
        $region71: #{cnn_forward.1} parent=67 // pred_region
          %p409 = scmp.lt.s32.totalorder %s23, 1
          %s410 = scalar_select %p409, %s23, 1
          %s411 = smul.addr %s410, 60
          %s412 = smul.addr %s411, 4
          %s413 = scalar_lea.vmem %s0, %s412
        $region72: #{cnn_forward.1} parent=67 // pred_fallthru
          _
      $region68: #{cnn_forward.1} parent=5 // pred_fallthru
        _
      %p414 = scmp.le.s32.totalorder 1, %s23
      %p415 = scmp.lt.s32.totalorder %s23, 3
      %p416 = pnand %p414, %p415
      %p417 = pneg %p416
      // Predicated region
      $region73: #{cnn_forward.1} parent=5 // pred_check
        _
      $region74: #{cnn_forward.1} parent=5 // pred_check_branch
        %419 = sbr.rel (%p416) target = $region76
      $region75: #{cnn_forward.1} parent=5 // pred_region
        %s420 = ssub.s32 %s23, 1
        %p421 = scmp.lt.s32.totalorder %s28, 1
        %s422 = scalar_select %p421, %s28, 1
        %s423 = smul.addr %s422, 60
        %s424 = smul.addr %s423, 4
        %s425 = scalar_lea.vmem %s0, %s424
        %p426 = pneg %p49
        %p427 = pneg %p46
        %p428 = pneg %p70
        %p429 = pneg %p67
        %p430 = pneg %p91
        %p431 = pneg %p88
        %p432 = pneg %p112
        %p433 = pneg %p109
        %p434 = pneg %p133
        %p435 = pneg %p130
        %p436 = pneg %p154
        %p437 = pneg %p151
        %p438 = pneg %p175
        %p439 = pneg %p172
        %p440 = pneg %p196
        %p441 = pneg %p193
        %p442 = pneg %p217
        %p443 = pneg %p214
        %p444 = pneg %p238
        %p445 = pneg %p235
        %p446 = pneg %p259
        %p447 = pneg %p256
        %p448 = pneg %p280
        %p449 = pneg %p277
        %p450 = pneg %p301
        %p451 = pneg %p298
        %p452 = pneg %p322
        %p453 = pneg %p319
        %p454 = pneg %p348
        %p455 = pneg %p345
        %s456 = sand.u32 %s335, 1
        %s457 = scalar_lea.sflag [#allocation5], %s456
        %s458 = sand.u32 %s335, 1
        %s459 = scalar_lea.vmem [#allocation4], %s458
        %p460 = scmp.lt.s32.totalorder %s28, 1
        %s461 = scalar_select %p460, %s28, 1
        %s462 = smul.addr %s461, 60
        %s463 = smul.addr %s462, 4
        %s464 = scalar_lea.vmem %s0, %s463
        %v466 = vld [vmem:[%s464] sm:$0xf]
        %v467 = vld [vmem:[%s464 + $0x4] sm:$0xf]
        %v468 = vld [vmem:[%s464 + $0x8] sm:$0xf]
        %v469 = vld [vmem:[%s464 + $0xc] sm:$0xf]
        %v470 = vld [vmem:[%s464 + $0x10] sm:$0xf]
        %v471 = vld [vmem:[%s464 + $0x14] sm:$0xf]
        %v472 = vld [vmem:[%s464 + $0x18] sm:$0xf]
        %v473 = vld [vmem:[%s464 + $0x1c] sm:$0xf]
        %v474 = vld [vmem:[%s464 + $0x20] sm:$0xf]
        %v475 = vld [vmem:[%s464 + $0x24] sm:$0xf]
        %v476 = vld [vmem:[%s464 + $0x28] sm:$0xf]
        %v477 = vld [vmem:[%s464 + $0x2c] sm:$0xf]
        %v478 = vld [vmem:[%s464 + $0x30] sm:$0xf]
        %v479 = vld [vmem:[%s464 + $0x34] sm:$0xf]
        %v480 = vld [vmem:[%s464 + $0x38] sm:$0xf]
        %v481 = vld [vmem:[%s464 + $0x3c] sm:$0xf]
        %v482 = vld [vmem:[%s464 + $0x40] sm:$0xf]
        %v483 = vld [vmem:[%s464 + $0x44] sm:$0xf]
        %v484 = vld [vmem:[%s464 + $0x48] sm:$0xf]
        %v485 = vld [vmem:[%s464 + $0x4c] sm:$0xf]
        %v486 = vld [vmem:[%s464 + $0x50] sm:$0xf]
        %v487 = vld [vmem:[%s464 + $0x54] sm:$0xf]
        %v488 = vld [vmem:[%s464 + $0x58] sm:$0xf]
        %v489 = vld [vmem:[%s464 + $0x5c] sm:$0xf]
        %v490 = vld [vmem:[%s464 + $0x60] sm:$0xf]
        %v491 = vld [vmem:[%s464 + $0x64] sm:$0xf]
        %v492 = vld [vmem:[%s464 + $0x68] sm:$0xf]
        %v493 = vld [vmem:[%s464 + $0x6c] sm:$0xf]
        %v494 = vld [vmem:[%s464 + $0x70] sm:$0xf]
        %v495 = vld [vmem:[%s464 + $0x74] sm:$0xf]
        %v496 = vld [vmem:[%s464 + $0x78] sm:$0xf]
        %v497 = vld [vmem:[%s464 + $0x7c] sm:$0xf]
        %v498 = vld [vmem:[%s464 + $0x80] sm:$0xf]
        %v499 = vld [vmem:[%s464 + $0x84] sm:$0xf]
        %v500 = vld [vmem:[%s464 + $0x88] sm:$0xf]
        %v501 = vld [vmem:[%s464 + $0x8c] sm:$0xf]
        %v502 = vld [vmem:[%s464 + $0x90] sm:$0xf]
        %v503 = vld [vmem:[%s464 + $0x94] sm:$0xf]
        %v504 = vld [vmem:[%s464 + $0x98] sm:$0xf]
        %v505 = vld [vmem:[%s464 + $0x9c] sm:$0xf]
        %v506 = vld [vmem:[%s464 + $0xa0] sm:$0xf]
        %v507 = vld [vmem:[%s464 + $0xa4] sm:$0xf]
        %v508 = vld [vmem:[%s464 + $0xa8] sm:$0xf]
        %v509 = vld [vmem:[%s464 + $0xac] sm:$0xf]
        %v510 = vld [vmem:[%s464 + $0xb0] sm:$0xf]
        %v511 = vld [vmem:[%s464 + $0xb4] sm:$0xf]
        %v512 = vld [vmem:[%s464 + $0xb8] sm:$0xf]
        %v513 = vld [vmem:[%s464 + $0xbc] sm:$0xf]
        %v514 = vld [vmem:[%s464 + $0xc0] sm:$0xf]
        %v515 = vld [vmem:[%s464 + $0xc4] sm:$0xf]
        %v516 = vld [vmem:[%s464 + $0xc8] sm:$0xf]
        %v517 = vld [vmem:[%s464 + $0xcc] sm:$0xf]
        %v518 = vld [vmem:[%s464 + $0xd0] sm:$0xf]
        %v519 = vld [vmem:[%s464 + $0xd4] sm:$0xf]
        %v520 = vld [vmem:[%s464 + $0xd8] sm:$0xf]
        %v521 = vld [vmem:[%s464 + $0xdc] sm:$0xf]
        %v522 = vld [vmem:[%s464 + $0xe0] sm:$0xf]
        %v523 = vld [vmem:[%s464 + $0xe4] sm:$0xf]
        %v524 = vld [vmem:[%s464 + $0xe8] sm:$0xf]
        %v525 = vld [vmem:[%s464 + $0xec] sm:$0xf]
        %v526 = vld [vmem:[%s1] sm:$0xf]
        %v527 = vld [vmem:[%s1 + $0x4] sm:$0xf]
        %v528 = vld [vmem:[%s1 + $0x8] sm:$0xf]
        %v529 = vld [vmem:[%s1 + $0xc] sm:$0xf]
        %v530 = vld [vmem:[%s1 + $0x10] sm:$0xf]
        %v531 = vld [vmem:[%s1 + $0x14] sm:$0xf]
        %v532 = vld [vmem:[%s1 + $0x18] sm:$0xf]
        %v533 = vld [vmem:[%s1 + $0x1c] sm:$0xf]
        %v534 = vld [vmem:[%s1 + $0x20] sm:$0xf]
        %v535 = vld [vmem:[%s1 + $0x24] sm:$0xf]
        %v536 = vld [vmem:[%s1 + $0x28] sm:$0xf]
        %v537 = vld [vmem:[%s1 + $0x2c] sm:$0xf]
        %v538 = vld [vmem:[%s1 + $0x30] sm:$0xf]
        %v539 = vld [vmem:[%s1 + $0x34] sm:$0xf]
        %v540 = vld [vmem:[%s1 + $0x38] sm:$0xf]
        %v541 = vld [vmem:[%s1 + $0x3c] sm:$0xf]
        %v542 = vld [vmem:[%s2] sm:$0x1]
        %v544 = vlaneseq
        %v545 = vshrl.u32 %v544, 7
        %v546 = vsub.s32 0, %v545
        %v547 = vrot.slane %v542, %v546
        %v609 = vunpack.c.l.b16 %v466
        %v610 = vunpack.c.l.b16 %v467
        %v611 = vunpack.c.l.b16 %v468
        %v612 = vunpack.c.l.b16 %v469
        %v613 = vunpack.c.l.b16 %v470
        %v614 = vunpack.c.l.b16 %v471
        %v615 = vunpack.c.l.b16 %v472
        %v616 = vunpack.c.l.b16 %v473
        %v617 = vunpack.c.l.b16 %v474
        %v618 = vunpack.c.l.b16 %v475
        %v619 = vunpack.c.l.b16 %v476
        %v620 = vunpack.c.l.b16 %v477
        %v621 = vunpack.c.l.b16 %v478
        %v622 = vunpack.c.l.b16 %v479
        %v623 = vunpack.c.l.b16 %v480
        %v624 = vunpack.c.l.b16 %v481
        %v625 = vunpack.c.l.b16 %v482
        %v626 = vunpack.c.l.b16 %v483
        %v627 = vunpack.c.l.b16 %v484
        %v628 = vunpack.c.l.b16 %v485
        %v629 = vunpack.c.l.b16 %v486
        %v630 = vunpack.c.l.b16 %v487
        %v631 = vunpack.c.l.b16 %v488
        %v632 = vunpack.c.l.b16 %v489
        %v633 = vunpack.c.l.b16 %v490
        %v634 = vunpack.c.l.b16 %v491
        %v635 = vunpack.c.l.b16 %v492
        %v636 = vunpack.c.l.b16 %v493
        %v637 = vunpack.c.l.b16 %v494
        %v638 = vunpack.c.l.b16 %v495
        %v639 = vunpack.c.l.b16 %v496
        %v640 = vunpack.c.l.b16 %v497
        %v641 = vunpack.c.l.b16 %v498
        %v642 = vunpack.c.l.b16 %v499
        %v643 = vunpack.c.l.b16 %v500
        %v644 = vunpack.c.l.b16 %v501
        %v645 = vunpack.c.l.b16 %v502
        %v646 = vunpack.c.l.b16 %v503
        %v647 = vunpack.c.l.b16 %v504
        %v648 = vunpack.c.l.b16 %v505
        %v649 = vunpack.c.l.b16 %v506
        %v650 = vunpack.c.l.b16 %v507
        %v651 = vunpack.c.l.b16 %v508
        %v652 = vunpack.c.l.b16 %v509
        %v653 = vunpack.c.l.b16 %v510
        %v654 = vunpack.c.l.b16 %v511
        %v655 = vunpack.c.l.b16 %v512
        %v656 = vunpack.c.l.b16 %v513
        %v657 = vunpack.c.l.b16 %v514
        %v658 = vunpack.c.l.b16 %v515
        %v659 = vunpack.c.l.b16 %v516
        %v660 = vunpack.c.l.b16 %v517
        %v661 = vunpack.c.l.b16 %v518
        %v662 = vunpack.c.l.b16 %v519
        %v663 = vunpack.c.l.b16 %v520
        %v664 = vunpack.c.l.b16 %v521
        %v665 = vunpack.c.l.b16 %v522
        %v666 = vunpack.c.l.b16 %v523
        %v667 = vunpack.c.l.b16 %v524
        %v668 = vunpack.c.l.b16 %v525
        %v669 = vpack.c.b16 %v610, %v609
        %v670 = vpack.c.b16 %v612, %v611
        %v671 = vpack.c.b16 %v614, %v613
        %v672 = vpack.c.b16 %v616, %v615
        %v673 = vpack.c.b16 %v618, %v617
        %v674 = vpack.c.b16 %v620, %v619
        %v675 = vpack.c.b16 %v622, %v621
        %v676 = vpack.c.b16 %v624, %v623
        %v677 = vpack.c.b16 %v626, %v625
        %v678 = vpack.c.b16 %v628, %v627
        %v679 = vpack.c.b16 %v630, %v629
        %v680 = vpack.c.b16 %v632, %v631
        %v681 = vpack.c.b16 %v634, %v633
        %v682 = vpack.c.b16 %v636, %v635
        %v683 = vpack.c.b16 %v638, %v637
        %v684 = vpack.c.b16 %v640, %v639
        %v685 = vpack.c.b16 %v642, %v641
        %v686 = vpack.c.b16 %v644, %v643
        %v687 = vpack.c.b16 %v646, %v645
        %v688 = vpack.c.b16 %v648, %v647
        %v689 = vpack.c.b16 %v650, %v649
        %v690 = vpack.c.b16 %v652, %v651
        %v691 = vpack.c.b16 %v654, %v653
        %v692 = vpack.c.b16 %v656, %v655
        %v693 = vpack.c.b16 %v658, %v657
        %v694 = vpack.c.b16 %v660, %v659
        %v695 = vpack.c.b16 %v662, %v661
        %v696 = vpack.c.b16 %v664, %v663
        %v697 = vpack.c.b16 %v666, %v665
        %v698 = vpack.c.b16 %v668, %v667
        %v745 = vunpack.c.l.b16 %v526
        %v746 = vunpack.c.l.b16 %v527
        %v747 = vunpack.c.l.b16 %v528
        %v748 = vunpack.c.l.b16 %v529
        %v749 = vunpack.c.l.b16 %v530
        %v750 = vunpack.c.l.b16 %v531
        %v751 = vunpack.c.l.b16 %v532
        %v752 = vunpack.c.l.b16 %v533
        %v753 = vunpack.c.l.b16 %v534
        %v754 = vunpack.c.l.b16 %v535
        %v755 = vunpack.c.l.b16 %v536
        %v756 = vunpack.c.l.b16 %v537
        %v757 = vunpack.c.l.b16 %v538
        %v758 = vunpack.c.l.b16 %v539
        %v759 = vunpack.c.l.b16 %v540
        %v760 = vunpack.c.l.b16 %v541
        %v761 = vpack.c.b16 %v746, %v745
        %v762 = vpack.c.b16 %v748, %v747
        %v763 = vpack.c.b16 %v750, %v749
        %v764 = vpack.c.b16 %v752, %v751
        %v765 = vpack.c.b16 %v754, %v753
        %v766 = vpack.c.b16 %v756, %v755
        %v767 = vpack.c.b16 %v758, %v757
        %v768 = vpack.c.b16 %v760, %v759
        %777 = vmatprep.subr.bf16.mxu0 0
        %778 = vmatpush1.bf16.msra.mxu0 %v768
        %779 = vmatprep.subr.bf16.mxu0 0
        %780 = vmatpush1.bf16.msra.mxu0 %v767
        %781 = vmatprep.subr.bf16.mxu0 0
        %782 = vmatpush1.bf16.msra.mxu0 %v766
        %783 = vmatprep.subr.bf16.mxu0 0
        %784 = vmatpush1.bf16.msra.mxu0 %v765
        %785 = vmatprep.subr.bf16.mxu0 0
        %786 = vmatpush1.bf16.msra.mxu0 %v764
        %787 = vmatprep.subr.bf16.mxu0 0
        %788 = vmatpush1.bf16.msra.mxu0 %v763
        %789 = vmatprep.subr.bf16.mxu0 0
        %790 = vmatpush1.bf16.msra.mxu0 %v762
        %791 = vmatprep.subr.bf16.mxu0 0
        %792 = vmatpush1.bf16.msra.mxu0 %v761
        %793 = vmatprep.subr.bf16.mxu0 0
        %794 = vmatpush2.bf16.msra.mxu0 0
        %795 = vmatprep.subr.bf16.mxu0 0
        %796 = vmatpush2.bf16.msra.mxu0 0
        %797 = vmatprep.subr.bf16.mxu0 0
        %798 = vmatpush2.bf16.msra.mxu0 0
        %799 = vmatprep.subr.bf16.mxu0 0
        %800 = vmatpush2.bf16.msra.mxu0 0
        %801 = vmatprep.subr.bf16.mxu0 0
        %802 = vmatpush2.bf16.msra.mxu0 0
        %803 = vmatprep.subr.bf16.mxu0 0
        %804 = vmatpush2.bf16.msra.mxu0 0
        %805 = vmatprep.subr.bf16.mxu0 0
        %806 = vmatpush2.bf16.msra.mxu0 0
        %807 = vmatprep.subr.bf16.mxu0 0
        %808 = vmatpush2.bf16.msra.mxu0 0
        %809 = vmatprep.mubr.bf16.mxu0 0
        %810 = vmatmul.mubr.bf16.gmra.mxu0 %v669
        %v811 = vpop.f32.mrf.mxu0
        %v812 = vadd.f32 %v547, %v811
        %v813 = vpop.f32.mrf.mxu0
        %v814 = vpop.f32.mrf.mxu0
        %v815 = vadd.f32 %v547, %v814
        %v816 = vpop.f32.mrf.mxu0
        %817 = vmatprep.mubr.bf16.mxu0 0
        %818 = vmatmul.mubr.bf16.gmra.mxu0 %v670
        %v819 = vpop.f32.mrf.mxu0
        %v820 = vadd.f32 %v547, %v819
        %v821 = vpop.f32.mrf.mxu0
        %v822 = vpop.f32.mrf.mxu0
        %v823 = vadd.f32 %v547, %v822
        %v824 = vpop.f32.mrf.mxu0
        %825 = vmatprep.mubr.bf16.mxu0 0
        %826 = vmatmul.mubr.bf16.gmra.mxu0 %v671
        %v827 = vpop.f32.mrf.mxu0
        %v828 = vadd.f32 %v547, %v827
        %v829 = vpop.f32.mrf.mxu0
        %v830 = vpop.f32.mrf.mxu0
        %v831 = vadd.f32 %v547, %v830
        %v832 = vpop.f32.mrf.mxu0
        %833 = vmatprep.mubr.bf16.mxu0 0
        %834 = vmatmul.mubr.bf16.gmra.mxu0 %v672
        %v835 = vpop.f32.mrf.mxu0
        %v836 = vadd.f32 %v547, %v835
        %v837 = vpop.f32.mrf.mxu0
        %v838 = vpop.f32.mrf.mxu0
        %v839 = vadd.f32 %v547, %v838
        %v840 = vpop.f32.mrf.mxu0
        %841 = vmatprep.mubr.bf16.mxu0 0
        %842 = vmatmul.mubr.bf16.gmra.mxu0 %v673
        %v843 = vpop.f32.mrf.mxu0
        %v844 = vadd.f32 %v547, %v843
        %v845 = vpop.f32.mrf.mxu0
        %v846 = vpop.f32.mrf.mxu0
        %v847 = vadd.f32 %v547, %v846
        %v848 = vpop.f32.mrf.mxu0
        %849 = vmatprep.mubr.bf16.mxu0 0
        %850 = vmatmul.mubr.bf16.gmra.mxu0 %v674
        %v851 = vpop.f32.mrf.mxu0
        %v852 = vadd.f32 %v547, %v851
        %v853 = vpop.f32.mrf.mxu0
        %v854 = vpop.f32.mrf.mxu0
        %v855 = vadd.f32 %v547, %v854
        %v856 = vpop.f32.mrf.mxu0
        %857 = vmatprep.mubr.bf16.mxu0 0
        %858 = vmatmul.mubr.bf16.gmra.mxu0 %v675
        %v859 = vpop.f32.mrf.mxu0
        %v860 = vadd.f32 %v547, %v859
        %v861 = vpop.f32.mrf.mxu0
        %v862 = vpop.f32.mrf.mxu0
        %v863 = vadd.f32 %v547, %v862
        %v864 = vpop.f32.mrf.mxu0
        %865 = vmatprep.mubr.bf16.mxu0 0
        %866 = vmatmul.mubr.bf16.gmra.mxu0 %v676
        %v867 = vpop.f32.mrf.mxu0
        %v868 = vadd.f32 %v547, %v867
        %v869 = vpop.f32.mrf.mxu0
        %v870 = vpop.f32.mrf.mxu0
        %v871 = vadd.f32 %v547, %v870
        %v872 = vpop.f32.mrf.mxu0
        %873 = vmatprep.mubr.bf16.mxu0 0
        %874 = vmatmul.mubr.bf16.gmra.mxu0 %v677
        %v875 = vpop.f32.mrf.mxu0
        %v876 = vadd.f32 %v547, %v875
        %v877 = vpop.f32.mrf.mxu0
        %v878 = vpop.f32.mrf.mxu0
        %v879 = vadd.f32 %v547, %v878
        %v880 = vpop.f32.mrf.mxu0
        %881 = vmatprep.mubr.bf16.mxu0 0
        %882 = vmatmul.mubr.bf16.gmra.mxu0 %v678
        %v883 = vpop.f32.mrf.mxu0
        %v884 = vadd.f32 %v547, %v883
        %v885 = vpop.f32.mrf.mxu0
        %v886 = vpop.f32.mrf.mxu0
        %v887 = vadd.f32 %v547, %v886
        %v888 = vpop.f32.mrf.mxu0
        %889 = vmatprep.mubr.bf16.mxu0 0
        %890 = vmatmul.mubr.bf16.gmra.mxu0 %v679
        %v891 = vpop.f32.mrf.mxu0
        %v892 = vadd.f32 %v547, %v891
        %v893 = vpop.f32.mrf.mxu0
        %v894 = vpop.f32.mrf.mxu0
        %v895 = vadd.f32 %v547, %v894
        %v896 = vpop.f32.mrf.mxu0
        %897 = vmatprep.mubr.bf16.mxu0 0
        %898 = vmatmul.mubr.bf16.gmra.mxu0 %v680
        %v899 = vpop.f32.mrf.mxu0
        %v900 = vadd.f32 %v547, %v899
        %v901 = vpop.f32.mrf.mxu0
        %v902 = vpop.f32.mrf.mxu0
        %v903 = vadd.f32 %v547, %v902
        %v904 = vpop.f32.mrf.mxu0
        %905 = vmatprep.mubr.bf16.mxu0 0
        %906 = vmatmul.mubr.bf16.gmra.mxu0 %v681
        %v907 = vpop.f32.mrf.mxu0
        %v908 = vadd.f32 %v547, %v907
        %v909 = vpop.f32.mrf.mxu0
        %v910 = vpop.f32.mrf.mxu0
        %v911 = vadd.f32 %v547, %v910
        %v912 = vpop.f32.mrf.mxu0
        %913 = vmatprep.mubr.bf16.mxu0 0
        %914 = vmatmul.mubr.bf16.gmra.mxu0 %v682
        %v915 = vpop.f32.mrf.mxu0
        %v916 = vadd.f32 %v547, %v915
        %v917 = vpop.f32.mrf.mxu0
        %v918 = vpop.f32.mrf.mxu0
        %v919 = vadd.f32 %v547, %v918
        %v920 = vpop.f32.mrf.mxu0
        %921 = vmatprep.mubr.bf16.mxu0 0
        %922 = vmatmul.mubr.bf16.gmra.mxu0 %v683
        %v923 = vpop.f32.mrf.mxu0
        %v924 = vadd.f32 %v547, %v923
        %v925 = vpop.f32.mrf.mxu0
        %v926 = vpop.f32.mrf.mxu0
        %v927 = vadd.f32 %v547, %v926
        %v928 = vpop.f32.mrf.mxu0
        %929 = vmatprep.mubr.bf16.mxu0 0
        %930 = vmatmul.mubr.bf16.gmra.mxu0 %v684
        %v931 = vpop.f32.mrf.mxu0
        %v932 = vadd.f32 %v547, %v931
        %v933 = vpop.f32.mrf.mxu0
        %v934 = vpop.f32.mrf.mxu0
        %v935 = vadd.f32 %v547, %v934
        %v936 = vpop.f32.mrf.mxu0
        %937 = vmatprep.mubr.bf16.mxu0 0
        %938 = vmatmul.mubr.bf16.gmra.mxu0 %v685
        %v939 = vpop.f32.mrf.mxu0
        %v940 = vadd.f32 %v547, %v939
        %v941 = vpop.f32.mrf.mxu0
        %v942 = vpop.f32.mrf.mxu0
        %v943 = vadd.f32 %v547, %v942
        %v944 = vpop.f32.mrf.mxu0
        %945 = vmatprep.mubr.bf16.mxu0 0
        %946 = vmatmul.mubr.bf16.gmra.mxu0 %v686
        %v947 = vpop.f32.mrf.mxu0
        %v948 = vadd.f32 %v547, %v947
        %v949 = vpop.f32.mrf.mxu0
        %v950 = vpop.f32.mrf.mxu0
        %v951 = vadd.f32 %v547, %v950
        %v952 = vpop.f32.mrf.mxu0
        %953 = vmatprep.mubr.bf16.mxu0 0
        %954 = vmatmul.mubr.bf16.gmra.mxu0 %v687
        %v955 = vpop.f32.mrf.mxu0
        %v956 = vadd.f32 %v547, %v955
        %v957 = vpop.f32.mrf.mxu0
        %v958 = vpop.f32.mrf.mxu0
        %v959 = vadd.f32 %v547, %v958
        %v960 = vpop.f32.mrf.mxu0
        %961 = vmatprep.mubr.bf16.mxu0 0
        %962 = vmatmul.mubr.bf16.gmra.mxu0 %v688
        %v963 = vpop.f32.mrf.mxu0
        %v964 = vadd.f32 %v547, %v963
        %v965 = vpop.f32.mrf.mxu0
        %v966 = vpop.f32.mrf.mxu0
        %v967 = vadd.f32 %v547, %v966
        %v968 = vpop.f32.mrf.mxu0
        %969 = vmatprep.mubr.bf16.mxu0 0
        %970 = vmatmul.mubr.bf16.gmra.mxu0 %v689
        %v971 = vpop.f32.mrf.mxu0
        %v972 = vadd.f32 %v547, %v971
        %v973 = vpop.f32.mrf.mxu0
        %v974 = vpop.f32.mrf.mxu0
        %v975 = vadd.f32 %v547, %v974
        %v976 = vpop.f32.mrf.mxu0
        %977 = vmatprep.mubr.bf16.mxu0 0
        %978 = vmatmul.mubr.bf16.gmra.mxu0 %v690
        %v979 = vpop.f32.mrf.mxu0
        %v980 = vadd.f32 %v547, %v979
        %v981 = vpop.f32.mrf.mxu0
        %v982 = vpop.f32.mrf.mxu0
        %v983 = vadd.f32 %v547, %v982
        %v984 = vpop.f32.mrf.mxu0
        %985 = vmatprep.mubr.bf16.mxu0 0
        %986 = vmatmul.mubr.bf16.gmra.mxu0 %v691
        %v987 = vpop.f32.mrf.mxu0
        %v988 = vadd.f32 %v547, %v987
        %v989 = vpop.f32.mrf.mxu0
        %v990 = vpop.f32.mrf.mxu0
        %v991 = vadd.f32 %v547, %v990
        %v992 = vpop.f32.mrf.mxu0
        %993 = vmatprep.mubr.bf16.mxu0 0
        %994 = vmatmul.mubr.bf16.gmra.mxu0 %v692
        %v995 = vpop.f32.mrf.mxu0
        %v996 = vadd.f32 %v547, %v995
        %v997 = vpop.f32.mrf.mxu0
        %v998 = vpop.f32.mrf.mxu0
        %v999 = vadd.f32 %v547, %v998
        %v1000 = vpop.f32.mrf.mxu0
        %1001 = vmatprep.mubr.bf16.mxu0 0
        %1002 = vmatmul.mubr.bf16.gmra.mxu0 %v693
        %v1003 = vpop.f32.mrf.mxu0
        %v1004 = vadd.f32 %v547, %v1003
        %v1005 = vpop.f32.mrf.mxu0
        %v1006 = vpop.f32.mrf.mxu0
        %v1007 = vadd.f32 %v547, %v1006
        %v1008 = vpop.f32.mrf.mxu0
        %1009 = vmatprep.mubr.bf16.mxu0 0
        %1010 = vmatmul.mubr.bf16.gmra.mxu0 %v694
        %v1011 = vpop.f32.mrf.mxu0
        %v1012 = vadd.f32 %v547, %v1011
        %v1013 = vpop.f32.mrf.mxu0
        %v1014 = vpop.f32.mrf.mxu0
        %v1015 = vadd.f32 %v547, %v1014
        %v1016 = vpop.f32.mrf.mxu0
        %1017 = vmatprep.mubr.bf16.mxu0 0
        %1018 = vmatmul.mubr.bf16.gmra.mxu0 %v695
        %v1019 = vpop.f32.mrf.mxu0
        %v1020 = vadd.f32 %v547, %v1019
        %v1021 = vpop.f32.mrf.mxu0
        %v1022 = vpop.f32.mrf.mxu0
        %v1023 = vadd.f32 %v547, %v1022
        %v1024 = vpop.f32.mrf.mxu0
        %1025 = vmatprep.mubr.bf16.mxu0 0
        %1026 = vmatmul.mubr.bf16.gmra.mxu0 %v696
        %v1027 = vpop.f32.mrf.mxu0
        %v1028 = vadd.f32 %v547, %v1027
        %v1029 = vpop.f32.mrf.mxu0
        %v1030 = vpop.f32.mrf.mxu0
        %v1031 = vadd.f32 %v547, %v1030
        %v1032 = vpop.f32.mrf.mxu0
        %1033 = vmatprep.mubr.bf16.mxu0 0
        %1034 = vmatmul.mubr.bf16.gmra.mxu0 %v697
        %v1035 = vpop.f32.mrf.mxu0
        %v1036 = vadd.f32 %v547, %v1035
        %v1037 = vpop.f32.mrf.mxu0
        %v1038 = vpop.f32.mrf.mxu0
        %v1039 = vadd.f32 %v547, %v1038
        %v1040 = vpop.f32.mrf.mxu0
        %1041 = vmatprep.mubr.bf16.mxu0 0
        %1042 = vmatmul.mubr.bf16.gmra.mxu0 %v698
        %v1043 = vpop.f32.mrf.mxu0
        %v1044 = vadd.f32 %v547, %v1043
        %v1045 = vpop.f32.mrf.mxu0
        %v1046 = vpop.f32.mrf.mxu0
        %v1047 = vadd.f32 %v547, %v1046
        %v1048 = vpop.f32.mrf.mxu0
        %1049 = vdwg.mxu0
        %v1050 = vmax.f32 %v812, 0.0
        %v1051 = vmax.f32 %v815, 0.0
        %v1052 = vmax.f32 %v820, 0.0
        %v1053 = vmax.f32 %v823, 0.0
        %v1054 = vmax.f32 %v828, 0.0
        %v1055 = vmax.f32 %v831, 0.0
        %v1056 = vmax.f32 %v836, 0.0
        %v1057 = vmax.f32 %v839, 0.0
        %v1058 = vmax.f32 %v844, 0.0
        %v1059 = vmax.f32 %v847, 0.0
        %v1060 = vmax.f32 %v852, 0.0
        %v1061 = vmax.f32 %v855, 0.0
        %v1062 = vmax.f32 %v860, 0.0
        %v1063 = vmax.f32 %v863, 0.0
        %v1064 = vmax.f32 %v868, 0.0
        %v1065 = vmax.f32 %v871, 0.0
        %v1066 = vmax.f32 %v876, 0.0
        %v1067 = vmax.f32 %v879, 0.0
        %v1068 = vmax.f32 %v884, 0.0
        %v1069 = vmax.f32 %v887, 0.0
        %v1070 = vmax.f32 %v892, 0.0
        %v1071 = vmax.f32 %v895, 0.0
        %v1072 = vmax.f32 %v900, 0.0
        %v1073 = vmax.f32 %v903, 0.0
        %v1074 = vmax.f32 %v908, 0.0
        %v1075 = vmax.f32 %v911, 0.0
        %v1076 = vmax.f32 %v916, 0.0
        %v1077 = vmax.f32 %v919, 0.0
        %v1078 = vmax.f32 %v924, 0.0
        %v1079 = vmax.f32 %v927, 0.0
        %v1080 = vmax.f32 %v932, 0.0
        %v1081 = vmax.f32 %v935, 0.0
        %v1082 = vmax.f32 %v940, 0.0
        %v1083 = vmax.f32 %v943, 0.0
        %v1084 = vmax.f32 %v948, 0.0
        %v1085 = vmax.f32 %v951, 0.0
        %v1086 = vmax.f32 %v956, 0.0
        %v1087 = vmax.f32 %v959, 0.0
        %v1088 = vmax.f32 %v964, 0.0
        %v1089 = vmax.f32 %v967, 0.0
        %v1090 = vmax.f32 %v972, 0.0
        %v1091 = vmax.f32 %v975, 0.0
        %v1092 = vmax.f32 %v980, 0.0
        %v1093 = vmax.f32 %v983, 0.0
        %v1094 = vmax.f32 %v988, 0.0
        %v1095 = vmax.f32 %v991, 0.0
        %v1096 = vmax.f32 %v996, 0.0
        %v1097 = vmax.f32 %v999, 0.0
        %v1098 = vmax.f32 %v1004, 0.0
        %v1099 = vmax.f32 %v1007, 0.0
        %v1100 = vmax.f32 %v1012, 0.0
        %v1101 = vmax.f32 %v1015, 0.0
        %v1102 = vmax.f32 %v1020, 0.0
        %v1103 = vmax.f32 %v1023, 0.0
        %v1104 = vmax.f32 %v1028, 0.0
        %v1105 = vmax.f32 %v1031, 0.0
        %v1106 = vmax.f32 %v1036, 0.0
        %v1107 = vmax.f32 %v1039, 0.0
        %v1108 = vmax.f32 %v1044, 0.0
        %v1109 = vmax.f32 %v1047, 0.0
        %v1110 = vmax.f32 %v1050, %v1065
        %v1111 = vmax.f32 %v1051, %v1066
        %v1112 = vmax.f32 %v1052, %v1067
        %v1113 = vmax.f32 %v1053, %v1068
        %v1114 = vmax.f32 %v1054, %v1069
        %v1115 = vmax.f32 %v1055, %v1070
        %v1116 = vmax.f32 %v1056, %v1071
        %v1117 = vmax.f32 %v1057, %v1072
        %v1118 = vmax.f32 %v1058, %v1073
        %v1119 = vmax.f32 %v1059, %v1074
        %v1120 = vmax.f32 %v1060, %v1075
        %v1121 = vmax.f32 %v1061, %v1076
        %v1122 = vmax.f32 %v1062, %v1077
        %v1123 = vmax.f32 %v1063, %v1078
        %v1124 = vmax.f32 %v1064, %v1079
        %v1125 = vmax.f32 %v1080, %v1095
        %v1126 = vmax.f32 %v1081, %v1096
        %v1127 = vmax.f32 %v1082, %v1097
        %v1128 = vmax.f32 %v1083, %v1098
        %v1129 = vmax.f32 %v1084, %v1099
        %v1130 = vmax.f32 %v1085, %v1100
        %v1131 = vmax.f32 %v1086, %v1101
        %v1132 = vmax.f32 %v1087, %v1102
        %v1133 = vmax.f32 %v1088, %v1103
        %v1134 = vmax.f32 %v1089, %v1104
        %v1135 = vmax.f32 %v1090, %v1105
        %v1136 = vmax.f32 %v1091, %v1106
        %v1137 = vmax.f32 %v1092, %v1107
        %v1138 = vmax.f32 %v1093, %v1108
        %v1139 = vmax.f32 %v1094, %v1109
        %v1140 = vmax.f32 %v1110, %v1125
        %v1141 = vmax.f32 %v1111, %v1126
        %v1142 = vmax.f32 %v1112, %v1127
        %v1143 = vmax.f32 %v1113, %v1128
        %v1144 = vmax.f32 %v1114, %v1129
        %v1145 = vmax.f32 %v1115, %v1130
        %v1146 = vmax.f32 %v1116, %v1131
        %v1147 = vmax.f32 %v1117, %v1132
        %v1148 = vmax.f32 %v1118, %v1133
        %v1149 = vmax.f32 %v1119, %v1134
        %v1150 = vmax.f32 %v1120, %v1135
        %v1151 = vmax.f32 %v1121, %v1136
        %v1152 = vmax.f32 %v1122, %v1137
        %v1153 = vmax.f32 %v1123, %v1138
        %v1154 = vmax.f32 %v1124, %v1139
        %v1155 = vld [vmem:[%s3] sm:$0x1]
        %v1157 = vlaneseq
        %v1158 = vshrl.u32 %v1157, 7
        %v1159 = vsub.s32 0, %v1158
        %v1160 = vrot.slane %v1155, %v1159
        %v1162 = vmul.f32 %v1140, %v1160
        %v1163 = vmul.f32 %v1141, %v1160
        %v1164 = vmul.f32 %v1142, %v1160
        %v1165 = vmul.f32 %v1143, %v1160
        %v1166 = vmul.f32 %v1144, %v1160
        %v1167 = vmul.f32 %v1145, %v1160
        %v1168 = vmul.f32 %v1146, %v1160
        %v1169 = vmul.f32 %v1147, %v1160
        %v1170 = vmul.f32 %v1148, %v1160
        %v1171 = vmul.f32 %v1149, %v1160
        %v1172 = vmul.f32 %v1150, %v1160
        %v1173 = vmul.f32 %v1151, %v1160
        %v1174 = vmul.f32 %v1152, %v1160
        %v1175 = vmul.f32 %v1153, %v1160
        %v1176 = vmul.f32 %v1154, %v1160
        %v1177 = vld [vmem:[%s4] sm:$0x1]
        %v1179 = vlaneseq
        %v1180 = vshrl.u32 %v1179, 7
        %v1181 = vsub.s32 0, %v1180
        %v1182 = vrot.slane %v1177, %v1181
        %v1184 = vadd.f32 %v1162, %v1182
        %v1185 = vadd.f32 %v1163, %v1182
        %v1186 = vadd.f32 %v1164, %v1182
        %v1187 = vadd.f32 %v1165, %v1182
        %v1188 = vadd.f32 %v1166, %v1182
        %v1189 = vadd.f32 %v1167, %v1182
        %v1190 = vadd.f32 %v1168, %v1182
        %v1191 = vadd.f32 %v1169, %v1182
        %v1192 = vadd.f32 %v1170, %v1182
        %v1193 = vadd.f32 %v1171, %v1182
        %v1194 = vadd.f32 %v1172, %v1182
        %v1195 = vadd.f32 %v1173, %v1182
        %v1196 = vadd.f32 %v1174, %v1182
        %v1197 = vadd.f32 %v1175, %v1182
        %v1198 = vadd.f32 %v1176, %v1182
        %vm1199 = vcmask 392192
        %1200 = vst.msk [vmem:[#allocation2] sm:$0xff] %vm1199, 0.0
        %1201 = vst.msk [vmem:[#allocation2 + $0x8] sm:$0xff] %vm1199, 0.0
        %1202 = vst.msk [vmem:[#allocation2 + $0x10] sm:$0xff] %vm1199, 0.0
        %1203 = vst.msk [vmem:[#allocation2 + $0x18] sm:$0xff] %vm1199, 0.0
        %1204 = vst.msk [vmem:[#allocation2 + $0x20] sm:$0xff] %vm1199, 0.0
        %1205 = vst.msk [vmem:[#allocation2 + $0x28] sm:$0xff] %vm1199, 0.0
        %1206 = vst.msk [vmem:[#allocation2 + $0x30] sm:$0xff] %vm1199, 0.0
        %1207 = vst.msk [vmem:[#allocation2 + $0x38] sm:$0xff] %vm1199, 0.0
        %1208 = vst.msk [vmem:[#allocation2 + $0x40] sm:$0xff] %vm1199, 0.0
        %1209 = vst.msk [vmem:[#allocation2 + $0x48] sm:$0xff] %vm1199, 0.0
        %1210 = vst.msk [vmem:[#allocation2 + $0x50] sm:$0xff] %vm1199, 0.0
        %1211 = vst.msk [vmem:[#allocation3] sm:$0xff] %vm1199, 0.0
        %1212 = vst.msk [vmem:[#allocation3 + $0x8] sm:$0xff] %vm1199, 0.0
        %1213 = vst.msk [vmem:[#allocation3 + $0x10] sm:$0xff] %vm1199, 0.0
        %1214 = vst.msk [vmem:[#allocation3 + $0x18] sm:$0xff] %vm1199, 0.0
        %1215 = vst.msk [vmem:[#allocation3 + $0x20] sm:$0xff] %vm1199, 0.0
        %1216 = vst.msk [vmem:[#allocation3 + $0x28] sm:$0xff] %vm1199, 0.0
        %1217 = vst.msk [vmem:[#allocation3 + $0x30] sm:$0xff] %vm1199, 0.0
        %1218 = vst.msk [vmem:[#allocation3 + $0x38] sm:$0xff] %vm1199, 0.0
        %1219 = vst.msk [vmem:[#allocation3 + $0x40] sm:$0xff] %vm1199, 0.0
        %1220 = vst.msk [vmem:[#allocation3 + $0x48] sm:$0xff] %vm1199, 0.0
        %1221 = vst.msk [vmem:[#allocation3 + $0x50] sm:$0xff] %vm1199, 0.0
        %1222 = vst.msk [vmem:[#allocation2 + $0xe] sm:$0xff] %vm1199, %v1184
        %vm1223 = vcmask 388096
        %1224 = vst.msk [vmem:[#allocation2 + $0x16] sm:$0xf] %vm1223, %v1185
        %vm1225 = vcmask 392196
        %1226 = vst.msk [vmem:[#allocation3 + $0xa] sm:$0xf0] %vm1225, %v1185
        %1227 = vst.msk [vmem:[#allocation3 + $0x12] sm:$0xff] %vm1199, %v1186
        %1228 = vst.msk [vmem:[#allocation2 + $0x1a] sm:$0xff] %vm1199, %v1187
        %1229 = vst.msk [vmem:[#allocation2 + $0x22] sm:$0xf] %vm1223, %v1188
        %1230 = vst.msk [vmem:[#allocation3 + $0x16] sm:$0xf0] %vm1225, %v1188
        %1231 = vst.msk [vmem:[#allocation3 + $0x1e] sm:$0xff] %vm1199, %v1189
        %1232 = vst.msk [vmem:[#allocation2 + $0x26] sm:$0xff] %vm1199, %v1190
        %1233 = vst.msk [vmem:[#allocation2 + $0x2e] sm:$0xf] %vm1223, %v1191
        %1234 = vst.msk [vmem:[#allocation3 + $0x22] sm:$0xf0] %vm1225, %v1191
        %1235 = vst.msk [vmem:[#allocation3 + $0x2a] sm:$0xff] %vm1199, %v1192
        %1236 = vst.msk [vmem:[#allocation2 + $0x32] sm:$0xff] %vm1199, %v1193
        %1237 = vst.msk [vmem:[#allocation2 + $0x3a] sm:$0xf] %vm1223, %v1194
        %1238 = vst.msk [vmem:[#allocation3 + $0x2e] sm:$0xf0] %vm1225, %v1194
        %1239 = vst.msk [vmem:[#allocation3 + $0x36] sm:$0xff] %vm1199, %v1195
        %1240 = vst.msk [vmem:[#allocation2 + $0x3e] sm:$0xff] %vm1199, %v1196
        %1241 = vst.msk [vmem:[#allocation2 + $0x46] sm:$0xf] %vm1223, %v1197
        %1242 = vst.msk [vmem:[#allocation3 + $0x3a] sm:$0xf0] %vm1225, %v1197
        %1243 = vst.msk [vmem:[#allocation3 + $0x42] sm:$0xff] %vm1199, %v1198
        %v1244 = vld [vmem:[#allocation2] sm:$0xff]
        %v1245 = vld [vmem:[#allocation2 + $0x8] sm:$0xff]
        %v1246 = vld [vmem:[#allocation2 + $0x10] sm:$0xff]
        %v1247 = vld [vmem:[#allocation2 + $0x18] sm:$0xff]
        %v1248 = vld [vmem:[#allocation2 + $0x20] sm:$0xff]
        %v1249 = vld [vmem:[#allocation2 + $0x28] sm:$0xff]
        %v1250 = vld [vmem:[%s9] sm:$0xff]
        %v1251 = vld [vmem:[%s9 + $0x8] sm:$0xff]
        %v1252 = vld [vmem:[%s9 + $0x10] sm:$0xff]
        %v1253 = vld [vmem:[%s9 + $0x18] sm:$0xff]
        %v1254 = vld [vmem:[%s9 + $0x20] sm:$0xff]
        %v1255 = vld [vmem:[%s9 + $0x28] sm:$0xff]
        %1257 = vset.pattern.permute.xlu0 0
        %1258 = vperm.xlu0 %1257, %v1250
        %v1259 = vpop.permute.xlu0 %1258
        %1262 = vset.pattern.permute.xlu0 0
        %1263 = vperm.xlu0 %1262, %v1251
        %v1264 = vpop.permute.xlu0 %1263
        %1267 = vset.pattern.permute.xlu0 0
        %1268 = vperm.xlu0 %1267, %v1252
        %v1269 = vpop.permute.xlu0 %1268
        %1272 = vset.pattern.permute.xlu0 0
        %1273 = vperm.xlu0 %1272, %v1253
        %v1274 = vpop.permute.xlu0 %1273
        %1277 = vset.pattern.permute.xlu0 0
        %1278 = vperm.xlu0 %1277, %v1254
        %v1279 = vpop.permute.xlu0 %1278
        %1282 = vset.pattern.permute.xlu0 0
        %1283 = vperm.xlu0 %1282, %v1255
        %v1284 = vpop.permute.xlu0 %1283
        %v1286 = vmul.f32 %v1244, %v1259
        %v1287 = vmul.f32 %v1245, %v1264
        %v1288 = vmul.f32 %v1246, %v1269
        %v1289 = vmul.f32 %v1247, %v1274
        %v1290 = vmul.f32 %v1248, %v1279
        %v1291 = vmul.f32 %v1249, %v1284
        %v1292 = vpack.c.bf16 %v1287, %v1286
        %v1293 = vpack.c.bf16 %v1289, %v1288
        %v1294 = vpack.c.bf16 %v1291, %v1290
        %v1295 = vld [vmem:[%s5] sm:$0xf]
        %v1296 = vld [vmem:[%s5 + $0x4] sm:$0xf]
        %v1297 = vld [vmem:[%s5 + $0x8] sm:$0xf]
        %v1298 = vld [vmem:[%s5 + $0xc] sm:$0xf]
        %v1299 = vld [vmem:[%s5 + $0x10] sm:$0xf]
        %v1300 = vld [vmem:[%s5 + $0x14] sm:$0xf]
        %v1301 = vld [vmem:[#allocation2 + $0x1] sm:$0xff]
        %v1302 = vld [vmem:[#allocation2 + $0x9] sm:$0xff]
        %v1303 = vld [vmem:[#allocation2 + $0x11] sm:$0xff]
        %v1304 = vld [vmem:[#allocation2 + $0x19] sm:$0xff]
        %v1305 = vld [vmem:[#allocation2 + $0x21] sm:$0xff]
        %v1306 = vld [vmem:[#allocation2 + $0x29] sm:$0xff]
        %s1307 = scalar_lea.vmem %s9, 48
        %v1308 = vld [vmem:[%s1307] sm:$0xff]
        %v1309 = vld [vmem:[%s1307 + $0x8] sm:$0xff]
        %v1310 = vld [vmem:[%s1307 + $0x10] sm:$0xff]
        %v1311 = vld [vmem:[%s1307 + $0x18] sm:$0xff]
        %v1312 = vld [vmem:[%s1307 + $0x20] sm:$0xff]
        %v1313 = vld [vmem:[%s1307 + $0x28] sm:$0xff]
        %1315 = vset.pattern.permute.xlu0 0
        %1316 = vperm.xlu0 %1315, %v1308
        %v1317 = vpop.permute.xlu0 %1316
        %1320 = vset.pattern.permute.xlu0 0
        %1321 = vperm.xlu0 %1320, %v1309
        %v1322 = vpop.permute.xlu0 %1321
        %1325 = vset.pattern.permute.xlu0 0
        %1326 = vperm.xlu0 %1325, %v1310
        %v1327 = vpop.permute.xlu0 %1326
        %1330 = vset.pattern.permute.xlu0 0
        %1331 = vperm.xlu0 %1330, %v1311
        %v1332 = vpop.permute.xlu0 %1331
        %1335 = vset.pattern.permute.xlu0 0
        %1336 = vperm.xlu0 %1335, %v1312
        %v1337 = vpop.permute.xlu0 %1336
        %1340 = vset.pattern.permute.xlu0 0
        %1341 = vperm.xlu0 %1340, %v1313
        %v1342 = vpop.permute.xlu0 %1341
        %v1344 = vmul.f32 %v1301, %v1317
        %v1345 = vmul.f32 %v1302, %v1322
        %v1346 = vmul.f32 %v1303, %v1327
        %v1347 = vmul.f32 %v1304, %v1332
        %v1348 = vmul.f32 %v1305, %v1337
        %v1349 = vmul.f32 %v1306, %v1342
        %v1350 = vpack.c.bf16 %v1345, %v1344
        %v1351 = vpack.c.bf16 %v1347, %v1346
        %v1352 = vpack.c.bf16 %v1349, %v1348
        %s1353 = scalar_lea.vmem %s5, 24
        %v1354 = vld [vmem:[%s1353] sm:$0xf]
        %v1355 = vld [vmem:[%s1353 + $0x4] sm:$0xf]
        %v1356 = vld [vmem:[%s1353 + $0x8] sm:$0xf]
        %v1357 = vld [vmem:[%s1353 + $0xc] sm:$0xf]
        %v1358 = vld [vmem:[%s1353 + $0x10] sm:$0xf]
        %v1359 = vld [vmem:[%s1353 + $0x14] sm:$0xf]
        %v1366 = vunpack.c.l.b16 %v1354
        %v1367 = vunpack.c.l.b16 %v1355
        %v1368 = vunpack.c.l.b16 %v1356
        %v1369 = vunpack.c.l.b16 %v1357
        %v1370 = vunpack.c.l.b16 %v1358
        %v1371 = vunpack.c.l.b16 %v1359
        %v1372 = vpack.c.b16 %v1367, %v1366
        %v1373 = vpack.c.b16 %v1369, %v1368
        %v1374 = vpack.c.b16 %v1371, %v1370
        %v1379 = vsel %vm1199, %v1350, 0
        %v1382 = vsel %vm1199, %v1351, 0
        %v1385 = vsel %vm1199, %v1352, 0
        %1387 = vmatprep.subr.bf16.mxu0 0
        %1388 = vmatpush1.bf16.msra.mxu0 0
        %1389 = vmatprep.subr.bf16.mxu0 0
        %1390 = vmatpush1.bf16.msra.mxu0 0
        %1391 = vmatprep.subr.bf16.mxu0 0
        %1392 = vmatpush1.bf16.msra.mxu0 0
        %1393 = vmatprep.subr.bf16.mxu0 0
        %1394 = vmatpush1.bf16.msra.mxu0 0
        %1395 = vmatprep.subr.bf16.mxu0 0
        %1396 = vmatpush1.bf16.msra.mxu0 0
        %1397 = vmatprep.subr.bf16.mxu0 0
        %1398 = vmatpush1.bf16.msra.mxu0 %v1374
        %1399 = vmatprep.subr.bf16.mxu0 0
        %1400 = vmatpush1.bf16.msra.mxu0 %v1373
        %1401 = vmatprep.subr.bf16.mxu0 0
        %1402 = vmatpush1.bf16.msra.mxu0 %v1372
        %1403 = vmatprep.subr.bf16.mxu0 0
        %1404 = vmatpush2.bf16.msra.mxu0 0
        %1405 = vmatprep.subr.bf16.mxu0 0
        %1406 = vmatpush2.bf16.msra.mxu0 0
        %1407 = vmatprep.subr.bf16.mxu0 0
        %1408 = vmatpush2.bf16.msra.mxu0 0
        %1409 = vmatprep.subr.bf16.mxu0 0
        %1410 = vmatpush2.bf16.msra.mxu0 0
        %1411 = vmatprep.subr.bf16.mxu0 0
        %1412 = vmatpush2.bf16.msra.mxu0 0
        %1413 = vmatprep.subr.bf16.mxu0 0
        %1414 = vmatpush2.bf16.msra.mxu0 0
        %1415 = vmatprep.subr.bf16.mxu0 0
        %1416 = vmatpush2.bf16.msra.mxu0 0
        %1417 = vmatprep.subr.bf16.mxu0 0
        %1418 = vmatpush2.bf16.msra.mxu0 0
        %1419 = vmatprep.mubr.bf16.mxu0 0
        %1420 = vmatmul.mubr.bf16.gmra.mxu0 %v1379
        %v1421 = vpop.f32.mrf.mxu0
        %v1422 = vadd.f32 0.0, %v1421
        %v1423 = vpop.f32.mrf.mxu0
        %v1424 = vpop.f32.mrf.mxu0
        %v1425 = vadd.f32 0.0, %v1424
        %v1426 = vpop.f32.mrf.mxu0
        %1427 = vmatprep.mubr.bf16.mxu0 0
        %1428 = vmatmul.mubr.bf16.gmra.mxu0 %v1382
        %v1429 = vpop.f32.mrf.mxu0
        %v1430 = vadd.f32 0.0, %v1429
        %v1431 = vpop.f32.mrf.mxu0
        %v1432 = vpop.f32.mrf.mxu0
        %v1433 = vadd.f32 0.0, %v1432
        %v1434 = vpop.f32.mrf.mxu0
        %1435 = vmatprep.mubr.bf16.mxu0 0
        %1436 = vmatmul.mubr.bf16.gmra.mxu0 %v1385
        %v1437 = vpop.f32.mrf.mxu0
        %v1438 = vadd.f32 0.0, %v1437
        %v1439 = vpop.f32.mrf.mxu0
        %v1440 = vpop.f32.mrf.mxu0
        %v1441 = vadd.f32 0.0, %v1440
        %v1442 = vpop.f32.mrf.mxu0
        %1443 = vdwg.mxu0
        %v1450 = vunpack.c.l.b16 %v1295
        %v1451 = vunpack.c.l.b16 %v1296
        %v1452 = vunpack.c.l.b16 %v1297
        %v1453 = vunpack.c.l.b16 %v1298
        %v1454 = vunpack.c.l.b16 %v1299
        %v1455 = vunpack.c.l.b16 %v1300
        %v1456 = vpack.c.b16 %v1451, %v1450
        %v1457 = vpack.c.b16 %v1453, %v1452
        %v1458 = vpack.c.b16 %v1455, %v1454
        %v1463 = vsel %vm1199, %v1292, 0
        %v1466 = vsel %vm1199, %v1293, 0
        %v1469 = vsel %vm1199, %v1294, 0
        %1471 = vmatprep.subr.bf16.mxu0 0
        %1472 = vmatpush1.bf16.msra.mxu0 0
        %1473 = vmatprep.subr.bf16.mxu0 0
        %1474 = vmatpush1.bf16.msra.mxu0 0
        %1475 = vmatprep.subr.bf16.mxu0 0
        %1476 = vmatpush1.bf16.msra.mxu0 0
        %1477 = vmatprep.subr.bf16.mxu0 0
        %1478 = vmatpush1.bf16.msra.mxu0 0
        %1479 = vmatprep.subr.bf16.mxu0 0
        %1480 = vmatpush1.bf16.msra.mxu0 0
        %1481 = vmatprep.subr.bf16.mxu0 0
        %1482 = vmatpush1.bf16.msra.mxu0 %v1458
        %1483 = vmatprep.subr.bf16.mxu0 0
        %1484 = vmatpush1.bf16.msra.mxu0 %v1457
        %1485 = vmatprep.subr.bf16.mxu0 0
        %1486 = vmatpush1.bf16.msra.mxu0 %v1456
        %1487 = vmatprep.subr.bf16.mxu0 0
        %1488 = vmatpush2.bf16.msra.mxu0 0
        %1489 = vmatprep.subr.bf16.mxu0 0
        %1490 = vmatpush2.bf16.msra.mxu0 0
        %1491 = vmatprep.subr.bf16.mxu0 0
        %1492 = vmatpush2.bf16.msra.mxu0 0
        %1493 = vmatprep.subr.bf16.mxu0 0
        %1494 = vmatpush2.bf16.msra.mxu0 0
        %1495 = vmatprep.subr.bf16.mxu0 0
        %1496 = vmatpush2.bf16.msra.mxu0 0
        %1497 = vmatprep.subr.bf16.mxu0 0
        %1498 = vmatpush2.bf16.msra.mxu0 0
        %1499 = vmatprep.subr.bf16.mxu0 0
        %1500 = vmatpush2.bf16.msra.mxu0 0
        %1501 = vmatprep.subr.bf16.mxu0 0
        %1502 = vmatpush2.bf16.msra.mxu0 0
        %1503 = vmatprep.mubr.bf16.mxu0 0
        %1504 = vmatmul.mubr.bf16.gmra.mxu0 %v1463
        %v1505 = vpop.f32.mrf.mxu0
        %v1506 = vadd.f32 %v1422, %v1505
        %v1507 = vpop.f32.mrf.mxu0
        %v1508 = vpop.f32.mrf.mxu0
        %v1509 = vadd.f32 %v1425, %v1508
        %v1510 = vpop.f32.mrf.mxu0
        %1511 = vmatprep.mubr.bf16.mxu0 0
        %1512 = vmatmul.mubr.bf16.gmra.mxu0 %v1466
        %v1513 = vpop.f32.mrf.mxu0
        %v1514 = vadd.f32 %v1430, %v1513
        %v1515 = vpop.f32.mrf.mxu0
        %v1516 = vpop.f32.mrf.mxu0
        %v1517 = vadd.f32 %v1433, %v1516
        %v1518 = vpop.f32.mrf.mxu0
        %1519 = vmatprep.mubr.bf16.mxu0 0
        %1520 = vmatmul.mubr.bf16.gmra.mxu0 %v1469
        %v1521 = vpop.f32.mrf.mxu0
        %v1522 = vadd.f32 %v1438, %v1521
        %v1523 = vpop.f32.mrf.mxu0
        %v1524 = vpop.f32.mrf.mxu0
        %v1525 = vadd.f32 %v1441, %v1524
        %v1526 = vpop.f32.mrf.mxu0
        %1527 = vdwg.mxu0
        %v1528 = vld [vmem:[#allocation2 + $0x2] sm:$0xff]
        %v1529 = vld [vmem:[#allocation2 + $0xa] sm:$0xff]
        %v1530 = vld [vmem:[#allocation2 + $0x12] sm:$0xff]
        %v1531 = vld [vmem:[#allocation2 + $0x1a] sm:$0xff]
        %v1532 = vld [vmem:[#allocation2 + $0x22] sm:$0xff]
        %v1533 = vld [vmem:[#allocation2 + $0x2a] sm:$0xff]
        %s1534 = scalar_lea.vmem %s9, 96
        %v1535 = vld [vmem:[%s1534] sm:$0xff]
        %v1536 = vld [vmem:[%s1534 + $0x8] sm:$0xff]
        %v1537 = vld [vmem:[%s1534 + $0x10] sm:$0xff]
        %v1538 = vld [vmem:[%s1534 + $0x18] sm:$0xff]
        %v1539 = vld [vmem:[%s1534 + $0x20] sm:$0xff]
        %v1540 = vld [vmem:[%s1534 + $0x28] sm:$0xff]
        %1542 = vset.pattern.permute.xlu0 0
        %1543 = vperm.xlu0 %1542, %v1535
        %v1544 = vpop.permute.xlu0 %1543
        %1547 = vset.pattern.permute.xlu0 0
        %1548 = vperm.xlu0 %1547, %v1536
        %v1549 = vpop.permute.xlu0 %1548
        %1552 = vset.pattern.permute.xlu0 0
        %1553 = vperm.xlu0 %1552, %v1537
        %v1554 = vpop.permute.xlu0 %1553
        %1557 = vset.pattern.permute.xlu0 0
        %1558 = vperm.xlu0 %1557, %v1538
        %v1559 = vpop.permute.xlu0 %1558
        %1562 = vset.pattern.permute.xlu0 0
        %1563 = vperm.xlu0 %1562, %v1539
        %v1564 = vpop.permute.xlu0 %1563
        %1567 = vset.pattern.permute.xlu0 0
        %1568 = vperm.xlu0 %1567, %v1540
        %v1569 = vpop.permute.xlu0 %1568
        %v1571 = vmul.f32 %v1528, %v1544
        %v1572 = vmul.f32 %v1529, %v1549
        %v1573 = vmul.f32 %v1530, %v1554
        %v1574 = vmul.f32 %v1531, %v1559
        %v1575 = vmul.f32 %v1532, %v1564
        %v1576 = vmul.f32 %v1533, %v1569
        %v1577 = vpack.c.bf16 %v1572, %v1571
        %v1578 = vpack.c.bf16 %v1574, %v1573
        %v1579 = vpack.c.bf16 %v1576, %v1575
        %s1580 = scalar_lea.vmem %s5, 48
        %v1581 = vld [vmem:[%s1580] sm:$0xf]
        %v1582 = vld [vmem:[%s1580 + $0x4] sm:$0xf]
        %v1583 = vld [vmem:[%s1580 + $0x8] sm:$0xf]
        %v1584 = vld [vmem:[%s1580 + $0xc] sm:$0xf]
        %v1585 = vld [vmem:[%s1580 + $0x10] sm:$0xf]
        %v1586 = vld [vmem:[%s1580 + $0x14] sm:$0xf]
        %v1593 = vunpack.c.l.b16 %v1581
        %v1594 = vunpack.c.l.b16 %v1582
        %v1595 = vunpack.c.l.b16 %v1583
        %v1596 = vunpack.c.l.b16 %v1584
        %v1597 = vunpack.c.l.b16 %v1585
        %v1598 = vunpack.c.l.b16 %v1586
        %v1599 = vpack.c.b16 %v1594, %v1593
        %v1600 = vpack.c.b16 %v1596, %v1595
        %v1601 = vpack.c.b16 %v1598, %v1597
        %v1606 = vsel %vm1199, %v1577, 0
        %v1609 = vsel %vm1199, %v1578, 0
        %v1612 = vsel %vm1199, %v1579, 0
        %1614 = vmatprep.subr.bf16.mxu0 0
        %1615 = vmatpush1.bf16.msra.mxu0 0
        %1616 = vmatprep.subr.bf16.mxu0 0
        %1617 = vmatpush1.bf16.msra.mxu0 0
        %1618 = vmatprep.subr.bf16.mxu0 0
        %1619 = vmatpush1.bf16.msra.mxu0 0
        %1620 = vmatprep.subr.bf16.mxu0 0
        %1621 = vmatpush1.bf16.msra.mxu0 0
        %1622 = vmatprep.subr.bf16.mxu0 0
        %1623 = vmatpush1.bf16.msra.mxu0 0
        %1624 = vmatprep.subr.bf16.mxu0 0
        %1625 = vmatpush1.bf16.msra.mxu0 %v1601
        %1626 = vmatprep.subr.bf16.mxu0 0
        %1627 = vmatpush1.bf16.msra.mxu0 %v1600
        %1628 = vmatprep.subr.bf16.mxu0 0
        %1629 = vmatpush1.bf16.msra.mxu0 %v1599
        %1630 = vmatprep.subr.bf16.mxu0 0
        %1631 = vmatpush2.bf16.msra.mxu0 0
        %1632 = vmatprep.subr.bf16.mxu0 0
        %1633 = vmatpush2.bf16.msra.mxu0 0
        %1634 = vmatprep.subr.bf16.mxu0 0
        %1635 = vmatpush2.bf16.msra.mxu0 0
        %1636 = vmatprep.subr.bf16.mxu0 0
        %1637 = vmatpush2.bf16.msra.mxu0 0
        %1638 = vmatprep.subr.bf16.mxu0 0
        %1639 = vmatpush2.bf16.msra.mxu0 0
        %1640 = vmatprep.subr.bf16.mxu0 0
        %1641 = vmatpush2.bf16.msra.mxu0 0
        %1642 = vmatprep.subr.bf16.mxu0 0
        %1643 = vmatpush2.bf16.msra.mxu0 0
        %1644 = vmatprep.subr.bf16.mxu0 0
        %1645 = vmatpush2.bf16.msra.mxu0 0
        %1646 = vmatprep.mubr.bf16.mxu0 0
        %1647 = vmatmul.mubr.bf16.gmra.mxu0 %v1606
        %v1648 = vpop.f32.mrf.mxu0
        %v1649 = vadd.f32 0.0, %v1648
        %v1650 = vpop.f32.mrf.mxu0
        %v1651 = vpop.f32.mrf.mxu0
        %v1652 = vadd.f32 0.0, %v1651
        %v1653 = vpop.f32.mrf.mxu0
        %1654 = vmatprep.mubr.bf16.mxu0 0
        %1655 = vmatmul.mubr.bf16.gmra.mxu0 %v1609
        %v1656 = vpop.f32.mrf.mxu0
        %v1657 = vadd.f32 0.0, %v1656
        %v1658 = vpop.f32.mrf.mxu0
        %v1659 = vpop.f32.mrf.mxu0
        %v1660 = vadd.f32 0.0, %v1659
        %v1661 = vpop.f32.mrf.mxu0
        %1662 = vmatprep.mubr.bf16.mxu0 0
        %1663 = vmatmul.mubr.bf16.gmra.mxu0 %v1612
        %v1664 = vpop.f32.mrf.mxu0
        %v1665 = vadd.f32 0.0, %v1664
        %v1666 = vpop.f32.mrf.mxu0
        %v1667 = vpop.f32.mrf.mxu0
        %v1668 = vadd.f32 0.0, %v1667
        %v1669 = vpop.f32.mrf.mxu0
        %1670 = vdwg.mxu0
        %v1671 = vadd.f32 %v1506, %v1649
        %v1672 = vadd.f32 %v1509, %v1652
        %v1673 = vadd.f32 %v1514, %v1657
        %v1674 = vadd.f32 %v1517, %v1660
        %v1675 = vadd.f32 %v1522, %v1665
        %v1676 = vadd.f32 %v1525, %v1668
        %v1677 = vld [vmem:[#allocation2 + $0x3] sm:$0xff]
        %v1678 = vld [vmem:[#allocation2 + $0xb] sm:$0xff]
        %v1679 = vld [vmem:[#allocation2 + $0x13] sm:$0xff]
        %v1680 = vld [vmem:[#allocation2 + $0x1b] sm:$0xff]
        %v1681 = vld [vmem:[#allocation2 + $0x23] sm:$0xff]
        %v1682 = vld [vmem:[#allocation2 + $0x2b] sm:$0xff]
        %s1683 = scalar_lea.vmem %s9, 144
        %v1684 = vld [vmem:[%s1683] sm:$0xff]
        %v1685 = vld [vmem:[%s1683 + $0x8] sm:$0xff]
        %v1686 = vld [vmem:[%s1683 + $0x10] sm:$0xff]
        %v1687 = vld [vmem:[%s1683 + $0x18] sm:$0xff]
        %v1688 = vld [vmem:[%s1683 + $0x20] sm:$0xff]
        %v1689 = vld [vmem:[%s1683 + $0x28] sm:$0xff]
        %1691 = vset.pattern.permute.xlu0 0
        %1692 = vperm.xlu0 %1691, %v1684
        %v1693 = vpop.permute.xlu0 %1692
        %1696 = vset.pattern.permute.xlu0 0
        %1697 = vperm.xlu0 %1696, %v1685
        %v1698 = vpop.permute.xlu0 %1697
        %1701 = vset.pattern.permute.xlu0 0
        %1702 = vperm.xlu0 %1701, %v1686
        %v1703 = vpop.permute.xlu0 %1702
        %1706 = vset.pattern.permute.xlu0 0
        %1707 = vperm.xlu0 %1706, %v1687
        %v1708 = vpop.permute.xlu0 %1707
        %1711 = vset.pattern.permute.xlu0 0
        %1712 = vperm.xlu0 %1711, %v1688
        %v1713 = vpop.permute.xlu0 %1712
        %1716 = vset.pattern.permute.xlu0 0
        %1717 = vperm.xlu0 %1716, %v1689
        %v1718 = vpop.permute.xlu0 %1717
        %v1720 = vmul.f32 %v1677, %v1693
        %v1721 = vmul.f32 %v1678, %v1698
        %v1722 = vmul.f32 %v1679, %v1703
        %v1723 = vmul.f32 %v1680, %v1708
        %v1724 = vmul.f32 %v1681, %v1713
        %v1725 = vmul.f32 %v1682, %v1718
        %v1726 = vpack.c.bf16 %v1721, %v1720
        %v1727 = vpack.c.bf16 %v1723, %v1722
        %v1728 = vpack.c.bf16 %v1725, %v1724
        %s1729 = scalar_lea.vmem %s5, 72
        %v1730 = vld [vmem:[%s1729] sm:$0xf]
        %v1731 = vld [vmem:[%s1729 + $0x4] sm:$0xf]
        %v1732 = vld [vmem:[%s1729 + $0x8] sm:$0xf]
        %v1733 = vld [vmem:[%s1729 + $0xc] sm:$0xf]
        %v1734 = vld [vmem:[%s1729 + $0x10] sm:$0xf]
        %v1735 = vld [vmem:[%s1729 + $0x14] sm:$0xf]
        %v1742 = vunpack.c.l.b16 %v1730
        %v1743 = vunpack.c.l.b16 %v1731
        %v1744 = vunpack.c.l.b16 %v1732
        %v1745 = vunpack.c.l.b16 %v1733
        %v1746 = vunpack.c.l.b16 %v1734
        %v1747 = vunpack.c.l.b16 %v1735
        %v1748 = vpack.c.b16 %v1743, %v1742
        %v1749 = vpack.c.b16 %v1745, %v1744
        %v1750 = vpack.c.b16 %v1747, %v1746
        %v1755 = vsel %vm1199, %v1726, 0
        %v1758 = vsel %vm1199, %v1727, 0
        %v1761 = vsel %vm1199, %v1728, 0
        %1763 = vmatprep.subr.bf16.mxu0 0
        %1764 = vmatpush1.bf16.msra.mxu0 0
        %1765 = vmatprep.subr.bf16.mxu0 0
        %1766 = vmatpush1.bf16.msra.mxu0 0
        %1767 = vmatprep.subr.bf16.mxu0 0
        %1768 = vmatpush1.bf16.msra.mxu0 0
        %1769 = vmatprep.subr.bf16.mxu0 0
        %1770 = vmatpush1.bf16.msra.mxu0 0
        %1771 = vmatprep.subr.bf16.mxu0 0
        %1772 = vmatpush1.bf16.msra.mxu0 0
        %1773 = vmatprep.subr.bf16.mxu0 0
        %1774 = vmatpush1.bf16.msra.mxu0 %v1750
        %1775 = vmatprep.subr.bf16.mxu0 0
        %1776 = vmatpush1.bf16.msra.mxu0 %v1749
        %1777 = vmatprep.subr.bf16.mxu0 0
        %1778 = vmatpush1.bf16.msra.mxu0 %v1748
        %1779 = vmatprep.subr.bf16.mxu0 0
        %1780 = vmatpush2.bf16.msra.mxu0 0
        %1781 = vmatprep.subr.bf16.mxu0 0
        %1782 = vmatpush2.bf16.msra.mxu0 0
        %1783 = vmatprep.subr.bf16.mxu0 0
        %1784 = vmatpush2.bf16.msra.mxu0 0
        %1785 = vmatprep.subr.bf16.mxu0 0
        %1786 = vmatpush2.bf16.msra.mxu0 0
        %1787 = vmatprep.subr.bf16.mxu0 0
        %1788 = vmatpush2.bf16.msra.mxu0 0
        %1789 = vmatprep.subr.bf16.mxu0 0
        %1790 = vmatpush2.bf16.msra.mxu0 0
        %1791 = vmatprep.subr.bf16.mxu0 0
        %1792 = vmatpush2.bf16.msra.mxu0 0
        %1793 = vmatprep.subr.bf16.mxu0 0
        %1794 = vmatpush2.bf16.msra.mxu0 0
        %1795 = vmatprep.mubr.bf16.mxu0 0
        %1796 = vmatmul.mubr.bf16.gmra.mxu0 %v1755
        %v1797 = vpop.f32.mrf.mxu0
        %v1798 = vadd.f32 0.0, %v1797
        %v1799 = vpop.f32.mrf.mxu0
        %v1800 = vpop.f32.mrf.mxu0
        %v1801 = vadd.f32 0.0, %v1800
        %v1802 = vpop.f32.mrf.mxu0
        %1803 = vmatprep.mubr.bf16.mxu0 0
        %1804 = vmatmul.mubr.bf16.gmra.mxu0 %v1758
        %v1805 = vpop.f32.mrf.mxu0
        %v1806 = vadd.f32 0.0, %v1805
        %v1807 = vpop.f32.mrf.mxu0
        %v1808 = vpop.f32.mrf.mxu0
        %v1809 = vadd.f32 0.0, %v1808
        %v1810 = vpop.f32.mrf.mxu0
        %1811 = vmatprep.mubr.bf16.mxu0 0
        %1812 = vmatmul.mubr.bf16.gmra.mxu0 %v1761
        %v1813 = vpop.f32.mrf.mxu0
        %v1814 = vadd.f32 0.0, %v1813
        %v1815 = vpop.f32.mrf.mxu0
        %v1816 = vpop.f32.mrf.mxu0
        %v1817 = vadd.f32 0.0, %v1816
        %v1818 = vpop.f32.mrf.mxu0
        %1819 = vdwg.mxu0
        %v1820 = vadd.f32 %v1671, %v1798
        %v1821 = vadd.f32 %v1672, %v1801
        %v1822 = vadd.f32 %v1673, %v1806
        %v1823 = vadd.f32 %v1674, %v1809
        %v1824 = vadd.f32 %v1675, %v1814
        %v1825 = vadd.f32 %v1676, %v1817
        %v1826 = vld [vmem:[#allocation2 + $0x4] sm:$0xff]
        %v1827 = vld [vmem:[#allocation2 + $0xc] sm:$0xff]
        %v1828 = vld [vmem:[#allocation2 + $0x14] sm:$0xff]
        %v1829 = vld [vmem:[#allocation2 + $0x1c] sm:$0xff]
        %v1830 = vld [vmem:[#allocation2 + $0x24] sm:$0xff]
        %v1831 = vld [vmem:[#allocation2 + $0x2c] sm:$0xff]
        %s1832 = scalar_lea.vmem %s9, 192
        %v1833 = vld [vmem:[%s1832] sm:$0xff]
        %v1834 = vld [vmem:[%s1832 + $0x8] sm:$0xff]
        %v1835 = vld [vmem:[%s1832 + $0x10] sm:$0xff]
        %v1836 = vld [vmem:[%s1832 + $0x18] sm:$0xff]
        %v1837 = vld [vmem:[%s1832 + $0x20] sm:$0xff]
        %v1838 = vld [vmem:[%s1832 + $0x28] sm:$0xff]
        %1840 = vset.pattern.permute.xlu0 0
        %1841 = vperm.xlu0 %1840, %v1833
        %v1842 = vpop.permute.xlu0 %1841
        %1845 = vset.pattern.permute.xlu0 0
        %1846 = vperm.xlu0 %1845, %v1834
        %v1847 = vpop.permute.xlu0 %1846
        %1850 = vset.pattern.permute.xlu0 0
        %1851 = vperm.xlu0 %1850, %v1835
        %v1852 = vpop.permute.xlu0 %1851
        %1855 = vset.pattern.permute.xlu0 0
        %1856 = vperm.xlu0 %1855, %v1836
        %v1857 = vpop.permute.xlu0 %1856
        %1860 = vset.pattern.permute.xlu0 0
        %1861 = vperm.xlu0 %1860, %v1837
        %v1862 = vpop.permute.xlu0 %1861
        %1865 = vset.pattern.permute.xlu0 0
        %1866 = vperm.xlu0 %1865, %v1838
        %v1867 = vpop.permute.xlu0 %1866
        %v1869 = vmul.f32 %v1826, %v1842
        %v1870 = vmul.f32 %v1827, %v1847
        %v1871 = vmul.f32 %v1828, %v1852
        %v1872 = vmul.f32 %v1829, %v1857
        %v1873 = vmul.f32 %v1830, %v1862
        %v1874 = vmul.f32 %v1831, %v1867
        %v1875 = vpack.c.bf16 %v1870, %v1869
        %v1876 = vpack.c.bf16 %v1872, %v1871
        %v1877 = vpack.c.bf16 %v1874, %v1873
        %s1878 = scalar_lea.vmem %s5, 96
        %v1879 = vld [vmem:[%s1878] sm:$0xf]
        %v1880 = vld [vmem:[%s1878 + $0x4] sm:$0xf]
        %v1881 = vld [vmem:[%s1878 + $0x8] sm:$0xf]
        %v1882 = vld [vmem:[%s1878 + $0xc] sm:$0xf]
        %v1883 = vld [vmem:[%s1878 + $0x10] sm:$0xf]
        %v1884 = vld [vmem:[%s1878 + $0x14] sm:$0xf]
        %v1891 = vunpack.c.l.b16 %v1879
        %v1892 = vunpack.c.l.b16 %v1880
        %v1893 = vunpack.c.l.b16 %v1881
        %v1894 = vunpack.c.l.b16 %v1882
        %v1895 = vunpack.c.l.b16 %v1883
        %v1896 = vunpack.c.l.b16 %v1884
        %v1897 = vpack.c.b16 %v1892, %v1891
        %v1898 = vpack.c.b16 %v1894, %v1893
        %v1899 = vpack.c.b16 %v1896, %v1895
        %v1904 = vsel %vm1199, %v1875, 0
        %v1907 = vsel %vm1199, %v1876, 0
        %v1910 = vsel %vm1199, %v1877, 0
        %1912 = vmatprep.subr.bf16.mxu0 0
        %1913 = vmatpush1.bf16.msra.mxu0 0
        %1914 = vmatprep.subr.bf16.mxu0 0
        %1915 = vmatpush1.bf16.msra.mxu0 0
        %1916 = vmatprep.subr.bf16.mxu0 0
        %1917 = vmatpush1.bf16.msra.mxu0 0
        %1918 = vmatprep.subr.bf16.mxu0 0
        %1919 = vmatpush1.bf16.msra.mxu0 0
        %1920 = vmatprep.subr.bf16.mxu0 0
        %1921 = vmatpush1.bf16.msra.mxu0 0
        %1922 = vmatprep.subr.bf16.mxu0 0
        %1923 = vmatpush1.bf16.msra.mxu0 %v1899
        %1924 = vmatprep.subr.bf16.mxu0 0
        %1925 = vmatpush1.bf16.msra.mxu0 %v1898
        %1926 = vmatprep.subr.bf16.mxu0 0
        %1927 = vmatpush1.bf16.msra.mxu0 %v1897
        %1928 = vmatprep.subr.bf16.mxu0 0
        %1929 = vmatpush2.bf16.msra.mxu0 0
        %1930 = vmatprep.subr.bf16.mxu0 0
        %1931 = vmatpush2.bf16.msra.mxu0 0
        %1932 = vmatprep.subr.bf16.mxu0 0
        %1933 = vmatpush2.bf16.msra.mxu0 0
        %1934 = vmatprep.subr.bf16.mxu0 0
        %1935 = vmatpush2.bf16.msra.mxu0 0
        %1936 = vmatprep.subr.bf16.mxu0 0
        %1937 = vmatpush2.bf16.msra.mxu0 0
        %1938 = vmatprep.subr.bf16.mxu0 0
        %1939 = vmatpush2.bf16.msra.mxu0 0
        %1940 = vmatprep.subr.bf16.mxu0 0
        %1941 = vmatpush2.bf16.msra.mxu0 0
        %1942 = vmatprep.subr.bf16.mxu0 0
        %1943 = vmatpush2.bf16.msra.mxu0 0
        %1944 = vmatprep.mubr.bf16.mxu0 0
        %1945 = vmatmul.mubr.bf16.gmra.mxu0 %v1904
        %v1946 = vpop.f32.mrf.mxu0
        %v1947 = vadd.f32 0.0, %v1946
        %v1948 = vpop.f32.mrf.mxu0
        %v1949 = vpop.f32.mrf.mxu0
        %v1950 = vadd.f32 0.0, %v1949
        %v1951 = vpop.f32.mrf.mxu0
        %1952 = vmatprep.mubr.bf16.mxu0 0
        %1953 = vmatmul.mubr.bf16.gmra.mxu0 %v1907
        %v1954 = vpop.f32.mrf.mxu0
        %v1955 = vadd.f32 0.0, %v1954
        %v1956 = vpop.f32.mrf.mxu0
        %v1957 = vpop.f32.mrf.mxu0
        %v1958 = vadd.f32 0.0, %v1957
        %v1959 = vpop.f32.mrf.mxu0
        %1960 = vmatprep.mubr.bf16.mxu0 0
        %1961 = vmatmul.mubr.bf16.gmra.mxu0 %v1910
        %v1962 = vpop.f32.mrf.mxu0
        %v1963 = vadd.f32 0.0, %v1962
        %v1964 = vpop.f32.mrf.mxu0
        %v1965 = vpop.f32.mrf.mxu0
        %v1966 = vadd.f32 0.0, %v1965
        %v1967 = vpop.f32.mrf.mxu0
        %1968 = vdwg.mxu0
        %v1969 = vadd.f32 %v1820, %v1947
        %v1970 = vadd.f32 %v1821, %v1950
        %v1971 = vadd.f32 %v1822, %v1955
        %v1972 = vadd.f32 %v1823, %v1958
        %v1973 = vadd.f32 %v1824, %v1963
        %v1974 = vadd.f32 %v1825, %v1966
        %v1975 = vld [vmem:[#allocation3] sm:$0xff]
        %v1976 = vld [vmem:[#allocation3 + $0x8] sm:$0xff]
        %v1977 = vld [vmem:[#allocation3 + $0x10] sm:$0xff]
        %v1978 = vld [vmem:[#allocation3 + $0x18] sm:$0xff]
        %v1979 = vld [vmem:[#allocation3 + $0x20] sm:$0xff]
        %v1980 = vld [vmem:[#allocation3 + $0x28] sm:$0xff]
        %v1981 = vmul.f32 %v1975, %v1259
        %v1982 = vmul.f32 %v1976, %v1264
        %v1983 = vmul.f32 %v1977, %v1269
        %v1984 = vmul.f32 %v1978, %v1274
        %v1985 = vmul.f32 %v1979, %v1279
        %v1986 = vmul.f32 %v1980, %v1284
        %v1987 = vpack.c.bf16 %v1982, %v1981
        %v1988 = vpack.c.bf16 %v1984, %v1983
        %v1989 = vpack.c.bf16 %v1986, %v1985
        %s1990 = scalar_lea.vmem %s5, 120
        %v1991 = vld [vmem:[%s1990] sm:$0xf]
        %v1992 = vld [vmem:[%s1990 + $0x4] sm:$0xf]
        %v1993 = vld [vmem:[%s1990 + $0x8] sm:$0xf]
        %v1994 = vld [vmem:[%s1990 + $0xc] sm:$0xf]
        %v1995 = vld [vmem:[%s1990 + $0x10] sm:$0xf]
        %v1996 = vld [vmem:[%s1990 + $0x14] sm:$0xf]
        %v2003 = vunpack.c.l.b16 %v1991
        %v2004 = vunpack.c.l.b16 %v1992
        %v2005 = vunpack.c.l.b16 %v1993
        %v2006 = vunpack.c.l.b16 %v1994
        %v2007 = vunpack.c.l.b16 %v1995
        %v2008 = vunpack.c.l.b16 %v1996
        %v2009 = vpack.c.b16 %v2004, %v2003
        %v2010 = vpack.c.b16 %v2006, %v2005
        %v2011 = vpack.c.b16 %v2008, %v2007
        %v2016 = vsel %vm1199, %v1987, 0
        %v2019 = vsel %vm1199, %v1988, 0
        %v2022 = vsel %vm1199, %v1989, 0
        %2024 = vmatprep.subr.bf16.mxu0 0
        %2025 = vmatpush1.bf16.msra.mxu0 0
        %2026 = vmatprep.subr.bf16.mxu0 0
        %2027 = vmatpush1.bf16.msra.mxu0 0
        %2028 = vmatprep.subr.bf16.mxu0 0
        %2029 = vmatpush1.bf16.msra.mxu0 0
        %2030 = vmatprep.subr.bf16.mxu0 0
        %2031 = vmatpush1.bf16.msra.mxu0 0
        %2032 = vmatprep.subr.bf16.mxu0 0
        %2033 = vmatpush1.bf16.msra.mxu0 0
        %2034 = vmatprep.subr.bf16.mxu0 0
        %2035 = vmatpush1.bf16.msra.mxu0 %v2011
        %2036 = vmatprep.subr.bf16.mxu0 0
        %2037 = vmatpush1.bf16.msra.mxu0 %v2010
        %2038 = vmatprep.subr.bf16.mxu0 0
        %2039 = vmatpush1.bf16.msra.mxu0 %v2009
        %2040 = vmatprep.subr.bf16.mxu0 0
        %2041 = vmatpush2.bf16.msra.mxu0 0
        %2042 = vmatprep.subr.bf16.mxu0 0
        %2043 = vmatpush2.bf16.msra.mxu0 0
        %2044 = vmatprep.subr.bf16.mxu0 0
        %2045 = vmatpush2.bf16.msra.mxu0 0
        %2046 = vmatprep.subr.bf16.mxu0 0
        %2047 = vmatpush2.bf16.msra.mxu0 0
        %2048 = vmatprep.subr.bf16.mxu0 0
        %2049 = vmatpush2.bf16.msra.mxu0 0
        %2050 = vmatprep.subr.bf16.mxu0 0
        %2051 = vmatpush2.bf16.msra.mxu0 0
        %2052 = vmatprep.subr.bf16.mxu0 0
        %2053 = vmatpush2.bf16.msra.mxu0 0
        %2054 = vmatprep.subr.bf16.mxu0 0
        %2055 = vmatpush2.bf16.msra.mxu0 0
        %2056 = vmatprep.mubr.bf16.mxu0 0
        %2057 = vmatmul.mubr.bf16.gmra.mxu0 %v2016
        %v2058 = vpop.f32.mrf.mxu0
        %v2059 = vadd.f32 0.0, %v2058
        %v2060 = vpop.f32.mrf.mxu0
        %v2061 = vpop.f32.mrf.mxu0
        %v2062 = vadd.f32 0.0, %v2061
        %v2063 = vpop.f32.mrf.mxu0
        %2064 = vmatprep.mubr.bf16.mxu0 0
        %2065 = vmatmul.mubr.bf16.gmra.mxu0 %v2019
        %v2066 = vpop.f32.mrf.mxu0
        %v2067 = vadd.f32 0.0, %v2066
        %v2068 = vpop.f32.mrf.mxu0
        %v2069 = vpop.f32.mrf.mxu0
        %v2070 = vadd.f32 0.0, %v2069
        %v2071 = vpop.f32.mrf.mxu0
        %2072 = vmatprep.mubr.bf16.mxu0 0
        %2073 = vmatmul.mubr.bf16.gmra.mxu0 %v2022
        %v2074 = vpop.f32.mrf.mxu0
        %v2075 = vadd.f32 0.0, %v2074
        %v2076 = vpop.f32.mrf.mxu0
        %v2077 = vpop.f32.mrf.mxu0
        %v2078 = vadd.f32 0.0, %v2077
        %v2079 = vpop.f32.mrf.mxu0
        %2080 = vdwg.mxu0
        %v2081 = vadd.f32 %v1969, %v2059
        %v2082 = vadd.f32 %v1970, %v2062
        %v2083 = vadd.f32 %v1971, %v2067
        %v2084 = vadd.f32 %v1972, %v2070
        %v2085 = vadd.f32 %v1973, %v2075
        %v2086 = vadd.f32 %v1974, %v2078
        %v2087 = vld [vmem:[#allocation3 + $0x1] sm:$0xff]
        %v2088 = vld [vmem:[#allocation3 + $0x9] sm:$0xff]
        %v2089 = vld [vmem:[#allocation3 + $0x11] sm:$0xff]
        %v2090 = vld [vmem:[#allocation3 + $0x19] sm:$0xff]
        %v2091 = vld [vmem:[#allocation3 + $0x21] sm:$0xff]
        %v2092 = vld [vmem:[#allocation3 + $0x29] sm:$0xff]
        %v2093 = vmul.f32 %v2087, %v1317
        %v2094 = vmul.f32 %v2088, %v1322
        %v2095 = vmul.f32 %v2089, %v1327
        %v2096 = vmul.f32 %v2090, %v1332
        %v2097 = vmul.f32 %v2091, %v1337
        %v2098 = vmul.f32 %v2092, %v1342
        %v2099 = vpack.c.bf16 %v2094, %v2093
        %v2100 = vpack.c.bf16 %v2096, %v2095
        %v2101 = vpack.c.bf16 %v2098, %v2097
        %s2102 = scalar_lea.vmem %s5, 144
        %v2103 = vld [vmem:[%s2102] sm:$0xf]
        %v2104 = vld [vmem:[%s2102 + $0x4] sm:$0xf]
        %v2105 = vld [vmem:[%s2102 + $0x8] sm:$0xf]
        %v2106 = vld [vmem:[%s2102 + $0xc] sm:$0xf]
        %v2107 = vld [vmem:[%s2102 + $0x10] sm:$0xf]
        %v2108 = vld [vmem:[%s2102 + $0x14] sm:$0xf]
        %v2115 = vunpack.c.l.b16 %v2103
        %v2116 = vunpack.c.l.b16 %v2104
        %v2117 = vunpack.c.l.b16 %v2105
        %v2118 = vunpack.c.l.b16 %v2106
        %v2119 = vunpack.c.l.b16 %v2107
        %v2120 = vunpack.c.l.b16 %v2108
        %v2121 = vpack.c.b16 %v2116, %v2115
        %v2122 = vpack.c.b16 %v2118, %v2117
        %v2123 = vpack.c.b16 %v2120, %v2119
        %v2128 = vsel %vm1199, %v2099, 0
        %v2131 = vsel %vm1199, %v2100, 0
        %v2134 = vsel %vm1199, %v2101, 0
        %2136 = vmatprep.subr.bf16.mxu0 0
        %2137 = vmatpush1.bf16.msra.mxu0 0
        %2138 = vmatprep.subr.bf16.mxu0 0
        %2139 = vmatpush1.bf16.msra.mxu0 0
        %2140 = vmatprep.subr.bf16.mxu0 0
        %2141 = vmatpush1.bf16.msra.mxu0 0
        %2142 = vmatprep.subr.bf16.mxu0 0
        %2143 = vmatpush1.bf16.msra.mxu0 0
        %2144 = vmatprep.subr.bf16.mxu0 0
        %2145 = vmatpush1.bf16.msra.mxu0 0
        %2146 = vmatprep.subr.bf16.mxu0 0
        %2147 = vmatpush1.bf16.msra.mxu0 %v2123
        %2148 = vmatprep.subr.bf16.mxu0 0
        %2149 = vmatpush1.bf16.msra.mxu0 %v2122
        %2150 = vmatprep.subr.bf16.mxu0 0
        %2151 = vmatpush1.bf16.msra.mxu0 %v2121
        %2152 = vmatprep.subr.bf16.mxu0 0
        %2153 = vmatpush2.bf16.msra.mxu0 0
        %2154 = vmatprep.subr.bf16.mxu0 0
        %2155 = vmatpush2.bf16.msra.mxu0 0
        %2156 = vmatprep.subr.bf16.mxu0 0
        %2157 = vmatpush2.bf16.msra.mxu0 0
        %2158 = vmatprep.subr.bf16.mxu0 0
        %2159 = vmatpush2.bf16.msra.mxu0 0
        %2160 = vmatprep.subr.bf16.mxu0 0
        %2161 = vmatpush2.bf16.msra.mxu0 0
        %2162 = vmatprep.subr.bf16.mxu0 0
        %2163 = vmatpush2.bf16.msra.mxu0 0
        %2164 = vmatprep.subr.bf16.mxu0 0
        %2165 = vmatpush2.bf16.msra.mxu0 0
        %2166 = vmatprep.subr.bf16.mxu0 0
        %2167 = vmatpush2.bf16.msra.mxu0 0
        %2168 = vmatprep.mubr.bf16.mxu0 0
        %2169 = vmatmul.mubr.bf16.gmra.mxu0 %v2128
        %v2170 = vpop.f32.mrf.mxu0
        %v2171 = vadd.f32 0.0, %v2170
        %v2172 = vpop.f32.mrf.mxu0
        %v2173 = vpop.f32.mrf.mxu0
        %v2174 = vadd.f32 0.0, %v2173
        %v2175 = vpop.f32.mrf.mxu0
        %2176 = vmatprep.mubr.bf16.mxu0 0
        %2177 = vmatmul.mubr.bf16.gmra.mxu0 %v2131
        %v2178 = vpop.f32.mrf.mxu0
        %v2179 = vadd.f32 0.0, %v2178
        %v2180 = vpop.f32.mrf.mxu0
        %v2181 = vpop.f32.mrf.mxu0
        %v2182 = vadd.f32 0.0, %v2181
        %v2183 = vpop.f32.mrf.mxu0
        %2184 = vmatprep.mubr.bf16.mxu0 0
        %2185 = vmatmul.mubr.bf16.gmra.mxu0 %v2134
        %v2186 = vpop.f32.mrf.mxu0
        %v2187 = vadd.f32 0.0, %v2186
        %v2188 = vpop.f32.mrf.mxu0
        %v2189 = vpop.f32.mrf.mxu0
        %v2190 = vadd.f32 0.0, %v2189
        %v2191 = vpop.f32.mrf.mxu0
        %2192 = vdwg.mxu0
        %v2193 = vadd.f32 %v2081, %v2171
        %v2194 = vadd.f32 %v2082, %v2174
        %v2195 = vadd.f32 %v2083, %v2179
        %v2196 = vadd.f32 %v2084, %v2182
        %v2197 = vadd.f32 %v2085, %v2187
        %v2198 = vadd.f32 %v2086, %v2190
        %v2199 = vld [vmem:[#allocation3 + $0x2] sm:$0xff]
        %v2200 = vld [vmem:[#allocation3 + $0xa] sm:$0xff]
        %v2201 = vld [vmem:[#allocation3 + $0x12] sm:$0xff]
        %v2202 = vld [vmem:[#allocation3 + $0x1a] sm:$0xff]
        %v2203 = vld [vmem:[#allocation3 + $0x22] sm:$0xff]
        %v2204 = vld [vmem:[#allocation3 + $0x2a] sm:$0xff]
        %v2205 = vmul.f32 %v2199, %v1544
        %v2206 = vmul.f32 %v2200, %v1549
        %v2207 = vmul.f32 %v2201, %v1554
        %v2208 = vmul.f32 %v2202, %v1559
        %v2209 = vmul.f32 %v2203, %v1564
        %v2210 = vmul.f32 %v2204, %v1569
        %v2211 = vpack.c.bf16 %v2206, %v2205
        %v2212 = vpack.c.bf16 %v2208, %v2207
        %v2213 = vpack.c.bf16 %v2210, %v2209
        %s2214 = scalar_lea.vmem %s5, 168
        %v2215 = vld [vmem:[%s2214] sm:$0xf]
        %v2216 = vld [vmem:[%s2214 + $0x4] sm:$0xf]
        %v2217 = vld [vmem:[%s2214 + $0x8] sm:$0xf]
        %v2218 = vld [vmem:[%s2214 + $0xc] sm:$0xf]
        %v2219 = vld [vmem:[%s2214 + $0x10] sm:$0xf]
        %v2220 = vld [vmem:[%s2214 + $0x14] sm:$0xf]
        %v2227 = vunpack.c.l.b16 %v2215
        %v2228 = vunpack.c.l.b16 %v2216
        %v2229 = vunpack.c.l.b16 %v2217
        %v2230 = vunpack.c.l.b16 %v2218
        %v2231 = vunpack.c.l.b16 %v2219
        %v2232 = vunpack.c.l.b16 %v2220
        %v2233 = vpack.c.b16 %v2228, %v2227
        %v2234 = vpack.c.b16 %v2230, %v2229
        %v2235 = vpack.c.b16 %v2232, %v2231
        %v2240 = vsel %vm1199, %v2211, 0
        %v2243 = vsel %vm1199, %v2212, 0
        %v2246 = vsel %vm1199, %v2213, 0
        %2248 = vmatprep.subr.bf16.mxu0 0
        %2249 = vmatpush1.bf16.msra.mxu0 0
        %2250 = vmatprep.subr.bf16.mxu0 0
        %2251 = vmatpush1.bf16.msra.mxu0 0
        %2252 = vmatprep.subr.bf16.mxu0 0
        %2253 = vmatpush1.bf16.msra.mxu0 0
        %2254 = vmatprep.subr.bf16.mxu0 0
        %2255 = vmatpush1.bf16.msra.mxu0 0
        %2256 = vmatprep.subr.bf16.mxu0 0
        %2257 = vmatpush1.bf16.msra.mxu0 0
        %2258 = vmatprep.subr.bf16.mxu0 0
        %2259 = vmatpush1.bf16.msra.mxu0 %v2235
        %2260 = vmatprep.subr.bf16.mxu0 0
        %2261 = vmatpush1.bf16.msra.mxu0 %v2234
        %2262 = vmatprep.subr.bf16.mxu0 0
        %2263 = vmatpush1.bf16.msra.mxu0 %v2233
        %2264 = vmatprep.subr.bf16.mxu0 0
        %2265 = vmatpush2.bf16.msra.mxu0 0
        %2266 = vmatprep.subr.bf16.mxu0 0
        %2267 = vmatpush2.bf16.msra.mxu0 0
        %2268 = vmatprep.subr.bf16.mxu0 0
        %2269 = vmatpush2.bf16.msra.mxu0 0
        %2270 = vmatprep.subr.bf16.mxu0 0
        %2271 = vmatpush2.bf16.msra.mxu0 0
        %2272 = vmatprep.subr.bf16.mxu0 0
        %2273 = vmatpush2.bf16.msra.mxu0 0
        %2274 = vmatprep.subr.bf16.mxu0 0
        %2275 = vmatpush2.bf16.msra.mxu0 0
        %2276 = vmatprep.subr.bf16.mxu0 0
        %2277 = vmatpush2.bf16.msra.mxu0 0
        %2278 = vmatprep.subr.bf16.mxu0 0
        %2279 = vmatpush2.bf16.msra.mxu0 0
        %2280 = vmatprep.mubr.bf16.mxu0 0
        %2281 = vmatmul.mubr.bf16.gmra.mxu0 %v2240
        %v2282 = vpop.f32.mrf.mxu0
        %v2283 = vadd.f32 0.0, %v2282
        %v2284 = vpop.f32.mrf.mxu0
        %v2285 = vpop.f32.mrf.mxu0
        %v2286 = vadd.f32 0.0, %v2285
        %v2287 = vpop.f32.mrf.mxu0
        %2288 = vmatprep.mubr.bf16.mxu0 0
        %2289 = vmatmul.mubr.bf16.gmra.mxu0 %v2243
        %v2290 = vpop.f32.mrf.mxu0
        %v2291 = vadd.f32 0.0, %v2290
        %v2292 = vpop.f32.mrf.mxu0
        %v2293 = vpop.f32.mrf.mxu0
        %v2294 = vadd.f32 0.0, %v2293
        %v2295 = vpop.f32.mrf.mxu0
        %2296 = vmatprep.mubr.bf16.mxu0 0
        %2297 = vmatmul.mubr.bf16.gmra.mxu0 %v2246
        %v2298 = vpop.f32.mrf.mxu0
        %v2299 = vadd.f32 0.0, %v2298
        %v2300 = vpop.f32.mrf.mxu0
        %v2301 = vpop.f32.mrf.mxu0
        %v2302 = vadd.f32 0.0, %v2301
        %v2303 = vpop.f32.mrf.mxu0
        %2304 = vdwg.mxu0
        %v2305 = vadd.f32 %v2193, %v2283
        %v2306 = vadd.f32 %v2194, %v2286
        %v2307 = vadd.f32 %v2195, %v2291
        %v2308 = vadd.f32 %v2196, %v2294
        %v2309 = vadd.f32 %v2197, %v2299
        %v2310 = vadd.f32 %v2198, %v2302
        %v2311 = vld [vmem:[#allocation3 + $0x3] sm:$0xff]
        %v2312 = vld [vmem:[#allocation3 + $0xb] sm:$0xff]
        %v2313 = vld [vmem:[#allocation3 + $0x13] sm:$0xff]
        %v2314 = vld [vmem:[#allocation3 + $0x1b] sm:$0xff]
        %v2315 = vld [vmem:[#allocation3 + $0x23] sm:$0xff]
        %v2316 = vld [vmem:[#allocation3 + $0x2b] sm:$0xff]
        %v2317 = vmul.f32 %v2311, %v1693
        %v2318 = vmul.f32 %v2312, %v1698
        %v2319 = vmul.f32 %v2313, %v1703
        %v2320 = vmul.f32 %v2314, %v1708
        %v2321 = vmul.f32 %v2315, %v1713
        %v2322 = vmul.f32 %v2316, %v1718
        %v2323 = vpack.c.bf16 %v2318, %v2317
        %v2324 = vpack.c.bf16 %v2320, %v2319
        %v2325 = vpack.c.bf16 %v2322, %v2321
        %s2326 = scalar_lea.vmem %s5, 192
        %v2327 = vld [vmem:[%s2326] sm:$0xf]
        %v2328 = vld [vmem:[%s2326 + $0x4] sm:$0xf]
        %v2329 = vld [vmem:[%s2326 + $0x8] sm:$0xf]
        %v2330 = vld [vmem:[%s2326 + $0xc] sm:$0xf]
        %v2331 = vld [vmem:[%s2326 + $0x10] sm:$0xf]
        %v2332 = vld [vmem:[%s2326 + $0x14] sm:$0xf]
        %v2339 = vunpack.c.l.b16 %v2327
        %v2340 = vunpack.c.l.b16 %v2328
        %v2341 = vunpack.c.l.b16 %v2329
        %v2342 = vunpack.c.l.b16 %v2330
        %v2343 = vunpack.c.l.b16 %v2331
        %v2344 = vunpack.c.l.b16 %v2332
        %v2345 = vpack.c.b16 %v2340, %v2339
        %v2346 = vpack.c.b16 %v2342, %v2341
        %v2347 = vpack.c.b16 %v2344, %v2343
        %v2352 = vsel %vm1199, %v2323, 0
        %v2355 = vsel %vm1199, %v2324, 0
        %v2358 = vsel %vm1199, %v2325, 0
        %2360 = vmatprep.subr.bf16.mxu0 0
        %2361 = vmatpush1.bf16.msra.mxu0 0
        %2362 = vmatprep.subr.bf16.mxu0 0
        %2363 = vmatpush1.bf16.msra.mxu0 0
        %2364 = vmatprep.subr.bf16.mxu0 0
        %2365 = vmatpush1.bf16.msra.mxu0 0
        %2366 = vmatprep.subr.bf16.mxu0 0
        %2367 = vmatpush1.bf16.msra.mxu0 0
        %2368 = vmatprep.subr.bf16.mxu0 0
        %2369 = vmatpush1.bf16.msra.mxu0 0
        %2370 = vmatprep.subr.bf16.mxu0 0
        %2371 = vmatpush1.bf16.msra.mxu0 %v2347
        %2372 = vmatprep.subr.bf16.mxu0 0
        %2373 = vmatpush1.bf16.msra.mxu0 %v2346
        %2374 = vmatprep.subr.bf16.mxu0 0
        %2375 = vmatpush1.bf16.msra.mxu0 %v2345
        %2376 = vmatprep.subr.bf16.mxu0 0
        %2377 = vmatpush2.bf16.msra.mxu0 0
        %2378 = vmatprep.subr.bf16.mxu0 0
        %2379 = vmatpush2.bf16.msra.mxu0 0
        %2380 = vmatprep.subr.bf16.mxu0 0
        %2381 = vmatpush2.bf16.msra.mxu0 0
        %2382 = vmatprep.subr.bf16.mxu0 0
        %2383 = vmatpush2.bf16.msra.mxu0 0
        %2384 = vmatprep.subr.bf16.mxu0 0
        %2385 = vmatpush2.bf16.msra.mxu0 0
        %2386 = vmatprep.subr.bf16.mxu0 0
        %2387 = vmatpush2.bf16.msra.mxu0 0
        %2388 = vmatprep.subr.bf16.mxu0 0
        %2389 = vmatpush2.bf16.msra.mxu0 0
        %2390 = vmatprep.subr.bf16.mxu0 0
        %2391 = vmatpush2.bf16.msra.mxu0 0
        %2392 = vmatprep.mubr.bf16.mxu0 0
        %2393 = vmatmul.mubr.bf16.gmra.mxu0 %v2352
        %v2394 = vpop.f32.mrf.mxu0
        %v2395 = vadd.f32 0.0, %v2394
        %v2396 = vpop.f32.mrf.mxu0
        %v2397 = vpop.f32.mrf.mxu0
        %v2398 = vadd.f32 0.0, %v2397
        %v2399 = vpop.f32.mrf.mxu0
        %2400 = vmatprep.mubr.bf16.mxu0 0
        %2401 = vmatmul.mubr.bf16.gmra.mxu0 %v2355
        %v2402 = vpop.f32.mrf.mxu0
        %v2403 = vadd.f32 0.0, %v2402
        %v2404 = vpop.f32.mrf.mxu0
        %v2405 = vpop.f32.mrf.mxu0
        %v2406 = vadd.f32 0.0, %v2405
        %v2407 = vpop.f32.mrf.mxu0
        %2408 = vmatprep.mubr.bf16.mxu0 0
        %2409 = vmatmul.mubr.bf16.gmra.mxu0 %v2358
        %v2410 = vpop.f32.mrf.mxu0
        %v2411 = vadd.f32 0.0, %v2410
        %v2412 = vpop.f32.mrf.mxu0
        %v2413 = vpop.f32.mrf.mxu0
        %v2414 = vadd.f32 0.0, %v2413
        %v2415 = vpop.f32.mrf.mxu0
        %2416 = vdwg.mxu0
        %v2417 = vadd.f32 %v2305, %v2395
        %v2418 = vadd.f32 %v2306, %v2398
        %v2419 = vadd.f32 %v2307, %v2403
        %v2420 = vadd.f32 %v2308, %v2406
        %v2421 = vadd.f32 %v2309, %v2411
        %v2422 = vadd.f32 %v2310, %v2414
        %v2423 = vld [vmem:[#allocation3 + $0x4] sm:$0xff]
        %v2424 = vld [vmem:[#allocation3 + $0xc] sm:$0xff]
        %v2425 = vld [vmem:[#allocation3 + $0x14] sm:$0xff]
        %v2426 = vld [vmem:[#allocation3 + $0x1c] sm:$0xff]
        %v2427 = vld [vmem:[#allocation3 + $0x24] sm:$0xff]
        %v2428 = vld [vmem:[#allocation3 + $0x2c] sm:$0xff]
        %v2429 = vmul.f32 %v2423, %v1842
        %v2430 = vmul.f32 %v2424, %v1847
        %v2431 = vmul.f32 %v2425, %v1852
        %v2432 = vmul.f32 %v2426, %v1857
        %v2433 = vmul.f32 %v2427, %v1862
        %v2434 = vmul.f32 %v2428, %v1867
        %v2435 = vpack.c.bf16 %v2430, %v2429
        %v2436 = vpack.c.bf16 %v2432, %v2431
        %v2437 = vpack.c.bf16 %v2434, %v2433
        %s2438 = scalar_lea.vmem %s5, 216
        %v2439 = vld [vmem:[%s2438] sm:$0xf]
        %v2440 = vld [vmem:[%s2438 + $0x4] sm:$0xf]
        %v2441 = vld [vmem:[%s2438 + $0x8] sm:$0xf]
        %v2442 = vld [vmem:[%s2438 + $0xc] sm:$0xf]
        %v2443 = vld [vmem:[%s2438 + $0x10] sm:$0xf]
        %v2444 = vld [vmem:[%s2438 + $0x14] sm:$0xf]
        %v2451 = vunpack.c.l.b16 %v2439
        %v2452 = vunpack.c.l.b16 %v2440
        %v2453 = vunpack.c.l.b16 %v2441
        %v2454 = vunpack.c.l.b16 %v2442
        %v2455 = vunpack.c.l.b16 %v2443
        %v2456 = vunpack.c.l.b16 %v2444
        %v2457 = vpack.c.b16 %v2452, %v2451
        %v2458 = vpack.c.b16 %v2454, %v2453
        %v2459 = vpack.c.b16 %v2456, %v2455
        %v2464 = vsel %vm1199, %v2435, 0
        %v2467 = vsel %vm1199, %v2436, 0
        %v2470 = vsel %vm1199, %v2437, 0
        %2472 = vmatprep.subr.bf16.mxu0 0
        %2473 = vmatpush1.bf16.msra.mxu0 0
        %2474 = vmatprep.subr.bf16.mxu0 0
        %2475 = vmatpush1.bf16.msra.mxu0 0
        %2476 = vmatprep.subr.bf16.mxu0 0
        %2477 = vmatpush1.bf16.msra.mxu0 0
        %2478 = vmatprep.subr.bf16.mxu0 0
        %2479 = vmatpush1.bf16.msra.mxu0 0
        %2480 = vmatprep.subr.bf16.mxu0 0
        %2481 = vmatpush1.bf16.msra.mxu0 0
        %2482 = vmatprep.subr.bf16.mxu0 0
        %2483 = vmatpush1.bf16.msra.mxu0 %v2459
        %2484 = vmatprep.subr.bf16.mxu0 0
        %2485 = vmatpush1.bf16.msra.mxu0 %v2458
        %2486 = vmatprep.subr.bf16.mxu0 0
        %2487 = vmatpush1.bf16.msra.mxu0 %v2457
        %2488 = vmatprep.subr.bf16.mxu0 0
        %2489 = vmatpush2.bf16.msra.mxu0 0
        %2490 = vmatprep.subr.bf16.mxu0 0
        %2491 = vmatpush2.bf16.msra.mxu0 0
        %2492 = vmatprep.subr.bf16.mxu0 0
        %2493 = vmatpush2.bf16.msra.mxu0 0
        %2494 = vmatprep.subr.bf16.mxu0 0
        %2495 = vmatpush2.bf16.msra.mxu0 0
        %2496 = vmatprep.subr.bf16.mxu0 0
        %2497 = vmatpush2.bf16.msra.mxu0 0
        %2498 = vmatprep.subr.bf16.mxu0 0
        %2499 = vmatpush2.bf16.msra.mxu0 0
        %2500 = vmatprep.subr.bf16.mxu0 0
        %2501 = vmatpush2.bf16.msra.mxu0 0
        %2502 = vmatprep.subr.bf16.mxu0 0
        %2503 = vmatpush2.bf16.msra.mxu0 0
        %2504 = vmatprep.mubr.bf16.mxu0 0
        %2505 = vmatmul.mubr.bf16.gmra.mxu0 %v2464
        %v2506 = vpop.f32.mrf.mxu0
        %v2507 = vadd.f32 0.0, %v2506
        %v2508 = vpop.f32.mrf.mxu0
        %v2509 = vpop.f32.mrf.mxu0
        %v2510 = vadd.f32 0.0, %v2509
        %v2511 = vpop.f32.mrf.mxu0
        %2512 = vmatprep.mubr.bf16.mxu0 0
        %2513 = vmatmul.mubr.bf16.gmra.mxu0 %v2467
        %v2514 = vpop.f32.mrf.mxu0
        %v2515 = vadd.f32 0.0, %v2514
        %v2516 = vpop.f32.mrf.mxu0
        %v2517 = vpop.f32.mrf.mxu0
        %v2518 = vadd.f32 0.0, %v2517
        %v2519 = vpop.f32.mrf.mxu0
        %2520 = vmatprep.mubr.bf16.mxu0 0
        %2521 = vmatmul.mubr.bf16.gmra.mxu0 %v2470
        %v2522 = vpop.f32.mrf.mxu0
        %v2523 = vadd.f32 0.0, %v2522
        %v2524 = vpop.f32.mrf.mxu0
        %v2525 = vpop.f32.mrf.mxu0
        %v2526 = vadd.f32 0.0, %v2525
        %v2527 = vpop.f32.mrf.mxu0
        %2528 = vdwg.mxu0
        %v2529 = vadd.f32 %v2417, %v2507
        %v2530 = vadd.f32 %v2418, %v2510
        %v2531 = vadd.f32 %v2419, %v2515
        %v2532 = vadd.f32 %v2420, %v2518
        %v2533 = vadd.f32 %v2421, %v2523
        %v2534 = vadd.f32 %v2422, %v2526
        %v2535 = vld [vmem:[#allocation2 + $0xc] sm:$0xff]
        %v2536 = vld [vmem:[#allocation2 + $0x14] sm:$0xff]
        %v2537 = vld [vmem:[#allocation2 + $0x1c] sm:$0xff]
        %v2538 = vld [vmem:[#allocation2 + $0x24] sm:$0xff]
        %v2539 = vld [vmem:[#allocation2 + $0x2c] sm:$0xff]
        %v2540 = vld [vmem:[#allocation2 + $0x34] sm:$0xff]
        %v2541 = vmul.f32 %v2535, %v1259
        %v2542 = vmul.f32 %v2536, %v1264
        %v2543 = vmul.f32 %v2537, %v1269
        %v2544 = vmul.f32 %v2538, %v1274
        %v2545 = vmul.f32 %v2539, %v1279
        %v2546 = vmul.f32 %v2540, %v1284
        %v2547 = vpack.c.bf16 %v2542, %v2541
        %v2548 = vpack.c.bf16 %v2544, %v2543
        %v2549 = vpack.c.bf16 %v2546, %v2545
        %s2550 = scalar_lea.vmem %s5, 240
        %v2551 = vld [vmem:[%s2550] sm:$0xf]
        %v2552 = vld [vmem:[%s2550 + $0x4] sm:$0xf]
        %v2553 = vld [vmem:[%s2550 + $0x8] sm:$0xf]
        %v2554 = vld [vmem:[%s2550 + $0xc] sm:$0xf]
        %v2555 = vld [vmem:[%s2550 + $0x10] sm:$0xf]
        %v2556 = vld [vmem:[%s2550 + $0x14] sm:$0xf]
        %v2563 = vunpack.c.l.b16 %v2551
        %v2564 = vunpack.c.l.b16 %v2552
        %v2565 = vunpack.c.l.b16 %v2553
        %v2566 = vunpack.c.l.b16 %v2554
        %v2567 = vunpack.c.l.b16 %v2555
        %v2568 = vunpack.c.l.b16 %v2556
        %v2569 = vpack.c.b16 %v2564, %v2563
        %v2570 = vpack.c.b16 %v2566, %v2565
        %v2571 = vpack.c.b16 %v2568, %v2567
        %v2576 = vsel %vm1199, %v2547, 0
        %v2579 = vsel %vm1199, %v2548, 0
        %v2582 = vsel %vm1199, %v2549, 0
        %2584 = vmatprep.subr.bf16.mxu0 0
        %2585 = vmatpush1.bf16.msra.mxu0 0
        %2586 = vmatprep.subr.bf16.mxu0 0
        %2587 = vmatpush1.bf16.msra.mxu0 0
        %2588 = vmatprep.subr.bf16.mxu0 0
        %2589 = vmatpush1.bf16.msra.mxu0 0
        %2590 = vmatprep.subr.bf16.mxu0 0
        %2591 = vmatpush1.bf16.msra.mxu0 0
        %2592 = vmatprep.subr.bf16.mxu0 0
        %2593 = vmatpush1.bf16.msra.mxu0 0
        %2594 = vmatprep.subr.bf16.mxu0 0
        %2595 = vmatpush1.bf16.msra.mxu0 %v2571
        %2596 = vmatprep.subr.bf16.mxu0 0
        %2597 = vmatpush1.bf16.msra.mxu0 %v2570
        %2598 = vmatprep.subr.bf16.mxu0 0
        %2599 = vmatpush1.bf16.msra.mxu0 %v2569
        %2600 = vmatprep.subr.bf16.mxu0 0
        %2601 = vmatpush2.bf16.msra.mxu0 0
        %2602 = vmatprep.subr.bf16.mxu0 0
        %2603 = vmatpush2.bf16.msra.mxu0 0
        %2604 = vmatprep.subr.bf16.mxu0 0
        %2605 = vmatpush2.bf16.msra.mxu0 0
        %2606 = vmatprep.subr.bf16.mxu0 0
        %2607 = vmatpush2.bf16.msra.mxu0 0
        %2608 = vmatprep.subr.bf16.mxu0 0
        %2609 = vmatpush2.bf16.msra.mxu0 0
        %2610 = vmatprep.subr.bf16.mxu0 0
        %2611 = vmatpush2.bf16.msra.mxu0 0
        %2612 = vmatprep.subr.bf16.mxu0 0
        %2613 = vmatpush2.bf16.msra.mxu0 0
        %2614 = vmatprep.subr.bf16.mxu0 0
        %2615 = vmatpush2.bf16.msra.mxu0 0
        %2616 = vmatprep.mubr.bf16.mxu0 0
        %2617 = vmatmul.mubr.bf16.gmra.mxu0 %v2576
        %v2618 = vpop.f32.mrf.mxu0
        %v2619 = vadd.f32 0.0, %v2618
        %v2620 = vpop.f32.mrf.mxu0
        %v2621 = vpop.f32.mrf.mxu0
        %v2622 = vadd.f32 0.0, %v2621
        %v2623 = vpop.f32.mrf.mxu0
        %2624 = vmatprep.mubr.bf16.mxu0 0
        %2625 = vmatmul.mubr.bf16.gmra.mxu0 %v2579
        %v2626 = vpop.f32.mrf.mxu0
        %v2627 = vadd.f32 0.0, %v2626
        %v2628 = vpop.f32.mrf.mxu0
        %v2629 = vpop.f32.mrf.mxu0
        %v2630 = vadd.f32 0.0, %v2629
        %v2631 = vpop.f32.mrf.mxu0
        %2632 = vmatprep.mubr.bf16.mxu0 0
        %2633 = vmatmul.mubr.bf16.gmra.mxu0 %v2582
        %v2634 = vpop.f32.mrf.mxu0
        %v2635 = vadd.f32 0.0, %v2634
        %v2636 = vpop.f32.mrf.mxu0
        %v2637 = vpop.f32.mrf.mxu0
        %v2638 = vadd.f32 0.0, %v2637
        %v2639 = vpop.f32.mrf.mxu0
        %2640 = vdwg.mxu0
        %v2641 = vadd.f32 %v2529, %v2619
        %v2642 = vadd.f32 %v2530, %v2622
        %v2643 = vadd.f32 %v2531, %v2627
        %v2644 = vadd.f32 %v2532, %v2630
        %v2645 = vadd.f32 %v2533, %v2635
        %v2646 = vadd.f32 %v2534, %v2638
        %v2647 = vld [vmem:[#allocation2 + $0xd] sm:$0xff]
        %v2648 = vld [vmem:[#allocation2 + $0x15] sm:$0xff]
        %v2649 = vld [vmem:[#allocation2 + $0x1d] sm:$0xff]
        %v2650 = vld [vmem:[#allocation2 + $0x25] sm:$0xff]
        %v2651 = vld [vmem:[#allocation2 + $0x2d] sm:$0xff]
        %v2652 = vld [vmem:[#allocation2 + $0x35] sm:$0xff]
        %v2653 = vmul.f32 %v2647, %v1317
        %v2654 = vmul.f32 %v2648, %v1322
        %v2655 = vmul.f32 %v2649, %v1327
        %v2656 = vmul.f32 %v2650, %v1332
        %v2657 = vmul.f32 %v2651, %v1337
        %v2658 = vmul.f32 %v2652, %v1342
        %v2659 = vpack.c.bf16 %v2654, %v2653
        %v2660 = vpack.c.bf16 %v2656, %v2655
        %v2661 = vpack.c.bf16 %v2658, %v2657
        %s2662 = scalar_lea.vmem %s5, 264
        %v2663 = vld [vmem:[%s2662] sm:$0xf]
        %v2664 = vld [vmem:[%s2662 + $0x4] sm:$0xf]
        %v2665 = vld [vmem:[%s2662 + $0x8] sm:$0xf]
        %v2666 = vld [vmem:[%s2662 + $0xc] sm:$0xf]
        %v2667 = vld [vmem:[%s2662 + $0x10] sm:$0xf]
        %v2668 = vld [vmem:[%s2662 + $0x14] sm:$0xf]
        %v2675 = vunpack.c.l.b16 %v2663
        %v2676 = vunpack.c.l.b16 %v2664
        %v2677 = vunpack.c.l.b16 %v2665
        %v2678 = vunpack.c.l.b16 %v2666
        %v2679 = vunpack.c.l.b16 %v2667
        %v2680 = vunpack.c.l.b16 %v2668
        %v2681 = vpack.c.b16 %v2676, %v2675
        %v2682 = vpack.c.b16 %v2678, %v2677
        %v2683 = vpack.c.b16 %v2680, %v2679
        %v2688 = vsel %vm1199, %v2659, 0
        %v2691 = vsel %vm1199, %v2660, 0
        %v2694 = vsel %vm1199, %v2661, 0
        %2696 = vmatprep.subr.bf16.mxu0 0
        %2697 = vmatpush1.bf16.msra.mxu0 0
        %2698 = vmatprep.subr.bf16.mxu0 0
        %2699 = vmatpush1.bf16.msra.mxu0 0
        %2700 = vmatprep.subr.bf16.mxu0 0
        %2701 = vmatpush1.bf16.msra.mxu0 0
        %2702 = vmatprep.subr.bf16.mxu0 0
        %2703 = vmatpush1.bf16.msra.mxu0 0
        %2704 = vmatprep.subr.bf16.mxu0 0
        %2705 = vmatpush1.bf16.msra.mxu0 0
        %2706 = vmatprep.subr.bf16.mxu0 0
        %2707 = vmatpush1.bf16.msra.mxu0 %v2683
        %2708 = vmatprep.subr.bf16.mxu0 0
        %2709 = vmatpush1.bf16.msra.mxu0 %v2682
        %2710 = vmatprep.subr.bf16.mxu0 0
        %2711 = vmatpush1.bf16.msra.mxu0 %v2681
        %2712 = vmatprep.subr.bf16.mxu0 0
        %2713 = vmatpush2.bf16.msra.mxu0 0
        %2714 = vmatprep.subr.bf16.mxu0 0
        %2715 = vmatpush2.bf16.msra.mxu0 0
        %2716 = vmatprep.subr.bf16.mxu0 0
        %2717 = vmatpush2.bf16.msra.mxu0 0
        %2718 = vmatprep.subr.bf16.mxu0 0
        %2719 = vmatpush2.bf16.msra.mxu0 0
        %2720 = vmatprep.subr.bf16.mxu0 0
        %2721 = vmatpush2.bf16.msra.mxu0 0
        %2722 = vmatprep.subr.bf16.mxu0 0
        %2723 = vmatpush2.bf16.msra.mxu0 0
        %2724 = vmatprep.subr.bf16.mxu0 0
        %2725 = vmatpush2.bf16.msra.mxu0 0
        %2726 = vmatprep.subr.bf16.mxu0 0
        %2727 = vmatpush2.bf16.msra.mxu0 0
        %2728 = vmatprep.mubr.bf16.mxu0 0
        %2729 = vmatmul.mubr.bf16.gmra.mxu0 %v2688
        %v2730 = vpop.f32.mrf.mxu0
        %v2731 = vadd.f32 0.0, %v2730
        %v2732 = vpop.f32.mrf.mxu0
        %v2733 = vpop.f32.mrf.mxu0
        %v2734 = vadd.f32 0.0, %v2733
        %v2735 = vpop.f32.mrf.mxu0
        %2736 = vmatprep.mubr.bf16.mxu0 0
        %2737 = vmatmul.mubr.bf16.gmra.mxu0 %v2691
        %v2738 = vpop.f32.mrf.mxu0
        %v2739 = vadd.f32 0.0, %v2738
        %v2740 = vpop.f32.mrf.mxu0
        %v2741 = vpop.f32.mrf.mxu0
        %v2742 = vadd.f32 0.0, %v2741
        %v2743 = vpop.f32.mrf.mxu0
        %2744 = vmatprep.mubr.bf16.mxu0 0
        %2745 = vmatmul.mubr.bf16.gmra.mxu0 %v2694
        %v2746 = vpop.f32.mrf.mxu0
        %v2747 = vadd.f32 0.0, %v2746
        %v2748 = vpop.f32.mrf.mxu0
        %v2749 = vpop.f32.mrf.mxu0
        %v2750 = vadd.f32 0.0, %v2749
        %v2751 = vpop.f32.mrf.mxu0
        %2752 = vdwg.mxu0
        %v2753 = vadd.f32 %v2641, %v2731
        %v2754 = vadd.f32 %v2642, %v2734
        %v2755 = vadd.f32 %v2643, %v2739
        %v2756 = vadd.f32 %v2644, %v2742
        %v2757 = vadd.f32 %v2645, %v2747
        %v2758 = vadd.f32 %v2646, %v2750
        %v2759 = vld [vmem:[#allocation2 + $0xe] sm:$0xff]
        %v2760 = vld [vmem:[#allocation2 + $0x16] sm:$0xff]
        %v2761 = vld [vmem:[#allocation2 + $0x1e] sm:$0xff]
        %v2762 = vld [vmem:[#allocation2 + $0x26] sm:$0xff]
        %v2763 = vld [vmem:[#allocation2 + $0x2e] sm:$0xff]
        %v2764 = vld [vmem:[#allocation2 + $0x36] sm:$0xff]
        %v2765 = vmul.f32 %v2759, %v1544
        %v2766 = vmul.f32 %v2760, %v1549
        %v2767 = vmul.f32 %v2761, %v1554
        %v2768 = vmul.f32 %v2762, %v1559
        %v2769 = vmul.f32 %v2763, %v1564
        %v2770 = vmul.f32 %v2764, %v1569
        %v2771 = vpack.c.bf16 %v2766, %v2765
        %v2772 = vpack.c.bf16 %v2768, %v2767
        %v2773 = vpack.c.bf16 %v2770, %v2769
        %s2774 = scalar_lea.vmem %s5, 288
        %v2775 = vld [vmem:[%s2774] sm:$0xf]
        %v2776 = vld [vmem:[%s2774 + $0x4] sm:$0xf]
        %v2777 = vld [vmem:[%s2774 + $0x8] sm:$0xf]
        %v2778 = vld [vmem:[%s2774 + $0xc] sm:$0xf]
        %v2779 = vld [vmem:[%s2774 + $0x10] sm:$0xf]
        %v2780 = vld [vmem:[%s2774 + $0x14] sm:$0xf]
        %v2787 = vunpack.c.l.b16 %v2775
        %v2788 = vunpack.c.l.b16 %v2776
        %v2789 = vunpack.c.l.b16 %v2777
        %v2790 = vunpack.c.l.b16 %v2778
        %v2791 = vunpack.c.l.b16 %v2779
        %v2792 = vunpack.c.l.b16 %v2780
        %v2793 = vpack.c.b16 %v2788, %v2787
        %v2794 = vpack.c.b16 %v2790, %v2789
        %v2795 = vpack.c.b16 %v2792, %v2791
        %v2800 = vsel %vm1199, %v2771, 0
        %v2803 = vsel %vm1199, %v2772, 0
        %v2806 = vsel %vm1199, %v2773, 0
        %2808 = vmatprep.subr.bf16.mxu0 0
        %2809 = vmatpush1.bf16.msra.mxu0 0
        %2810 = vmatprep.subr.bf16.mxu0 0
        %2811 = vmatpush1.bf16.msra.mxu0 0
        %2812 = vmatprep.subr.bf16.mxu0 0
        %2813 = vmatpush1.bf16.msra.mxu0 0
        %2814 = vmatprep.subr.bf16.mxu0 0
        %2815 = vmatpush1.bf16.msra.mxu0 0
        %2816 = vmatprep.subr.bf16.mxu0 0
        %2817 = vmatpush1.bf16.msra.mxu0 0
        %2818 = vmatprep.subr.bf16.mxu0 0
        %2819 = vmatpush1.bf16.msra.mxu0 %v2795
        %2820 = vmatprep.subr.bf16.mxu0 0
        %2821 = vmatpush1.bf16.msra.mxu0 %v2794
        %2822 = vmatprep.subr.bf16.mxu0 0
        %2823 = vmatpush1.bf16.msra.mxu0 %v2793
        %2824 = vmatprep.subr.bf16.mxu0 0
        %2825 = vmatpush2.bf16.msra.mxu0 0
        %2826 = vmatprep.subr.bf16.mxu0 0
        %2827 = vmatpush2.bf16.msra.mxu0 0
        %2828 = vmatprep.subr.bf16.mxu0 0
        %2829 = vmatpush2.bf16.msra.mxu0 0
        %2830 = vmatprep.subr.bf16.mxu0 0
        %2831 = vmatpush2.bf16.msra.mxu0 0
        %2832 = vmatprep.subr.bf16.mxu0 0
        %2833 = vmatpush2.bf16.msra.mxu0 0
        %2834 = vmatprep.subr.bf16.mxu0 0
        %2835 = vmatpush2.bf16.msra.mxu0 0
        %2836 = vmatprep.subr.bf16.mxu0 0
        %2837 = vmatpush2.bf16.msra.mxu0 0
        %2838 = vmatprep.subr.bf16.mxu0 0
        %2839 = vmatpush2.bf16.msra.mxu0 0
        %2840 = vmatprep.mubr.bf16.mxu0 0
        %2841 = vmatmul.mubr.bf16.gmra.mxu0 %v2800
        %v2842 = vpop.f32.mrf.mxu0
        %v2843 = vadd.f32 0.0, %v2842
        %v2844 = vpop.f32.mrf.mxu0
        %v2845 = vpop.f32.mrf.mxu0
        %v2846 = vadd.f32 0.0, %v2845
        %v2847 = vpop.f32.mrf.mxu0
        %2848 = vmatprep.mubr.bf16.mxu0 0
        %2849 = vmatmul.mubr.bf16.gmra.mxu0 %v2803
        %v2850 = vpop.f32.mrf.mxu0
        %v2851 = vadd.f32 0.0, %v2850
        %v2852 = vpop.f32.mrf.mxu0
        %v2853 = vpop.f32.mrf.mxu0
        %v2854 = vadd.f32 0.0, %v2853
        %v2855 = vpop.f32.mrf.mxu0
        %2856 = vmatprep.mubr.bf16.mxu0 0
        %2857 = vmatmul.mubr.bf16.gmra.mxu0 %v2806
        %v2858 = vpop.f32.mrf.mxu0
        %v2859 = vadd.f32 0.0, %v2858
        %v2860 = vpop.f32.mrf.mxu0
        %v2861 = vpop.f32.mrf.mxu0
        %v2862 = vadd.f32 0.0, %v2861
        %v2863 = vpop.f32.mrf.mxu0
        %2864 = vdwg.mxu0
        %v2865 = vadd.f32 %v2753, %v2843
        %v2866 = vadd.f32 %v2754, %v2846
        %v2867 = vadd.f32 %v2755, %v2851
        %v2868 = vadd.f32 %v2756, %v2854
        %v2869 = vadd.f32 %v2757, %v2859
        %v2870 = vadd.f32 %v2758, %v2862
        %v2871 = vld [vmem:[#allocation2 + $0xf] sm:$0xff]
        %v2872 = vld [vmem:[#allocation2 + $0x17] sm:$0xff]
        %v2873 = vld [vmem:[#allocation2 + $0x1f] sm:$0xff]
        %v2874 = vld [vmem:[#allocation2 + $0x27] sm:$0xff]
        %v2875 = vld [vmem:[#allocation2 + $0x2f] sm:$0xff]
        %v2876 = vld [vmem:[#allocation2 + $0x37] sm:$0xff]
        %v2877 = vmul.f32 %v2871, %v1693
        %v2878 = vmul.f32 %v2872, %v1698
        %v2879 = vmul.f32 %v2873, %v1703
        %v2880 = vmul.f32 %v2874, %v1708
        %v2881 = vmul.f32 %v2875, %v1713
        %v2882 = vmul.f32 %v2876, %v1718
        %v2883 = vpack.c.bf16 %v2878, %v2877
        %v2884 = vpack.c.bf16 %v2880, %v2879
        %v2885 = vpack.c.bf16 %v2882, %v2881
        %s2886 = scalar_lea.vmem %s5, 312
        %v2887 = vld [vmem:[%s2886] sm:$0xf]
        %v2888 = vld [vmem:[%s2886 + $0x4] sm:$0xf]
        %v2889 = vld [vmem:[%s2886 + $0x8] sm:$0xf]
        %v2890 = vld [vmem:[%s2886 + $0xc] sm:$0xf]
        %v2891 = vld [vmem:[%s2886 + $0x10] sm:$0xf]
        %v2892 = vld [vmem:[%s2886 + $0x14] sm:$0xf]
        %v2899 = vunpack.c.l.b16 %v2887
        %v2900 = vunpack.c.l.b16 %v2888
        %v2901 = vunpack.c.l.b16 %v2889
        %v2902 = vunpack.c.l.b16 %v2890
        %v2903 = vunpack.c.l.b16 %v2891
        %v2904 = vunpack.c.l.b16 %v2892
        %v2905 = vpack.c.b16 %v2900, %v2899
        %v2906 = vpack.c.b16 %v2902, %v2901
        %v2907 = vpack.c.b16 %v2904, %v2903
        %v2912 = vsel %vm1199, %v2883, 0
        %v2915 = vsel %vm1199, %v2884, 0
        %v2918 = vsel %vm1199, %v2885, 0
        %2920 = vmatprep.subr.bf16.mxu0 0
        %2921 = vmatpush1.bf16.msra.mxu0 0
        %2922 = vmatprep.subr.bf16.mxu0 0
        %2923 = vmatpush1.bf16.msra.mxu0 0
        %2924 = vmatprep.subr.bf16.mxu0 0
        %2925 = vmatpush1.bf16.msra.mxu0 0
        %2926 = vmatprep.subr.bf16.mxu0 0
        %2927 = vmatpush1.bf16.msra.mxu0 0
        %2928 = vmatprep.subr.bf16.mxu0 0
        %2929 = vmatpush1.bf16.msra.mxu0 0
        %2930 = vmatprep.subr.bf16.mxu0 0
        %2931 = vmatpush1.bf16.msra.mxu0 %v2907
        %2932 = vmatprep.subr.bf16.mxu0 0
        %2933 = vmatpush1.bf16.msra.mxu0 %v2906
        %2934 = vmatprep.subr.bf16.mxu0 0
        %2935 = vmatpush1.bf16.msra.mxu0 %v2905
        %2936 = vmatprep.subr.bf16.mxu0 0
        %2937 = vmatpush2.bf16.msra.mxu0 0
        %2938 = vmatprep.subr.bf16.mxu0 0
        %2939 = vmatpush2.bf16.msra.mxu0 0
        %2940 = vmatprep.subr.bf16.mxu0 0
        %2941 = vmatpush2.bf16.msra.mxu0 0
        %2942 = vmatprep.subr.bf16.mxu0 0
        %2943 = vmatpush2.bf16.msra.mxu0 0
        %2944 = vmatprep.subr.bf16.mxu0 0
        %2945 = vmatpush2.bf16.msra.mxu0 0
        %2946 = vmatprep.subr.bf16.mxu0 0
        %2947 = vmatpush2.bf16.msra.mxu0 0
        %2948 = vmatprep.subr.bf16.mxu0 0
        %2949 = vmatpush2.bf16.msra.mxu0 0
        %2950 = vmatprep.subr.bf16.mxu0 0
        %2951 = vmatpush2.bf16.msra.mxu0 0
        %2952 = vmatprep.mubr.bf16.mxu0 0
        %2953 = vmatmul.mubr.bf16.gmra.mxu0 %v2912
        %v2954 = vpop.f32.mrf.mxu0
        %v2955 = vadd.f32 0.0, %v2954
        %v2956 = vpop.f32.mrf.mxu0
        %v2957 = vpop.f32.mrf.mxu0
        %v2958 = vadd.f32 0.0, %v2957
        %v2959 = vpop.f32.mrf.mxu0
        %2960 = vmatprep.mubr.bf16.mxu0 0
        %2961 = vmatmul.mubr.bf16.gmra.mxu0 %v2915
        %v2962 = vpop.f32.mrf.mxu0
        %v2963 = vadd.f32 0.0, %v2962
        %v2964 = vpop.f32.mrf.mxu0
        %v2965 = vpop.f32.mrf.mxu0
        %v2966 = vadd.f32 0.0, %v2965
        %v2967 = vpop.f32.mrf.mxu0
        %2968 = vmatprep.mubr.bf16.mxu0 0
        %2969 = vmatmul.mubr.bf16.gmra.mxu0 %v2918
        %v2970 = vpop.f32.mrf.mxu0
        %v2971 = vadd.f32 0.0, %v2970
        %v2972 = vpop.f32.mrf.mxu0
        %v2973 = vpop.f32.mrf.mxu0
        %v2974 = vadd.f32 0.0, %v2973
        %v2975 = vpop.f32.mrf.mxu0
        %2976 = vdwg.mxu0
        %v2977 = vadd.f32 %v2865, %v2955
        %v2978 = vadd.f32 %v2866, %v2958
        %v2979 = vadd.f32 %v2867, %v2963
        %v2980 = vadd.f32 %v2868, %v2966
        %v2981 = vadd.f32 %v2869, %v2971
        %v2982 = vadd.f32 %v2870, %v2974
        %v2983 = vld [vmem:[#allocation2 + $0x10] sm:$0xff]
        %v2984 = vld [vmem:[#allocation2 + $0x18] sm:$0xff]
        %v2985 = vld [vmem:[#allocation2 + $0x20] sm:$0xff]
        %v2986 = vld [vmem:[#allocation2 + $0x28] sm:$0xff]
        %v2987 = vld [vmem:[#allocation2 + $0x30] sm:$0xff]
        %v2988 = vld [vmem:[#allocation2 + $0x38] sm:$0xff]
        %v2989 = vmul.f32 %v2983, %v1842
        %v2990 = vmul.f32 %v2984, %v1847
        %v2991 = vmul.f32 %v2985, %v1852
        %v2992 = vmul.f32 %v2986, %v1857
        %v2993 = vmul.f32 %v2987, %v1862
        %v2994 = vmul.f32 %v2988, %v1867
        %v2995 = vpack.c.bf16 %v2990, %v2989
        %v2996 = vpack.c.bf16 %v2992, %v2991
        %v2997 = vpack.c.bf16 %v2994, %v2993
        %s2998 = scalar_lea.vmem %s5, 336
        %v2999 = vld [vmem:[%s2998] sm:$0xf]
        %v3000 = vld [vmem:[%s2998 + $0x4] sm:$0xf]
        %v3001 = vld [vmem:[%s2998 + $0x8] sm:$0xf]
        %v3002 = vld [vmem:[%s2998 + $0xc] sm:$0xf]
        %v3003 = vld [vmem:[%s2998 + $0x10] sm:$0xf]
        %v3004 = vld [vmem:[%s2998 + $0x14] sm:$0xf]
        %v3011 = vunpack.c.l.b16 %v2999
        %v3012 = vunpack.c.l.b16 %v3000
        %v3013 = vunpack.c.l.b16 %v3001
        %v3014 = vunpack.c.l.b16 %v3002
        %v3015 = vunpack.c.l.b16 %v3003
        %v3016 = vunpack.c.l.b16 %v3004
        %v3017 = vpack.c.b16 %v3012, %v3011
        %v3018 = vpack.c.b16 %v3014, %v3013
        %v3019 = vpack.c.b16 %v3016, %v3015
        %v3024 = vsel %vm1199, %v2995, 0
        %v3027 = vsel %vm1199, %v2996, 0
        %v3030 = vsel %vm1199, %v2997, 0
        %3032 = vmatprep.subr.bf16.mxu0 0
        %3033 = vmatpush1.bf16.msra.mxu0 0
        %3034 = vmatprep.subr.bf16.mxu0 0
        %3035 = vmatpush1.bf16.msra.mxu0 0
        %3036 = vmatprep.subr.bf16.mxu0 0
        %3037 = vmatpush1.bf16.msra.mxu0 0
        %3038 = vmatprep.subr.bf16.mxu0 0
        %3039 = vmatpush1.bf16.msra.mxu0 0
        %3040 = vmatprep.subr.bf16.mxu0 0
        %3041 = vmatpush1.bf16.msra.mxu0 0
        %3042 = vmatprep.subr.bf16.mxu0 0
        %3043 = vmatpush1.bf16.msra.mxu0 %v3019
        %3044 = vmatprep.subr.bf16.mxu0 0
        %3045 = vmatpush1.bf16.msra.mxu0 %v3018
        %3046 = vmatprep.subr.bf16.mxu0 0
        %3047 = vmatpush1.bf16.msra.mxu0 %v3017
        %3048 = vmatprep.subr.bf16.mxu0 0
        %3049 = vmatpush2.bf16.msra.mxu0 0
        %3050 = vmatprep.subr.bf16.mxu0 0
        %3051 = vmatpush2.bf16.msra.mxu0 0
        %3052 = vmatprep.subr.bf16.mxu0 0
        %3053 = vmatpush2.bf16.msra.mxu0 0
        %3054 = vmatprep.subr.bf16.mxu0 0
        %3055 = vmatpush2.bf16.msra.mxu0 0
        %3056 = vmatprep.subr.bf16.mxu0 0
        %3057 = vmatpush2.bf16.msra.mxu0 0
        %3058 = vmatprep.subr.bf16.mxu0 0
        %3059 = vmatpush2.bf16.msra.mxu0 0
        %3060 = vmatprep.subr.bf16.mxu0 0
        %3061 = vmatpush2.bf16.msra.mxu0 0
        %3062 = vmatprep.subr.bf16.mxu0 0
        %3063 = vmatpush2.bf16.msra.mxu0 0
        %3064 = vmatprep.mubr.bf16.mxu0 0
        %3065 = vmatmul.mubr.bf16.gmra.mxu0 %v3024
        %v3066 = vpop.f32.mrf.mxu0
        %v3067 = vadd.f32 0.0, %v3066
        %v3068 = vpop.f32.mrf.mxu0
        %v3069 = vpop.f32.mrf.mxu0
        %v3070 = vadd.f32 0.0, %v3069
        %v3071 = vpop.f32.mrf.mxu0
        %3072 = vmatprep.mubr.bf16.mxu0 0
        %3073 = vmatmul.mubr.bf16.gmra.mxu0 %v3027
        %v3074 = vpop.f32.mrf.mxu0
        %v3075 = vadd.f32 0.0, %v3074
        %v3076 = vpop.f32.mrf.mxu0
        %v3077 = vpop.f32.mrf.mxu0
        %v3078 = vadd.f32 0.0, %v3077
        %v3079 = vpop.f32.mrf.mxu0
        %3080 = vmatprep.mubr.bf16.mxu0 0
        %3081 = vmatmul.mubr.bf16.gmra.mxu0 %v3030
        %v3082 = vpop.f32.mrf.mxu0
        %v3083 = vadd.f32 0.0, %v3082
        %v3084 = vpop.f32.mrf.mxu0
        %v3085 = vpop.f32.mrf.mxu0
        %v3086 = vadd.f32 0.0, %v3085
        %v3087 = vpop.f32.mrf.mxu0
        %3088 = vdwg.mxu0
        %v3089 = vadd.f32 %v2977, %v3067
        %v3090 = vadd.f32 %v2978, %v3070
        %v3091 = vadd.f32 %v2979, %v3075
        %v3092 = vadd.f32 %v2980, %v3078
        %v3093 = vadd.f32 %v2981, %v3083
        %v3094 = vadd.f32 %v2982, %v3086
        %v3095 = vld [vmem:[#allocation3 + $0xc] sm:$0xff]
        %v3096 = vld [vmem:[#allocation3 + $0x14] sm:$0xff]
        %v3097 = vld [vmem:[#allocation3 + $0x1c] sm:$0xff]
        %v3098 = vld [vmem:[#allocation3 + $0x24] sm:$0xff]
        %v3099 = vld [vmem:[#allocation3 + $0x2c] sm:$0xff]
        %v3100 = vld [vmem:[#allocation3 + $0x34] sm:$0xff]
        %v3101 = vmul.f32 %v3095, %v1259
        %v3102 = vmul.f32 %v3096, %v1264
        %v3103 = vmul.f32 %v3097, %v1269
        %v3104 = vmul.f32 %v3098, %v1274
        %v3105 = vmul.f32 %v3099, %v1279
        %v3106 = vmul.f32 %v3100, %v1284
        %v3107 = vpack.c.bf16 %v3102, %v3101
        %v3108 = vpack.c.bf16 %v3104, %v3103
        %v3109 = vpack.c.bf16 %v3106, %v3105
        %s3110 = scalar_lea.vmem %s5, 360
        %v3111 = vld [vmem:[%s3110] sm:$0xf]
        %v3112 = vld [vmem:[%s3110 + $0x4] sm:$0xf]
        %v3113 = vld [vmem:[%s3110 + $0x8] sm:$0xf]
        %v3114 = vld [vmem:[%s3110 + $0xc] sm:$0xf]
        %v3115 = vld [vmem:[%s3110 + $0x10] sm:$0xf]
        %v3116 = vld [vmem:[%s3110 + $0x14] sm:$0xf]
        %v3123 = vunpack.c.l.b16 %v3111
        %v3124 = vunpack.c.l.b16 %v3112
        %v3125 = vunpack.c.l.b16 %v3113
        %v3126 = vunpack.c.l.b16 %v3114
        %v3127 = vunpack.c.l.b16 %v3115
        %v3128 = vunpack.c.l.b16 %v3116
        %v3129 = vpack.c.b16 %v3124, %v3123
        %v3130 = vpack.c.b16 %v3126, %v3125
        %v3131 = vpack.c.b16 %v3128, %v3127
        %v3136 = vsel %vm1199, %v3107, 0
        %v3139 = vsel %vm1199, %v3108, 0
        %v3142 = vsel %vm1199, %v3109, 0
        %3144 = vmatprep.subr.bf16.mxu0 0
        %3145 = vmatpush1.bf16.msra.mxu0 0
        %3146 = vmatprep.subr.bf16.mxu0 0
        %3147 = vmatpush1.bf16.msra.mxu0 0
        %3148 = vmatprep.subr.bf16.mxu0 0
        %3149 = vmatpush1.bf16.msra.mxu0 0
        %3150 = vmatprep.subr.bf16.mxu0 0
        %3151 = vmatpush1.bf16.msra.mxu0 0
        %3152 = vmatprep.subr.bf16.mxu0 0
        %3153 = vmatpush1.bf16.msra.mxu0 0
        %3154 = vmatprep.subr.bf16.mxu0 0
        %3155 = vmatpush1.bf16.msra.mxu0 %v3131
        %3156 = vmatprep.subr.bf16.mxu0 0
        %3157 = vmatpush1.bf16.msra.mxu0 %v3130
        %3158 = vmatprep.subr.bf16.mxu0 0
        %3159 = vmatpush1.bf16.msra.mxu0 %v3129
        %3160 = vmatprep.subr.bf16.mxu0 0
        %3161 = vmatpush2.bf16.msra.mxu0 0
        %3162 = vmatprep.subr.bf16.mxu0 0
        %3163 = vmatpush2.bf16.msra.mxu0 0
        %3164 = vmatprep.subr.bf16.mxu0 0
        %3165 = vmatpush2.bf16.msra.mxu0 0
        %3166 = vmatprep.subr.bf16.mxu0 0
        %3167 = vmatpush2.bf16.msra.mxu0 0
        %3168 = vmatprep.subr.bf16.mxu0 0
        %3169 = vmatpush2.bf16.msra.mxu0 0
        %3170 = vmatprep.subr.bf16.mxu0 0
        %3171 = vmatpush2.bf16.msra.mxu0 0
        %3172 = vmatprep.subr.bf16.mxu0 0
        %3173 = vmatpush2.bf16.msra.mxu0 0
        %3174 = vmatprep.subr.bf16.mxu0 0
        %3175 = vmatpush2.bf16.msra.mxu0 0
        %3176 = vmatprep.mubr.bf16.mxu0 0
        %3177 = vmatmul.mubr.bf16.gmra.mxu0 %v3136
        %v3178 = vpop.f32.mrf.mxu0
        %v3179 = vadd.f32 0.0, %v3178
        %v3180 = vpop.f32.mrf.mxu0
        %v3181 = vpop.f32.mrf.mxu0
        %v3182 = vadd.f32 0.0, %v3181
        %v3183 = vpop.f32.mrf.mxu0
        %3184 = vmatprep.mubr.bf16.mxu0 0
        %3185 = vmatmul.mubr.bf16.gmra.mxu0 %v3139
        %v3186 = vpop.f32.mrf.mxu0
        %v3187 = vadd.f32 0.0, %v3186
        %v3188 = vpop.f32.mrf.mxu0
        %v3189 = vpop.f32.mrf.mxu0
        %v3190 = vadd.f32 0.0, %v3189
        %v3191 = vpop.f32.mrf.mxu0
        %3192 = vmatprep.mubr.bf16.mxu0 0
        %3193 = vmatmul.mubr.bf16.gmra.mxu0 %v3142
        %v3194 = vpop.f32.mrf.mxu0
        %v3195 = vadd.f32 0.0, %v3194
        %v3196 = vpop.f32.mrf.mxu0
        %v3197 = vpop.f32.mrf.mxu0
        %v3198 = vadd.f32 0.0, %v3197
        %v3199 = vpop.f32.mrf.mxu0
        %3200 = vdwg.mxu0
        %v3201 = vadd.f32 %v3089, %v3179
        %v3202 = vadd.f32 %v3090, %v3182
        %v3203 = vadd.f32 %v3091, %v3187
        %v3204 = vadd.f32 %v3092, %v3190
        %v3205 = vadd.f32 %v3093, %v3195
        %v3206 = vadd.f32 %v3094, %v3198
        %v3207 = vld [vmem:[#allocation3 + $0xd] sm:$0xff]
        %v3208 = vld [vmem:[#allocation3 + $0x15] sm:$0xff]
        %v3209 = vld [vmem:[#allocation3 + $0x1d] sm:$0xff]
        %v3210 = vld [vmem:[#allocation3 + $0x25] sm:$0xff]
        %v3211 = vld [vmem:[#allocation3 + $0x2d] sm:$0xff]
        %v3212 = vld [vmem:[#allocation3 + $0x35] sm:$0xff]
        %v3213 = vmul.f32 %v3207, %v1317
        %v3214 = vmul.f32 %v3208, %v1322
        %v3215 = vmul.f32 %v3209, %v1327
        %v3216 = vmul.f32 %v3210, %v1332
        %v3217 = vmul.f32 %v3211, %v1337
        %v3218 = vmul.f32 %v3212, %v1342
        %v3219 = vpack.c.bf16 %v3214, %v3213
        %v3220 = vpack.c.bf16 %v3216, %v3215
        %v3221 = vpack.c.bf16 %v3218, %v3217
        %s3222 = scalar_lea.vmem %s5, 384
        %v3223 = vld [vmem:[%s3222] sm:$0xf]
        %v3224 = vld [vmem:[%s3222 + $0x4] sm:$0xf]
        %v3225 = vld [vmem:[%s3222 + $0x8] sm:$0xf]
        %v3226 = vld [vmem:[%s3222 + $0xc] sm:$0xf]
        %v3227 = vld [vmem:[%s3222 + $0x10] sm:$0xf]
        %v3228 = vld [vmem:[%s3222 + $0x14] sm:$0xf]
        %v3235 = vunpack.c.l.b16 %v3223
        %v3236 = vunpack.c.l.b16 %v3224
        %v3237 = vunpack.c.l.b16 %v3225
        %v3238 = vunpack.c.l.b16 %v3226
        %v3239 = vunpack.c.l.b16 %v3227
        %v3240 = vunpack.c.l.b16 %v3228
        %v3241 = vpack.c.b16 %v3236, %v3235
        %v3242 = vpack.c.b16 %v3238, %v3237
        %v3243 = vpack.c.b16 %v3240, %v3239
        %v3248 = vsel %vm1199, %v3219, 0
        %v3251 = vsel %vm1199, %v3220, 0
        %v3254 = vsel %vm1199, %v3221, 0
        %3256 = vmatprep.subr.bf16.mxu0 0
        %3257 = vmatpush1.bf16.msra.mxu0 0
        %3258 = vmatprep.subr.bf16.mxu0 0
        %3259 = vmatpush1.bf16.msra.mxu0 0
        %3260 = vmatprep.subr.bf16.mxu0 0
        %3261 = vmatpush1.bf16.msra.mxu0 0
        %3262 = vmatprep.subr.bf16.mxu0 0
        %3263 = vmatpush1.bf16.msra.mxu0 0
        %3264 = vmatprep.subr.bf16.mxu0 0
        %3265 = vmatpush1.bf16.msra.mxu0 0
        %3266 = vmatprep.subr.bf16.mxu0 0
        %3267 = vmatpush1.bf16.msra.mxu0 %v3243
        %3268 = vmatprep.subr.bf16.mxu0 0
        %3269 = vmatpush1.bf16.msra.mxu0 %v3242
        %3270 = vmatprep.subr.bf16.mxu0 0
        %3271 = vmatpush1.bf16.msra.mxu0 %v3241
        %3272 = vmatprep.subr.bf16.mxu0 0
        %3273 = vmatpush2.bf16.msra.mxu0 0
        %3274 = vmatprep.subr.bf16.mxu0 0
        %3275 = vmatpush2.bf16.msra.mxu0 0
        %3276 = vmatprep.subr.bf16.mxu0 0
        %3277 = vmatpush2.bf16.msra.mxu0 0
        %3278 = vmatprep.subr.bf16.mxu0 0
        %3279 = vmatpush2.bf16.msra.mxu0 0
        %3280 = vmatprep.subr.bf16.mxu0 0
        %3281 = vmatpush2.bf16.msra.mxu0 0
        %3282 = vmatprep.subr.bf16.mxu0 0
        %3283 = vmatpush2.bf16.msra.mxu0 0
        %3284 = vmatprep.subr.bf16.mxu0 0
        %3285 = vmatpush2.bf16.msra.mxu0 0
        %3286 = vmatprep.subr.bf16.mxu0 0
        %3287 = vmatpush2.bf16.msra.mxu0 0
        %3288 = vmatprep.mubr.bf16.mxu0 0
        %3289 = vmatmul.mubr.bf16.gmra.mxu0 %v3248
        %v3290 = vpop.f32.mrf.mxu0
        %v3291 = vadd.f32 0.0, %v3290
        %v3292 = vpop.f32.mrf.mxu0
        %v3293 = vpop.f32.mrf.mxu0
        %v3294 = vadd.f32 0.0, %v3293
        %v3295 = vpop.f32.mrf.mxu0
        %3296 = vmatprep.mubr.bf16.mxu0 0
        %3297 = vmatmul.mubr.bf16.gmra.mxu0 %v3251
        %v3298 = vpop.f32.mrf.mxu0
        %v3299 = vadd.f32 0.0, %v3298
        %v3300 = vpop.f32.mrf.mxu0
        %v3301 = vpop.f32.mrf.mxu0
        %v3302 = vadd.f32 0.0, %v3301
        %v3303 = vpop.f32.mrf.mxu0
        %3304 = vmatprep.mubr.bf16.mxu0 0
        %3305 = vmatmul.mubr.bf16.gmra.mxu0 %v3254
        %v3306 = vpop.f32.mrf.mxu0
        %v3307 = vadd.f32 0.0, %v3306
        %v3308 = vpop.f32.mrf.mxu0
        %v3309 = vpop.f32.mrf.mxu0
        %v3310 = vadd.f32 0.0, %v3309
        %v3311 = vpop.f32.mrf.mxu0
        %3312 = vdwg.mxu0
        %v3313 = vadd.f32 %v3201, %v3291
        %v3314 = vadd.f32 %v3202, %v3294
        %v3315 = vadd.f32 %v3203, %v3299
        %v3316 = vadd.f32 %v3204, %v3302
        %v3317 = vadd.f32 %v3205, %v3307
        %v3318 = vadd.f32 %v3206, %v3310
        %v3319 = vld [vmem:[#allocation3 + $0xe] sm:$0xff]
        %v3320 = vld [vmem:[#allocation3 + $0x16] sm:$0xff]
        %v3321 = vld [vmem:[#allocation3 + $0x1e] sm:$0xff]
        %v3322 = vld [vmem:[#allocation3 + $0x26] sm:$0xff]
        %v3323 = vld [vmem:[#allocation3 + $0x2e] sm:$0xff]
        %v3324 = vld [vmem:[#allocation3 + $0x36] sm:$0xff]
        %v3325 = vmul.f32 %v3319, %v1544
        %v3326 = vmul.f32 %v3320, %v1549
        %v3327 = vmul.f32 %v3321, %v1554
        %v3328 = vmul.f32 %v3322, %v1559
        %v3329 = vmul.f32 %v3323, %v1564
        %v3330 = vmul.f32 %v3324, %v1569
        %v3331 = vpack.c.bf16 %v3326, %v3325
        %v3332 = vpack.c.bf16 %v3328, %v3327
        %v3333 = vpack.c.bf16 %v3330, %v3329
        %s3334 = scalar_lea.vmem %s5, 408
        %v3335 = vld [vmem:[%s3334] sm:$0xf]
        %v3336 = vld [vmem:[%s3334 + $0x4] sm:$0xf]
        %v3337 = vld [vmem:[%s3334 + $0x8] sm:$0xf]
        %v3338 = vld [vmem:[%s3334 + $0xc] sm:$0xf]
        %v3339 = vld [vmem:[%s3334 + $0x10] sm:$0xf]
        %v3340 = vld [vmem:[%s3334 + $0x14] sm:$0xf]
        %v3347 = vunpack.c.l.b16 %v3335
        %v3348 = vunpack.c.l.b16 %v3336
        %v3349 = vunpack.c.l.b16 %v3337
        %v3350 = vunpack.c.l.b16 %v3338
        %v3351 = vunpack.c.l.b16 %v3339
        %v3352 = vunpack.c.l.b16 %v3340
        %v3353 = vpack.c.b16 %v3348, %v3347
        %v3354 = vpack.c.b16 %v3350, %v3349
        %v3355 = vpack.c.b16 %v3352, %v3351
        %v3360 = vsel %vm1199, %v3331, 0
        %v3363 = vsel %vm1199, %v3332, 0
        %v3366 = vsel %vm1199, %v3333, 0
        %3368 = vmatprep.subr.bf16.mxu0 0
        %3369 = vmatpush1.bf16.msra.mxu0 0
        %3370 = vmatprep.subr.bf16.mxu0 0
        %3371 = vmatpush1.bf16.msra.mxu0 0
        %3372 = vmatprep.subr.bf16.mxu0 0
        %3373 = vmatpush1.bf16.msra.mxu0 0
        %3374 = vmatprep.subr.bf16.mxu0 0
        %3375 = vmatpush1.bf16.msra.mxu0 0
        %3376 = vmatprep.subr.bf16.mxu0 0
        %3377 = vmatpush1.bf16.msra.mxu0 0
        %3378 = vmatprep.subr.bf16.mxu0 0
        %3379 = vmatpush1.bf16.msra.mxu0 %v3355
        %3380 = vmatprep.subr.bf16.mxu0 0
        %3381 = vmatpush1.bf16.msra.mxu0 %v3354
        %3382 = vmatprep.subr.bf16.mxu0 0
        %3383 = vmatpush1.bf16.msra.mxu0 %v3353
        %3384 = vmatprep.subr.bf16.mxu0 0
        %3385 = vmatpush2.bf16.msra.mxu0 0
        %3386 = vmatprep.subr.bf16.mxu0 0
        %3387 = vmatpush2.bf16.msra.mxu0 0
        %3388 = vmatprep.subr.bf16.mxu0 0
        %3389 = vmatpush2.bf16.msra.mxu0 0
        %3390 = vmatprep.subr.bf16.mxu0 0
        %3391 = vmatpush2.bf16.msra.mxu0 0
        %3392 = vmatprep.subr.bf16.mxu0 0
        %3393 = vmatpush2.bf16.msra.mxu0 0
        %3394 = vmatprep.subr.bf16.mxu0 0
        %3395 = vmatpush2.bf16.msra.mxu0 0
        %3396 = vmatprep.subr.bf16.mxu0 0
        %3397 = vmatpush2.bf16.msra.mxu0 0
        %3398 = vmatprep.subr.bf16.mxu0 0
        %3399 = vmatpush2.bf16.msra.mxu0 0
        %3400 = vmatprep.mubr.bf16.mxu0 0
        %3401 = vmatmul.mubr.bf16.gmra.mxu0 %v3360
        %v3402 = vpop.f32.mrf.mxu0
        %v3403 = vadd.f32 0.0, %v3402
        %v3404 = vpop.f32.mrf.mxu0
        %v3405 = vpop.f32.mrf.mxu0
        %v3406 = vadd.f32 0.0, %v3405
        %v3407 = vpop.f32.mrf.mxu0
        %3408 = vmatprep.mubr.bf16.mxu0 0
        %3409 = vmatmul.mubr.bf16.gmra.mxu0 %v3363
        %v3410 = vpop.f32.mrf.mxu0
        %v3411 = vadd.f32 0.0, %v3410
        %v3412 = vpop.f32.mrf.mxu0
        %v3413 = vpop.f32.mrf.mxu0
        %v3414 = vadd.f32 0.0, %v3413
        %v3415 = vpop.f32.mrf.mxu0
        %3416 = vmatprep.mubr.bf16.mxu0 0
        %3417 = vmatmul.mubr.bf16.gmra.mxu0 %v3366
        %v3418 = vpop.f32.mrf.mxu0
        %v3419 = vadd.f32 0.0, %v3418
        %v3420 = vpop.f32.mrf.mxu0
        %v3421 = vpop.f32.mrf.mxu0
        %v3422 = vadd.f32 0.0, %v3421
        %v3423 = vpop.f32.mrf.mxu0
        %3424 = vdwg.mxu0
        %v3425 = vadd.f32 %v3313, %v3403
        %v3426 = vadd.f32 %v3314, %v3406
        %v3427 = vadd.f32 %v3315, %v3411
        %v3428 = vadd.f32 %v3316, %v3414
        %v3429 = vadd.f32 %v3317, %v3419
        %v3430 = vadd.f32 %v3318, %v3422
        %v3431 = vld [vmem:[#allocation3 + $0xf] sm:$0xff]
        %v3432 = vld [vmem:[#allocation3 + $0x17] sm:$0xff]
        %v3433 = vld [vmem:[#allocation3 + $0x1f] sm:$0xff]
        %v3434 = vld [vmem:[#allocation3 + $0x27] sm:$0xff]
        %v3435 = vld [vmem:[#allocation3 + $0x2f] sm:$0xff]
        %v3436 = vld [vmem:[#allocation3 + $0x37] sm:$0xff]
        %v3437 = vmul.f32 %v3431, %v1693
        %v3438 = vmul.f32 %v3432, %v1698
        %v3439 = vmul.f32 %v3433, %v1703
        %v3440 = vmul.f32 %v3434, %v1708
        %v3441 = vmul.f32 %v3435, %v1713
        %v3442 = vmul.f32 %v3436, %v1718
        %v3443 = vpack.c.bf16 %v3438, %v3437
        %v3444 = vpack.c.bf16 %v3440, %v3439
        %v3445 = vpack.c.bf16 %v3442, %v3441
        %s3446 = scalar_lea.vmem %s5, 432
        %v3447 = vld [vmem:[%s3446] sm:$0xf]
        %v3448 = vld [vmem:[%s3446 + $0x4] sm:$0xf]
        %v3449 = vld [vmem:[%s3446 + $0x8] sm:$0xf]
        %v3450 = vld [vmem:[%s3446 + $0xc] sm:$0xf]
        %v3451 = vld [vmem:[%s3446 + $0x10] sm:$0xf]
        %v3452 = vld [vmem:[%s3446 + $0x14] sm:$0xf]
        %v3459 = vunpack.c.l.b16 %v3447
        %v3460 = vunpack.c.l.b16 %v3448
        %v3461 = vunpack.c.l.b16 %v3449
        %v3462 = vunpack.c.l.b16 %v3450
        %v3463 = vunpack.c.l.b16 %v3451
        %v3464 = vunpack.c.l.b16 %v3452
        %v3465 = vpack.c.b16 %v3460, %v3459
        %v3466 = vpack.c.b16 %v3462, %v3461
        %v3467 = vpack.c.b16 %v3464, %v3463
        %v3472 = vsel %vm1199, %v3443, 0
        %v3475 = vsel %vm1199, %v3444, 0
        %v3478 = vsel %vm1199, %v3445, 0
        %3480 = vmatprep.subr.bf16.mxu0 0
        %3481 = vmatpush1.bf16.msra.mxu0 0
        %3482 = vmatprep.subr.bf16.mxu0 0
        %3483 = vmatpush1.bf16.msra.mxu0 0
        %3484 = vmatprep.subr.bf16.mxu0 0
        %3485 = vmatpush1.bf16.msra.mxu0 0
        %3486 = vmatprep.subr.bf16.mxu0 0
        %3487 = vmatpush1.bf16.msra.mxu0 0
        %3488 = vmatprep.subr.bf16.mxu0 0
        %3489 = vmatpush1.bf16.msra.mxu0 0
        %3490 = vmatprep.subr.bf16.mxu0 0
        %3491 = vmatpush1.bf16.msra.mxu0 %v3467
        %3492 = vmatprep.subr.bf16.mxu0 0
        %3493 = vmatpush1.bf16.msra.mxu0 %v3466
        %3494 = vmatprep.subr.bf16.mxu0 0
        %3495 = vmatpush1.bf16.msra.mxu0 %v3465
        %3496 = vmatprep.subr.bf16.mxu0 0
        %3497 = vmatpush2.bf16.msra.mxu0 0
        %3498 = vmatprep.subr.bf16.mxu0 0
        %3499 = vmatpush2.bf16.msra.mxu0 0
        %3500 = vmatprep.subr.bf16.mxu0 0
        %3501 = vmatpush2.bf16.msra.mxu0 0
        %3502 = vmatprep.subr.bf16.mxu0 0
        %3503 = vmatpush2.bf16.msra.mxu0 0
        %3504 = vmatprep.subr.bf16.mxu0 0
        %3505 = vmatpush2.bf16.msra.mxu0 0
        %3506 = vmatprep.subr.bf16.mxu0 0
        %3507 = vmatpush2.bf16.msra.mxu0 0
        %3508 = vmatprep.subr.bf16.mxu0 0
        %3509 = vmatpush2.bf16.msra.mxu0 0
        %3510 = vmatprep.subr.bf16.mxu0 0
        %3511 = vmatpush2.bf16.msra.mxu0 0
        %3512 = vmatprep.mubr.bf16.mxu0 0
        %3513 = vmatmul.mubr.bf16.gmra.mxu0 %v3472
        %v3514 = vpop.f32.mrf.mxu0
        %v3515 = vadd.f32 0.0, %v3514
        %v3516 = vpop.f32.mrf.mxu0
        %v3517 = vpop.f32.mrf.mxu0
        %v3518 = vadd.f32 0.0, %v3517
        %v3519 = vpop.f32.mrf.mxu0
        %3520 = vmatprep.mubr.bf16.mxu0 0
        %3521 = vmatmul.mubr.bf16.gmra.mxu0 %v3475
        %v3522 = vpop.f32.mrf.mxu0
        %v3523 = vadd.f32 0.0, %v3522
        %v3524 = vpop.f32.mrf.mxu0
        %v3525 = vpop.f32.mrf.mxu0
        %v3526 = vadd.f32 0.0, %v3525
        %v3527 = vpop.f32.mrf.mxu0
        %3528 = vmatprep.mubr.bf16.mxu0 0
        %3529 = vmatmul.mubr.bf16.gmra.mxu0 %v3478
        %v3530 = vpop.f32.mrf.mxu0
        %v3531 = vadd.f32 0.0, %v3530
        %v3532 = vpop.f32.mrf.mxu0
        %v3533 = vpop.f32.mrf.mxu0
        %v3534 = vadd.f32 0.0, %v3533
        %v3535 = vpop.f32.mrf.mxu0
        %3536 = vdwg.mxu0
        %v3537 = vadd.f32 %v3425, %v3515
        %v3538 = vadd.f32 %v3426, %v3518
        %v3539 = vadd.f32 %v3427, %v3523
        %v3540 = vadd.f32 %v3428, %v3526
        %v3541 = vadd.f32 %v3429, %v3531
        %v3542 = vadd.f32 %v3430, %v3534
        %v3543 = vld [vmem:[#allocation3 + $0x10] sm:$0xff]
        %v3544 = vld [vmem:[#allocation3 + $0x18] sm:$0xff]
        %v3545 = vld [vmem:[#allocation3 + $0x20] sm:$0xff]
        %v3546 = vld [vmem:[#allocation3 + $0x28] sm:$0xff]
        %v3547 = vld [vmem:[#allocation3 + $0x30] sm:$0xff]
        %v3548 = vld [vmem:[#allocation3 + $0x38] sm:$0xff]
        %v3549 = vmul.f32 %v3543, %v1842
        %v3550 = vmul.f32 %v3544, %v1847
        %v3551 = vmul.f32 %v3545, %v1852
        %v3552 = vmul.f32 %v3546, %v1857
        %v3553 = vmul.f32 %v3547, %v1862
        %v3554 = vmul.f32 %v3548, %v1867
        %v3555 = vpack.c.bf16 %v3550, %v3549
        %v3556 = vpack.c.bf16 %v3552, %v3551
        %v3557 = vpack.c.bf16 %v3554, %v3553
        %s3558 = scalar_lea.vmem %s5, 456
        %v3559 = vld [vmem:[%s3558] sm:$0xf]
        %v3560 = vld [vmem:[%s3558 + $0x4] sm:$0xf]
        %v3561 = vld [vmem:[%s3558 + $0x8] sm:$0xf]
        %v3562 = vld [vmem:[%s3558 + $0xc] sm:$0xf]
        %v3563 = vld [vmem:[%s3558 + $0x10] sm:$0xf]
        %v3564 = vld [vmem:[%s3558 + $0x14] sm:$0xf]
        %v3571 = vunpack.c.l.b16 %v3559
        %v3572 = vunpack.c.l.b16 %v3560
        %v3573 = vunpack.c.l.b16 %v3561
        %v3574 = vunpack.c.l.b16 %v3562
        %v3575 = vunpack.c.l.b16 %v3563
        %v3576 = vunpack.c.l.b16 %v3564
        %v3577 = vpack.c.b16 %v3572, %v3571
        %v3578 = vpack.c.b16 %v3574, %v3573
        %v3579 = vpack.c.b16 %v3576, %v3575
        %v3584 = vsel %vm1199, %v3555, 0
        %v3587 = vsel %vm1199, %v3556, 0
        %v3590 = vsel %vm1199, %v3557, 0
        %3592 = vmatprep.subr.bf16.mxu0 0
        %3593 = vmatpush1.bf16.msra.mxu0 0
        %3594 = vmatprep.subr.bf16.mxu0 0
        %3595 = vmatpush1.bf16.msra.mxu0 0
        %3596 = vmatprep.subr.bf16.mxu0 0
        %3597 = vmatpush1.bf16.msra.mxu0 0
        %3598 = vmatprep.subr.bf16.mxu0 0
        %3599 = vmatpush1.bf16.msra.mxu0 0
        %3600 = vmatprep.subr.bf16.mxu0 0
        %3601 = vmatpush1.bf16.msra.mxu0 0
        %3602 = vmatprep.subr.bf16.mxu0 0
        %3603 = vmatpush1.bf16.msra.mxu0 %v3579
        %3604 = vmatprep.subr.bf16.mxu0 0
        %3605 = vmatpush1.bf16.msra.mxu0 %v3578
        %3606 = vmatprep.subr.bf16.mxu0 0
        %3607 = vmatpush1.bf16.msra.mxu0 %v3577
        %3608 = vmatprep.subr.bf16.mxu0 0
        %3609 = vmatpush2.bf16.msra.mxu0 0
        %3610 = vmatprep.subr.bf16.mxu0 0
        %3611 = vmatpush2.bf16.msra.mxu0 0
        %3612 = vmatprep.subr.bf16.mxu0 0
        %3613 = vmatpush2.bf16.msra.mxu0 0
        %3614 = vmatprep.subr.bf16.mxu0 0
        %3615 = vmatpush2.bf16.msra.mxu0 0
        %3616 = vmatprep.subr.bf16.mxu0 0
        %3617 = vmatpush2.bf16.msra.mxu0 0
        %3618 = vmatprep.subr.bf16.mxu0 0
        %3619 = vmatpush2.bf16.msra.mxu0 0
        %3620 = vmatprep.subr.bf16.mxu0 0
        %3621 = vmatpush2.bf16.msra.mxu0 0
        %3622 = vmatprep.subr.bf16.mxu0 0
        %3623 = vmatpush2.bf16.msra.mxu0 0
        %3624 = vmatprep.mubr.bf16.mxu0 0
        %3625 = vmatmul.mubr.bf16.gmra.mxu0 %v3584
        %v3626 = vpop.f32.mrf.mxu0
        %v3627 = vadd.f32 0.0, %v3626
        %v3628 = vpop.f32.mrf.mxu0
        %v3629 = vpop.f32.mrf.mxu0
        %v3630 = vadd.f32 0.0, %v3629
        %v3631 = vpop.f32.mrf.mxu0
        %3632 = vmatprep.mubr.bf16.mxu0 0
        %3633 = vmatmul.mubr.bf16.gmra.mxu0 %v3587
        %v3634 = vpop.f32.mrf.mxu0
        %v3635 = vadd.f32 0.0, %v3634
        %v3636 = vpop.f32.mrf.mxu0
        %v3637 = vpop.f32.mrf.mxu0
        %v3638 = vadd.f32 0.0, %v3637
        %v3639 = vpop.f32.mrf.mxu0
        %3640 = vmatprep.mubr.bf16.mxu0 0
        %3641 = vmatmul.mubr.bf16.gmra.mxu0 %v3590
        %v3642 = vpop.f32.mrf.mxu0
        %v3643 = vadd.f32 0.0, %v3642
        %v3644 = vpop.f32.mrf.mxu0
        %v3645 = vpop.f32.mrf.mxu0
        %v3646 = vadd.f32 0.0, %v3645
        %v3647 = vpop.f32.mrf.mxu0
        %3648 = vdwg.mxu0
        %v3649 = vadd.f32 %v3537, %v3627
        %v3650 = vadd.f32 %v3538, %v3630
        %v3651 = vadd.f32 %v3539, %v3635
        %v3652 = vadd.f32 %v3540, %v3638
        %v3653 = vadd.f32 %v3541, %v3643
        %v3654 = vadd.f32 %v3542, %v3646
        %v3655 = vld [vmem:[#allocation2 + $0x18] sm:$0xff]
        %v3656 = vld [vmem:[#allocation2 + $0x20] sm:$0xff]
        %v3657 = vld [vmem:[#allocation2 + $0x28] sm:$0xff]
        %v3658 = vld [vmem:[#allocation2 + $0x30] sm:$0xff]
        %v3659 = vld [vmem:[#allocation2 + $0x38] sm:$0xff]
        %v3660 = vld [vmem:[#allocation2 + $0x40] sm:$0xff]
        %v3661 = vmul.f32 %v3655, %v1259
        %v3662 = vmul.f32 %v3656, %v1264
        %v3663 = vmul.f32 %v3657, %v1269
        %v3664 = vmul.f32 %v3658, %v1274
        %v3665 = vmul.f32 %v3659, %v1279
        %v3666 = vmul.f32 %v3660, %v1284
        %v3667 = vpack.c.bf16 %v3662, %v3661
        %v3668 = vpack.c.bf16 %v3664, %v3663
        %v3669 = vpack.c.bf16 %v3666, %v3665
        %s3670 = scalar_lea.vmem %s5, 480
        %v3671 = vld [vmem:[%s3670] sm:$0xf]
        %v3672 = vld [vmem:[%s3670 + $0x4] sm:$0xf]
        %v3673 = vld [vmem:[%s3670 + $0x8] sm:$0xf]
        %v3674 = vld [vmem:[%s3670 + $0xc] sm:$0xf]
        %v3675 = vld [vmem:[%s3670 + $0x10] sm:$0xf]
        %v3676 = vld [vmem:[%s3670 + $0x14] sm:$0xf]
        %v3683 = vunpack.c.l.b16 %v3671
        %v3684 = vunpack.c.l.b16 %v3672
        %v3685 = vunpack.c.l.b16 %v3673
        %v3686 = vunpack.c.l.b16 %v3674
        %v3687 = vunpack.c.l.b16 %v3675
        %v3688 = vunpack.c.l.b16 %v3676
        %v3689 = vpack.c.b16 %v3684, %v3683
        %v3690 = vpack.c.b16 %v3686, %v3685
        %v3691 = vpack.c.b16 %v3688, %v3687
        %v3696 = vsel %vm1199, %v3667, 0
        %v3699 = vsel %vm1199, %v3668, 0
        %v3702 = vsel %vm1199, %v3669, 0
        %3704 = vmatprep.subr.bf16.mxu0 0
        %3705 = vmatpush1.bf16.msra.mxu0 0
        %3706 = vmatprep.subr.bf16.mxu0 0
        %3707 = vmatpush1.bf16.msra.mxu0 0
        %3708 = vmatprep.subr.bf16.mxu0 0
        %3709 = vmatpush1.bf16.msra.mxu0 0
        %3710 = vmatprep.subr.bf16.mxu0 0
        %3711 = vmatpush1.bf16.msra.mxu0 0
        %3712 = vmatprep.subr.bf16.mxu0 0
        %3713 = vmatpush1.bf16.msra.mxu0 0
        %3714 = vmatprep.subr.bf16.mxu0 0
        %3715 = vmatpush1.bf16.msra.mxu0 %v3691
        %3716 = vmatprep.subr.bf16.mxu0 0
        %3717 = vmatpush1.bf16.msra.mxu0 %v3690
        %3718 = vmatprep.subr.bf16.mxu0 0
        %3719 = vmatpush1.bf16.msra.mxu0 %v3689
        %3720 = vmatprep.subr.bf16.mxu0 0
        %3721 = vmatpush2.bf16.msra.mxu0 0
        %3722 = vmatprep.subr.bf16.mxu0 0
        %3723 = vmatpush2.bf16.msra.mxu0 0
        %3724 = vmatprep.subr.bf16.mxu0 0
        %3725 = vmatpush2.bf16.msra.mxu0 0
        %3726 = vmatprep.subr.bf16.mxu0 0
        %3727 = vmatpush2.bf16.msra.mxu0 0
        %3728 = vmatprep.subr.bf16.mxu0 0
        %3729 = vmatpush2.bf16.msra.mxu0 0
        %3730 = vmatprep.subr.bf16.mxu0 0
        %3731 = vmatpush2.bf16.msra.mxu0 0
        %3732 = vmatprep.subr.bf16.mxu0 0
        %3733 = vmatpush2.bf16.msra.mxu0 0
        %3734 = vmatprep.subr.bf16.mxu0 0
        %3735 = vmatpush2.bf16.msra.mxu0 0
        %3736 = vmatprep.mubr.bf16.mxu0 0
        %3737 = vmatmul.mubr.bf16.gmra.mxu0 %v3696
        %v3738 = vpop.f32.mrf.mxu0
        %v3739 = vadd.f32 0.0, %v3738
        %v3740 = vpop.f32.mrf.mxu0
        %v3741 = vpop.f32.mrf.mxu0
        %v3742 = vadd.f32 0.0, %v3741
        %v3743 = vpop.f32.mrf.mxu0
        %3744 = vmatprep.mubr.bf16.mxu0 0
        %3745 = vmatmul.mubr.bf16.gmra.mxu0 %v3699
        %v3746 = vpop.f32.mrf.mxu0
        %v3747 = vadd.f32 0.0, %v3746
        %v3748 = vpop.f32.mrf.mxu0
        %v3749 = vpop.f32.mrf.mxu0
        %v3750 = vadd.f32 0.0, %v3749
        %v3751 = vpop.f32.mrf.mxu0
        %3752 = vmatprep.mubr.bf16.mxu0 0
        %3753 = vmatmul.mubr.bf16.gmra.mxu0 %v3702
        %v3754 = vpop.f32.mrf.mxu0
        %v3755 = vadd.f32 0.0, %v3754
        %v3756 = vpop.f32.mrf.mxu0
        %v3757 = vpop.f32.mrf.mxu0
        %v3758 = vadd.f32 0.0, %v3757
        %v3759 = vpop.f32.mrf.mxu0
        %3760 = vdwg.mxu0
        %v3761 = vadd.f32 %v3649, %v3739
        %v3762 = vadd.f32 %v3650, %v3742
        %v3763 = vadd.f32 %v3651, %v3747
        %v3764 = vadd.f32 %v3652, %v3750
        %v3765 = vadd.f32 %v3653, %v3755
        %v3766 = vadd.f32 %v3654, %v3758
        %v3767 = vld [vmem:[#allocation2 + $0x19] sm:$0xff]
        %v3768 = vld [vmem:[#allocation2 + $0x21] sm:$0xff]
        %v3769 = vld [vmem:[#allocation2 + $0x29] sm:$0xff]
        %v3770 = vld [vmem:[#allocation2 + $0x31] sm:$0xff]
        %v3771 = vld [vmem:[#allocation2 + $0x39] sm:$0xff]
        %v3772 = vld [vmem:[#allocation2 + $0x41] sm:$0xff]
        %v3773 = vmul.f32 %v3767, %v1317
        %v3774 = vmul.f32 %v3768, %v1322
        %v3775 = vmul.f32 %v3769, %v1327
        %v3776 = vmul.f32 %v3770, %v1332
        %v3777 = vmul.f32 %v3771, %v1337
        %v3778 = vmul.f32 %v3772, %v1342
        %v3779 = vpack.c.bf16 %v3774, %v3773
        %v3780 = vpack.c.bf16 %v3776, %v3775
        %v3781 = vpack.c.bf16 %v3778, %v3777
        %s3782 = scalar_lea.vmem %s5, 504
        %v3783 = vld [vmem:[%s3782] sm:$0xf]
        %v3784 = vld [vmem:[%s3782 + $0x4] sm:$0xf]
        %v3785 = vld [vmem:[%s3782 + $0x8] sm:$0xf]
        %v3786 = vld [vmem:[%s3782 + $0xc] sm:$0xf]
        %v3787 = vld [vmem:[%s3782 + $0x10] sm:$0xf]
        %v3788 = vld [vmem:[%s3782 + $0x14] sm:$0xf]
        %v3795 = vunpack.c.l.b16 %v3783
        %v3796 = vunpack.c.l.b16 %v3784
        %v3797 = vunpack.c.l.b16 %v3785
        %v3798 = vunpack.c.l.b16 %v3786
        %v3799 = vunpack.c.l.b16 %v3787
        %v3800 = vunpack.c.l.b16 %v3788
        %v3801 = vpack.c.b16 %v3796, %v3795
        %v3802 = vpack.c.b16 %v3798, %v3797
        %v3803 = vpack.c.b16 %v3800, %v3799
        %v3808 = vsel %vm1199, %v3779, 0
        %v3811 = vsel %vm1199, %v3780, 0
        %v3814 = vsel %vm1199, %v3781, 0
        %3816 = vmatprep.subr.bf16.mxu0 0
        %3817 = vmatpush1.bf16.msra.mxu0 0
        %3818 = vmatprep.subr.bf16.mxu0 0
        %3819 = vmatpush1.bf16.msra.mxu0 0
        %3820 = vmatprep.subr.bf16.mxu0 0
        %3821 = vmatpush1.bf16.msra.mxu0 0
        %3822 = vmatprep.subr.bf16.mxu0 0
        %3823 = vmatpush1.bf16.msra.mxu0 0
        %3824 = vmatprep.subr.bf16.mxu0 0
        %3825 = vmatpush1.bf16.msra.mxu0 0
        %3826 = vmatprep.subr.bf16.mxu0 0
        %3827 = vmatpush1.bf16.msra.mxu0 %v3803
        %3828 = vmatprep.subr.bf16.mxu0 0
        %3829 = vmatpush1.bf16.msra.mxu0 %v3802
        %3830 = vmatprep.subr.bf16.mxu0 0
        %3831 = vmatpush1.bf16.msra.mxu0 %v3801
        %3832 = vmatprep.subr.bf16.mxu0 0
        %3833 = vmatpush2.bf16.msra.mxu0 0
        %3834 = vmatprep.subr.bf16.mxu0 0
        %3835 = vmatpush2.bf16.msra.mxu0 0
        %3836 = vmatprep.subr.bf16.mxu0 0
        %3837 = vmatpush2.bf16.msra.mxu0 0
        %3838 = vmatprep.subr.bf16.mxu0 0
        %3839 = vmatpush2.bf16.msra.mxu0 0
        %3840 = vmatprep.subr.bf16.mxu0 0
        %3841 = vmatpush2.bf16.msra.mxu0 0
        %3842 = vmatprep.subr.bf16.mxu0 0
        %3843 = vmatpush2.bf16.msra.mxu0 0
        %3844 = vmatprep.subr.bf16.mxu0 0
        %3845 = vmatpush2.bf16.msra.mxu0 0
        %3846 = vmatprep.subr.bf16.mxu0 0
        %3847 = vmatpush2.bf16.msra.mxu0 0
        %3848 = vmatprep.mubr.bf16.mxu0 0
        %3849 = vmatmul.mubr.bf16.gmra.mxu0 %v3808
        %v3850 = vpop.f32.mrf.mxu0
        %v3851 = vadd.f32 0.0, %v3850
        %v3852 = vpop.f32.mrf.mxu0
        %v3853 = vpop.f32.mrf.mxu0
        %v3854 = vadd.f32 0.0, %v3853
        %v3855 = vpop.f32.mrf.mxu0
        %3856 = vmatprep.mubr.bf16.mxu0 0
        %3857 = vmatmul.mubr.bf16.gmra.mxu0 %v3811
        %v3858 = vpop.f32.mrf.mxu0
        %v3859 = vadd.f32 0.0, %v3858
        %v3860 = vpop.f32.mrf.mxu0
        %v3861 = vpop.f32.mrf.mxu0
        %v3862 = vadd.f32 0.0, %v3861
        %v3863 = vpop.f32.mrf.mxu0
        %3864 = vmatprep.mubr.bf16.mxu0 0
        %3865 = vmatmul.mubr.bf16.gmra.mxu0 %v3814
        %v3866 = vpop.f32.mrf.mxu0
        %v3867 = vadd.f32 0.0, %v3866
        %v3868 = vpop.f32.mrf.mxu0
        %v3869 = vpop.f32.mrf.mxu0
        %v3870 = vadd.f32 0.0, %v3869
        %v3871 = vpop.f32.mrf.mxu0
        %3872 = vdwg.mxu0
        %v3873 = vadd.f32 %v3761, %v3851
        %v3874 = vadd.f32 %v3762, %v3854
        %v3875 = vadd.f32 %v3763, %v3859
        %v3876 = vadd.f32 %v3764, %v3862
        %v3877 = vadd.f32 %v3765, %v3867
        %v3878 = vadd.f32 %v3766, %v3870
        %v3879 = vld [vmem:[#allocation2 + $0x1a] sm:$0xff]
        %v3880 = vld [vmem:[#allocation2 + $0x22] sm:$0xff]
        %v3881 = vld [vmem:[#allocation2 + $0x2a] sm:$0xff]
        %v3882 = vld [vmem:[#allocation2 + $0x32] sm:$0xff]
        %v3883 = vld [vmem:[#allocation2 + $0x3a] sm:$0xff]
        %v3884 = vld [vmem:[#allocation2 + $0x42] sm:$0xff]
        %v3885 = vmul.f32 %v3879, %v1544
        %v3886 = vmul.f32 %v3880, %v1549
        %v3887 = vmul.f32 %v3881, %v1554
        %v3888 = vmul.f32 %v3882, %v1559
        %v3889 = vmul.f32 %v3883, %v1564
        %v3890 = vmul.f32 %v3884, %v1569
        %v3891 = vpack.c.bf16 %v3886, %v3885
        %v3892 = vpack.c.bf16 %v3888, %v3887
        %v3893 = vpack.c.bf16 %v3890, %v3889
        %s3894 = scalar_lea.vmem %s5, 528
        %v3895 = vld [vmem:[%s3894] sm:$0xf]
        %v3896 = vld [vmem:[%s3894 + $0x4] sm:$0xf]
        %v3897 = vld [vmem:[%s3894 + $0x8] sm:$0xf]
        %v3898 = vld [vmem:[%s3894 + $0xc] sm:$0xf]
        %v3899 = vld [vmem:[%s3894 + $0x10] sm:$0xf]
        %v3900 = vld [vmem:[%s3894 + $0x14] sm:$0xf]
        %v3907 = vunpack.c.l.b16 %v3895
        %v3908 = vunpack.c.l.b16 %v3896
        %v3909 = vunpack.c.l.b16 %v3897
        %v3910 = vunpack.c.l.b16 %v3898
        %v3911 = vunpack.c.l.b16 %v3899
        %v3912 = vunpack.c.l.b16 %v3900
        %v3913 = vpack.c.b16 %v3908, %v3907
        %v3914 = vpack.c.b16 %v3910, %v3909
        %v3915 = vpack.c.b16 %v3912, %v3911
        %v3920 = vsel %vm1199, %v3891, 0
        %v3923 = vsel %vm1199, %v3892, 0
        %v3926 = vsel %vm1199, %v3893, 0
        %3928 = vmatprep.subr.bf16.mxu0 0
        %3929 = vmatpush1.bf16.msra.mxu0 0
        %3930 = vmatprep.subr.bf16.mxu0 0
        %3931 = vmatpush1.bf16.msra.mxu0 0
        %3932 = vmatprep.subr.bf16.mxu0 0
        %3933 = vmatpush1.bf16.msra.mxu0 0
        %3934 = vmatprep.subr.bf16.mxu0 0
        %3935 = vmatpush1.bf16.msra.mxu0 0
        %3936 = vmatprep.subr.bf16.mxu0 0
        %3937 = vmatpush1.bf16.msra.mxu0 0
        %3938 = vmatprep.subr.bf16.mxu0 0
        %3939 = vmatpush1.bf16.msra.mxu0 %v3915
        %3940 = vmatprep.subr.bf16.mxu0 0
        %3941 = vmatpush1.bf16.msra.mxu0 %v3914
        %3942 = vmatprep.subr.bf16.mxu0 0
        %3943 = vmatpush1.bf16.msra.mxu0 %v3913
        %3944 = vmatprep.subr.bf16.mxu0 0
        %3945 = vmatpush2.bf16.msra.mxu0 0
        %3946 = vmatprep.subr.bf16.mxu0 0
        %3947 = vmatpush2.bf16.msra.mxu0 0
        %3948 = vmatprep.subr.bf16.mxu0 0
        %3949 = vmatpush2.bf16.msra.mxu0 0
        %3950 = vmatprep.subr.bf16.mxu0 0
        %3951 = vmatpush2.bf16.msra.mxu0 0
        %3952 = vmatprep.subr.bf16.mxu0 0
        %3953 = vmatpush2.bf16.msra.mxu0 0
        %3954 = vmatprep.subr.bf16.mxu0 0
        %3955 = vmatpush2.bf16.msra.mxu0 0
        %3956 = vmatprep.subr.bf16.mxu0 0
        %3957 = vmatpush2.bf16.msra.mxu0 0
        %3958 = vmatprep.subr.bf16.mxu0 0
        %3959 = vmatpush2.bf16.msra.mxu0 0
        %3960 = vmatprep.mubr.bf16.mxu0 0
        %3961 = vmatmul.mubr.bf16.gmra.mxu0 %v3920
        %v3962 = vpop.f32.mrf.mxu0
        %v3963 = vadd.f32 0.0, %v3962
        %v3964 = vpop.f32.mrf.mxu0
        %v3965 = vpop.f32.mrf.mxu0
        %v3966 = vadd.f32 0.0, %v3965
        %v3967 = vpop.f32.mrf.mxu0
        %3968 = vmatprep.mubr.bf16.mxu0 0
        %3969 = vmatmul.mubr.bf16.gmra.mxu0 %v3923
        %v3970 = vpop.f32.mrf.mxu0
        %v3971 = vadd.f32 0.0, %v3970
        %v3972 = vpop.f32.mrf.mxu0
        %v3973 = vpop.f32.mrf.mxu0
        %v3974 = vadd.f32 0.0, %v3973
        %v3975 = vpop.f32.mrf.mxu0
        %3976 = vmatprep.mubr.bf16.mxu0 0
        %3977 = vmatmul.mubr.bf16.gmra.mxu0 %v3926
        %v3978 = vpop.f32.mrf.mxu0
        %v3979 = vadd.f32 0.0, %v3978
        %v3980 = vpop.f32.mrf.mxu0
        %v3981 = vpop.f32.mrf.mxu0
        %v3982 = vadd.f32 0.0, %v3981
        %v3983 = vpop.f32.mrf.mxu0
        %3984 = vdwg.mxu0
        %v3985 = vadd.f32 %v3873, %v3963
        %v3986 = vadd.f32 %v3874, %v3966
        %v3987 = vadd.f32 %v3875, %v3971
        %v3988 = vadd.f32 %v3876, %v3974
        %v3989 = vadd.f32 %v3877, %v3979
        %v3990 = vadd.f32 %v3878, %v3982
        %v3991 = vld [vmem:[#allocation2 + $0x1b] sm:$0xff]
        %v3992 = vld [vmem:[#allocation2 + $0x23] sm:$0xff]
        %v3993 = vld [vmem:[#allocation2 + $0x2b] sm:$0xff]
        %v3994 = vld [vmem:[#allocation2 + $0x33] sm:$0xff]
        %v3995 = vld [vmem:[#allocation2 + $0x3b] sm:$0xff]
        %v3996 = vld [vmem:[#allocation2 + $0x43] sm:$0xff]
        %v3997 = vmul.f32 %v3991, %v1693
        %v3998 = vmul.f32 %v3992, %v1698
        %v3999 = vmul.f32 %v3993, %v1703
        %v4000 = vmul.f32 %v3994, %v1708
        %v4001 = vmul.f32 %v3995, %v1713
        %v4002 = vmul.f32 %v3996, %v1718
        %v4003 = vpack.c.bf16 %v3998, %v3997
        %v4004 = vpack.c.bf16 %v4000, %v3999
        %v4005 = vpack.c.bf16 %v4002, %v4001
        %s4006 = scalar_lea.vmem %s5, 552
        %v4007 = vld [vmem:[%s4006] sm:$0xf]
        %v4008 = vld [vmem:[%s4006 + $0x4] sm:$0xf]
        %v4009 = vld [vmem:[%s4006 + $0x8] sm:$0xf]
        %v4010 = vld [vmem:[%s4006 + $0xc] sm:$0xf]
        %v4011 = vld [vmem:[%s4006 + $0x10] sm:$0xf]
        %v4012 = vld [vmem:[%s4006 + $0x14] sm:$0xf]
        %v4019 = vunpack.c.l.b16 %v4007
        %v4020 = vunpack.c.l.b16 %v4008
        %v4021 = vunpack.c.l.b16 %v4009
        %v4022 = vunpack.c.l.b16 %v4010
        %v4023 = vunpack.c.l.b16 %v4011
        %v4024 = vunpack.c.l.b16 %v4012
        %v4025 = vpack.c.b16 %v4020, %v4019
        %v4026 = vpack.c.b16 %v4022, %v4021
        %v4027 = vpack.c.b16 %v4024, %v4023
        %v4032 = vsel %vm1199, %v4003, 0
        %v4035 = vsel %vm1199, %v4004, 0
        %v4038 = vsel %vm1199, %v4005, 0
        %4040 = vmatprep.subr.bf16.mxu0 0
        %4041 = vmatpush1.bf16.msra.mxu0 0
        %4042 = vmatprep.subr.bf16.mxu0 0
        %4043 = vmatpush1.bf16.msra.mxu0 0
        %4044 = vmatprep.subr.bf16.mxu0 0
        %4045 = vmatpush1.bf16.msra.mxu0 0
        %4046 = vmatprep.subr.bf16.mxu0 0
        %4047 = vmatpush1.bf16.msra.mxu0 0
        %4048 = vmatprep.subr.bf16.mxu0 0
        %4049 = vmatpush1.bf16.msra.mxu0 0
        %4050 = vmatprep.subr.bf16.mxu0 0
        %4051 = vmatpush1.bf16.msra.mxu0 %v4027
        %4052 = vmatprep.subr.bf16.mxu0 0
        %4053 = vmatpush1.bf16.msra.mxu0 %v4026
        %4054 = vmatprep.subr.bf16.mxu0 0
        %4055 = vmatpush1.bf16.msra.mxu0 %v4025
        %4056 = vmatprep.subr.bf16.mxu0 0
        %4057 = vmatpush2.bf16.msra.mxu0 0
        %4058 = vmatprep.subr.bf16.mxu0 0
        %4059 = vmatpush2.bf16.msra.mxu0 0
        %4060 = vmatprep.subr.bf16.mxu0 0
        %4061 = vmatpush2.bf16.msra.mxu0 0
        %4062 = vmatprep.subr.bf16.mxu0 0
        %4063 = vmatpush2.bf16.msra.mxu0 0
        %4064 = vmatprep.subr.bf16.mxu0 0
        %4065 = vmatpush2.bf16.msra.mxu0 0
        %4066 = vmatprep.subr.bf16.mxu0 0
        %4067 = vmatpush2.bf16.msra.mxu0 0
        %4068 = vmatprep.subr.bf16.mxu0 0
        %4069 = vmatpush2.bf16.msra.mxu0 0
        %4070 = vmatprep.subr.bf16.mxu0 0
        %4071 = vmatpush2.bf16.msra.mxu0 0
        %4072 = vmatprep.mubr.bf16.mxu0 0
        %4073 = vmatmul.mubr.bf16.gmra.mxu0 %v4032
        %v4074 = vpop.f32.mrf.mxu0
        %v4075 = vadd.f32 0.0, %v4074
        %v4076 = vpop.f32.mrf.mxu0
        %v4077 = vpop.f32.mrf.mxu0
        %v4078 = vadd.f32 0.0, %v4077
        %v4079 = vpop.f32.mrf.mxu0
        %4080 = vmatprep.mubr.bf16.mxu0 0
        %4081 = vmatmul.mubr.bf16.gmra.mxu0 %v4035
        %v4082 = vpop.f32.mrf.mxu0
        %v4083 = vadd.f32 0.0, %v4082
        %v4084 = vpop.f32.mrf.mxu0
        %v4085 = vpop.f32.mrf.mxu0
        %v4086 = vadd.f32 0.0, %v4085
        %v4087 = vpop.f32.mrf.mxu0
        %4088 = vmatprep.mubr.bf16.mxu0 0
        %4089 = vmatmul.mubr.bf16.gmra.mxu0 %v4038
        %v4090 = vpop.f32.mrf.mxu0
        %v4091 = vadd.f32 0.0, %v4090
        %v4092 = vpop.f32.mrf.mxu0
        %v4093 = vpop.f32.mrf.mxu0
        %v4094 = vadd.f32 0.0, %v4093
        %v4095 = vpop.f32.mrf.mxu0
        %4096 = vdwg.mxu0
        %v4097 = vadd.f32 %v3985, %v4075
        %v4098 = vadd.f32 %v3986, %v4078
        %v4099 = vadd.f32 %v3987, %v4083
        %v4100 = vadd.f32 %v3988, %v4086
        %v4101 = vadd.f32 %v3989, %v4091
        %v4102 = vadd.f32 %v3990, %v4094
        %v4103 = vld [vmem:[#allocation2 + $0x1c] sm:$0xff]
        %v4104 = vld [vmem:[#allocation2 + $0x24] sm:$0xff]
        %v4105 = vld [vmem:[#allocation2 + $0x2c] sm:$0xff]
        %v4106 = vld [vmem:[#allocation2 + $0x34] sm:$0xff]
        %v4107 = vld [vmem:[#allocation2 + $0x3c] sm:$0xff]
        %v4108 = vld [vmem:[#allocation2 + $0x44] sm:$0xff]
        %v4109 = vmul.f32 %v4103, %v1842
        %v4110 = vmul.f32 %v4104, %v1847
        %v4111 = vmul.f32 %v4105, %v1852
        %v4112 = vmul.f32 %v4106, %v1857
        %v4113 = vmul.f32 %v4107, %v1862
        %v4114 = vmul.f32 %v4108, %v1867
        %v4115 = vpack.c.bf16 %v4110, %v4109
        %v4116 = vpack.c.bf16 %v4112, %v4111
        %v4117 = vpack.c.bf16 %v4114, %v4113
        %s4118 = scalar_lea.vmem %s5, 576
        %v4119 = vld [vmem:[%s4118] sm:$0xf]
        %v4120 = vld [vmem:[%s4118 + $0x4] sm:$0xf]
        %v4121 = vld [vmem:[%s4118 + $0x8] sm:$0xf]
        %v4122 = vld [vmem:[%s4118 + $0xc] sm:$0xf]
        %v4123 = vld [vmem:[%s4118 + $0x10] sm:$0xf]
        %v4124 = vld [vmem:[%s4118 + $0x14] sm:$0xf]
        %v4131 = vunpack.c.l.b16 %v4119
        %v4132 = vunpack.c.l.b16 %v4120
        %v4133 = vunpack.c.l.b16 %v4121
        %v4134 = vunpack.c.l.b16 %v4122
        %v4135 = vunpack.c.l.b16 %v4123
        %v4136 = vunpack.c.l.b16 %v4124
        %v4137 = vpack.c.b16 %v4132, %v4131
        %v4138 = vpack.c.b16 %v4134, %v4133
        %v4139 = vpack.c.b16 %v4136, %v4135
        %v4144 = vsel %vm1199, %v4115, 0
        %v4147 = vsel %vm1199, %v4116, 0
        %v4150 = vsel %vm1199, %v4117, 0
        %4152 = vmatprep.subr.bf16.mxu0 0
        %4153 = vmatpush1.bf16.msra.mxu0 0
        %4154 = vmatprep.subr.bf16.mxu0 0
        %4155 = vmatpush1.bf16.msra.mxu0 0
        %4156 = vmatprep.subr.bf16.mxu0 0
        %4157 = vmatpush1.bf16.msra.mxu0 0
        %4158 = vmatprep.subr.bf16.mxu0 0
        %4159 = vmatpush1.bf16.msra.mxu0 0
        %4160 = vmatprep.subr.bf16.mxu0 0
        %4161 = vmatpush1.bf16.msra.mxu0 0
        %4162 = vmatprep.subr.bf16.mxu0 0
        %4163 = vmatpush1.bf16.msra.mxu0 %v4139
        %4164 = vmatprep.subr.bf16.mxu0 0
        %4165 = vmatpush1.bf16.msra.mxu0 %v4138
        %4166 = vmatprep.subr.bf16.mxu0 0
        %4167 = vmatpush1.bf16.msra.mxu0 %v4137
        %4168 = vmatprep.subr.bf16.mxu0 0
        %4169 = vmatpush2.bf16.msra.mxu0 0
        %4170 = vmatprep.subr.bf16.mxu0 0
        %4171 = vmatpush2.bf16.msra.mxu0 0
        %4172 = vmatprep.subr.bf16.mxu0 0
        %4173 = vmatpush2.bf16.msra.mxu0 0
        %4174 = vmatprep.subr.bf16.mxu0 0
        %4175 = vmatpush2.bf16.msra.mxu0 0
        %4176 = vmatprep.subr.bf16.mxu0 0
        %4177 = vmatpush2.bf16.msra.mxu0 0
        %4178 = vmatprep.subr.bf16.mxu0 0
        %4179 = vmatpush2.bf16.msra.mxu0 0
        %4180 = vmatprep.subr.bf16.mxu0 0
        %4181 = vmatpush2.bf16.msra.mxu0 0
        %4182 = vmatprep.subr.bf16.mxu0 0
        %4183 = vmatpush2.bf16.msra.mxu0 0
        %4184 = vmatprep.mubr.bf16.mxu0 0
        %4185 = vmatmul.mubr.bf16.gmra.mxu0 %v4144
        %v4186 = vpop.f32.mrf.mxu0
        %v4187 = vadd.f32 0.0, %v4186
        %v4188 = vpop.f32.mrf.mxu0
        %v4189 = vpop.f32.mrf.mxu0
        %v4190 = vadd.f32 0.0, %v4189
        %v4191 = vpop.f32.mrf.mxu0
        %4192 = vmatprep.mubr.bf16.mxu0 0
        %4193 = vmatmul.mubr.bf16.gmra.mxu0 %v4147
        %v4194 = vpop.f32.mrf.mxu0
        %v4195 = vadd.f32 0.0, %v4194
        %v4196 = vpop.f32.mrf.mxu0
        %v4197 = vpop.f32.mrf.mxu0
        %v4198 = vadd.f32 0.0, %v4197
        %v4199 = vpop.f32.mrf.mxu0
        %4200 = vmatprep.mubr.bf16.mxu0 0
        %4201 = vmatmul.mubr.bf16.gmra.mxu0 %v4150
        %v4202 = vpop.f32.mrf.mxu0
        %v4203 = vadd.f32 0.0, %v4202
        %v4204 = vpop.f32.mrf.mxu0
        %v4205 = vpop.f32.mrf.mxu0
        %v4206 = vadd.f32 0.0, %v4205
        %v4207 = vpop.f32.mrf.mxu0
        %4208 = vdwg.mxu0
        %v4209 = vadd.f32 %v4097, %v4187
        %v4210 = vadd.f32 %v4098, %v4190
        %v4211 = vadd.f32 %v4099, %v4195
        %v4212 = vadd.f32 %v4100, %v4198
        %v4213 = vadd.f32 %v4101, %v4203
        %v4214 = vadd.f32 %v4102, %v4206
        %v4215 = vld [vmem:[%s6] sm:$0x1]
        %v4217 = vlaneseq
        %v4218 = vshrl.u32 %v4217, 7
        %v4219 = vsub.s32 0, %v4218
        %v4220 = vrot.slane %v4215, %v4219
        %v4222 = vadd.f32 %v4209, %v4220
        %v4223 = vadd.f32 %v4210, %v4220
        %v4224 = vadd.f32 %v4211, %v4220
        %v4225 = vadd.f32 %v4212, %v4220
        %v4226 = vadd.f32 %v4213, %v4220
        %v4227 = vadd.f32 %v4214, %v4220
        %v4228 = vmax.f32 %v4222, 0.0
        %v4229 = vmax.f32 %v4223, 0.0
        %v4230 = vmax.f32 %v4224, 0.0
        %v4231 = vmax.f32 %v4225, 0.0
        %v4232 = vmax.f32 %v4226, 0.0
        %v4233 = vmax.f32 %v4227, 0.0
        %vm4236 = vcmask 1043456
        %v4237 = vrot.slane %v4229, 4
        %v4238 = vrot.slane %v4230, 4
        %v4239 = vsel %vm4236, %v4237, %v4238
        %v4242 = vmax.f32 %v4228, %v4239
        %v4243 = vmax.f32 %v4229, %v4238
        %v4246 = vrot.slane %v4232, 4
        %v4247 = vrot.slane %v4233, 4
        %v4248 = vsel %vm4236, %v4246, %v4247
        %v4251 = vmax.f32 %v4231, %v4248
        %v4252 = vmax.f32 %v4232, %v4247
        %v4254 = vrot.slane %v4242, 1
        %v4256 = vmax.f32 %v4242, %v4254
        %v4257 = vld [vmem:[%s7] sm:$0x1]
        %v4258 = vmul.f32 %v4256, %v4257
        %v4259 = vld [vmem:[%s8] sm:$0x1]
        %v4260 = vadd.f32 %v4258, %v4259
        %v4261 = vpack.c.bf16 %v4260, %v4260
        %v4262 = vld [vmem:[%s10] sm:$0xf]
        %v4263 = vld [vmem:[%s10 + $0x4] sm:$0xf]
        %v4264 = vld [vmem:[%s10 + $0x8] sm:$0xf]
        %v4265 = vld [vmem:[%s10 + $0xc] sm:$0xf]
        %v4266 = vld [vmem:[%s10 + $0x10] sm:$0xf]
        %v4267 = vld [vmem:[%s10 + $0x14] sm:$0xf]
        %v4268 = vld [vmem:[%s10 + $0x18] sm:$0xf]
        %v4269 = vld [vmem:[%s10 + $0x1c] sm:$0xf]
        %v4271 = vlaneseq
        %v4272 = vshrl.u32 %v4271, 7
        %v4273 = vsub.s32 0, %v4272
        %v4274 = vrot.slane %v4257, %v4273
        %v4276 = vmul.f32 %v4256, %v4274
        %v4278 = vlaneseq
        %v4279 = vshrl.u32 %v4278, 7
        %v4280 = vsub.s32 0, %v4279
        %v4281 = vrot.slane %v4259, %v4280
        %v4283 = vadd.f32 %v4276, %v4281
        %v4284 = vpack.c.bf16 %v4283, %v4283
        %s4285 = scalar_lea.vmem %s10, 32
        %v4286 = vld [vmem:[%s4285] sm:$0xf]
        %v4287 = vld [vmem:[%s4285 + $0x4] sm:$0xf]
        %v4288 = vld [vmem:[%s4285 + $0x8] sm:$0xf]
        %v4289 = vld [vmem:[%s4285 + $0xc] sm:$0xf]
        %v4290 = vld [vmem:[%s4285 + $0x10] sm:$0xf]
        %v4291 = vld [vmem:[%s4285 + $0x14] sm:$0xf]
        %v4292 = vld [vmem:[%s4285 + $0x18] sm:$0xf]
        %v4293 = vld [vmem:[%s4285 + $0x1c] sm:$0xf]
        %v4295 = vrot.slane %v4284, 1
        %v4304 = vunpack.c.l.b16 %v4286
        %v4305 = vunpack.c.l.b16 %v4287
        %v4306 = vunpack.c.l.b16 %v4288
        %v4307 = vunpack.c.l.b16 %v4289
        %v4308 = vunpack.c.l.b16 %v4290
        %v4309 = vunpack.c.l.b16 %v4291
        %v4310 = vunpack.c.l.b16 %v4292
        %v4311 = vunpack.c.l.b16 %v4293
        %v4312 = vpack.c.b16 %v4305, %v4304
        %v4313 = vpack.c.b16 %v4307, %v4306
        %v4314 = vpack.c.b16 %v4309, %v4308
        %v4315 = vpack.c.b16 %v4311, %v4310
        %vm4320 = vcmask 523264
        %v4322 = vsel %vm4320, %v4295, 0
        %4324 = vmatprep.subr.bf16.mxu0 0
        %4325 = vmatpush1.bf16.msra.mxu0 0
        %4326 = vmatprep.subr.bf16.mxu0 0
        %4327 = vmatpush1.bf16.msra.mxu0 0
        %4328 = vmatprep.subr.bf16.mxu0 0
        %4329 = vmatpush1.bf16.msra.mxu0 0
        %4330 = vmatprep.subr.bf16.mxu0 0
        %4331 = vmatpush1.bf16.msra.mxu0 0
        %4332 = vmatprep.subr.bf16.mxu0 0
        %4333 = vmatpush1.bf16.msra.mxu0 %v4315
        %4334 = vmatprep.subr.bf16.mxu0 0
        %4335 = vmatpush1.bf16.msra.mxu0 %v4314
        %4336 = vmatprep.subr.bf16.mxu0 0
        %4337 = vmatpush1.bf16.msra.mxu0 %v4313
        %4338 = vmatprep.subr.bf16.mxu0 0
        %4339 = vmatpush1.bf16.msra.mxu0 %v4312
        %4340 = vmatprep.subr.bf16.mxu0 0
        %4341 = vmatpush2.bf16.msra.mxu0 0
        %4342 = vmatprep.subr.bf16.mxu0 0
        %4343 = vmatpush2.bf16.msra.mxu0 0
        %4344 = vmatprep.subr.bf16.mxu0 0
        %4345 = vmatpush2.bf16.msra.mxu0 0
        %4346 = vmatprep.subr.bf16.mxu0 0
        %4347 = vmatpush2.bf16.msra.mxu0 0
        %4348 = vmatprep.subr.bf16.mxu0 0
        %4349 = vmatpush2.bf16.msra.mxu0 0
        %4350 = vmatprep.subr.bf16.mxu0 0
        %4351 = vmatpush2.bf16.msra.mxu0 0
        %4352 = vmatprep.subr.bf16.mxu0 0
        %4353 = vmatpush2.bf16.msra.mxu0 0
        %4354 = vmatprep.subr.bf16.mxu0 0
        %4355 = vmatpush2.bf16.msra.mxu0 0
        %4356 = vmatprep.mubr.bf16.mxu0 0
        %4357 = vmatmul.mubr.bf16.gmra.mxu0 %v4322
        %v4358 = vpop.f32.mrf.mxu0
        %v4359 = vadd.f32 0.0, %v4358
        %v4360 = vpop.f32.mrf.mxu0
        %v4361 = vpop.f32.mrf.mxu0
        %v4362 = vpop.f32.mrf.mxu0
        %4363 = vdwg.mxu0
        %v4372 = vunpack.c.l.b16 %v4262
        %v4373 = vunpack.c.l.b16 %v4263
        %v4374 = vunpack.c.l.b16 %v4264
        %v4375 = vunpack.c.l.b16 %v4265
        %v4376 = vunpack.c.l.b16 %v4266
        %v4377 = vunpack.c.l.b16 %v4267
        %v4378 = vunpack.c.l.b16 %v4268
        %v4379 = vunpack.c.l.b16 %v4269
        %v4380 = vpack.c.b16 %v4373, %v4372
        %v4381 = vpack.c.b16 %v4375, %v4374
        %v4382 = vpack.c.b16 %v4377, %v4376
        %v4383 = vpack.c.b16 %v4379, %v4378
        %v4389 = vsel %vm4320, %v4261, 0
        %4391 = vmatprep.subr.bf16.mxu0 0
        %4392 = vmatpush1.bf16.msra.mxu0 0
        %4393 = vmatprep.subr.bf16.mxu0 0
        %4394 = vmatpush1.bf16.msra.mxu0 0
        %4395 = vmatprep.subr.bf16.mxu0 0
        %4396 = vmatpush1.bf16.msra.mxu0 0
        %4397 = vmatprep.subr.bf16.mxu0 0
        %4398 = vmatpush1.bf16.msra.mxu0 0
        %4399 = vmatprep.subr.bf16.mxu0 0
        %4400 = vmatpush1.bf16.msra.mxu0 %v4383
        %4401 = vmatprep.subr.bf16.mxu0 0
        %4402 = vmatpush1.bf16.msra.mxu0 %v4382
        %4403 = vmatprep.subr.bf16.mxu0 0
        %4404 = vmatpush1.bf16.msra.mxu0 %v4381
        %4405 = vmatprep.subr.bf16.mxu0 0
        %4406 = vmatpush1.bf16.msra.mxu0 %v4380
        %4407 = vmatprep.subr.bf16.mxu0 0
        %4408 = vmatpush2.bf16.msra.mxu0 0
        %4409 = vmatprep.subr.bf16.mxu0 0
        %4410 = vmatpush2.bf16.msra.mxu0 0
        %4411 = vmatprep.subr.bf16.mxu0 0
        %4412 = vmatpush2.bf16.msra.mxu0 0
        %4413 = vmatprep.subr.bf16.mxu0 0
        %4414 = vmatpush2.bf16.msra.mxu0 0
        %4415 = vmatprep.subr.bf16.mxu0 0
        %4416 = vmatpush2.bf16.msra.mxu0 0
        %4417 = vmatprep.subr.bf16.mxu0 0
        %4418 = vmatpush2.bf16.msra.mxu0 0
        %4419 = vmatprep.subr.bf16.mxu0 0
        %4420 = vmatpush2.bf16.msra.mxu0 0
        %4421 = vmatprep.subr.bf16.mxu0 0
        %4422 = vmatpush2.bf16.msra.mxu0 0
        %4423 = vmatprep.mubr.bf16.mxu0 0
        %4424 = vmatmul.mubr.bf16.gmra.mxu0 %v4389
        %v4425 = vpop.f32.mrf.mxu0
        %v4426 = vadd.f32 %v4359, %v4425
        %v4427 = vpop.f32.mrf.mxu0
        %v4428 = vpop.f32.mrf.mxu0
        %v4429 = vpop.f32.mrf.mxu0
        %4430 = vdwg.mxu0
        %s4431 = scalar_lea.vmem %s10, 64
        %v4432 = vld [vmem:[%s4431] sm:$0xf]
        %v4433 = vld [vmem:[%s4431 + $0x4] sm:$0xf]
        %v4434 = vld [vmem:[%s4431 + $0x8] sm:$0xf]
        %v4435 = vld [vmem:[%s4431 + $0xc] sm:$0xf]
        %v4436 = vld [vmem:[%s4431 + $0x10] sm:$0xf]
        %v4437 = vld [vmem:[%s4431 + $0x14] sm:$0xf]
        %v4438 = vld [vmem:[%s4431 + $0x18] sm:$0xf]
        %v4439 = vld [vmem:[%s4431 + $0x1c] sm:$0xf]
        %v4440 = vrot.slane %v4284, 2
        %v4449 = vunpack.c.l.b16 %v4432
        %v4450 = vunpack.c.l.b16 %v4433
        %v4451 = vunpack.c.l.b16 %v4434
        %v4452 = vunpack.c.l.b16 %v4435
        %v4453 = vunpack.c.l.b16 %v4436
        %v4454 = vunpack.c.l.b16 %v4437
        %v4455 = vunpack.c.l.b16 %v4438
        %v4456 = vunpack.c.l.b16 %v4439
        %v4457 = vpack.c.b16 %v4450, %v4449
        %v4458 = vpack.c.b16 %v4452, %v4451
        %v4459 = vpack.c.b16 %v4454, %v4453
        %v4460 = vpack.c.b16 %v4456, %v4455
        %v4466 = vsel %vm4320, %v4440, 0
        %4468 = vmatprep.subr.bf16.mxu0 0
        %4469 = vmatpush1.bf16.msra.mxu0 0
        %4470 = vmatprep.subr.bf16.mxu0 0
        %4471 = vmatpush1.bf16.msra.mxu0 0
        %4472 = vmatprep.subr.bf16.mxu0 0
        %4473 = vmatpush1.bf16.msra.mxu0 0
        %4474 = vmatprep.subr.bf16.mxu0 0
        %4475 = vmatpush1.bf16.msra.mxu0 0
        %4476 = vmatprep.subr.bf16.mxu0 0
        %4477 = vmatpush1.bf16.msra.mxu0 %v4460
        %4478 = vmatprep.subr.bf16.mxu0 0
        %4479 = vmatpush1.bf16.msra.mxu0 %v4459
        %4480 = vmatprep.subr.bf16.mxu0 0
        %4481 = vmatpush1.bf16.msra.mxu0 %v4458
        %4482 = vmatprep.subr.bf16.mxu0 0
        %4483 = vmatpush1.bf16.msra.mxu0 %v4457
        %4484 = vmatprep.subr.bf16.mxu0 0
        %4485 = vmatpush2.bf16.msra.mxu0 0
        %4486 = vmatprep.subr.bf16.mxu0 0
        %4487 = vmatpush2.bf16.msra.mxu0 0
        %4488 = vmatprep.subr.bf16.mxu0 0
        %4489 = vmatpush2.bf16.msra.mxu0 0
        %4490 = vmatprep.subr.bf16.mxu0 0
        %4491 = vmatpush2.bf16.msra.mxu0 0
        %4492 = vmatprep.subr.bf16.mxu0 0
        %4493 = vmatpush2.bf16.msra.mxu0 0
        %4494 = vmatprep.subr.bf16.mxu0 0
        %4495 = vmatpush2.bf16.msra.mxu0 0
        %4496 = vmatprep.subr.bf16.mxu0 0
        %4497 = vmatpush2.bf16.msra.mxu0 0
        %4498 = vmatprep.subr.bf16.mxu0 0
        %4499 = vmatpush2.bf16.msra.mxu0 0
        %4500 = vmatprep.mubr.bf16.mxu0 0
        %4501 = vmatmul.mubr.bf16.gmra.mxu0 %v4466
        %v4502 = vpop.f32.mrf.mxu0
        %v4503 = vadd.f32 0.0, %v4502
        %v4504 = vpop.f32.mrf.mxu0
        %v4505 = vpop.f32.mrf.mxu0
        %v4506 = vpop.f32.mrf.mxu0
        %4507 = vdwg.mxu0
        %v4508 = vadd.f32 %v4426, %v4503
        %s4509 = scalar_lea.vmem %s10, 96
        %v4510 = vld [vmem:[%s4509] sm:$0xf]
        %v4511 = vld [vmem:[%s4509 + $0x4] sm:$0xf]
        %v4512 = vld [vmem:[%s4509 + $0x8] sm:$0xf]
        %v4513 = vld [vmem:[%s4509 + $0xc] sm:$0xf]
        %v4514 = vld [vmem:[%s4509 + $0x10] sm:$0xf]
        %v4515 = vld [vmem:[%s4509 + $0x14] sm:$0xf]
        %v4516 = vld [vmem:[%s4509 + $0x18] sm:$0xf]
        %v4517 = vld [vmem:[%s4509 + $0x1c] sm:$0xf]
        %v4518 = vrot.slane %v4284, 3
        %v4527 = vunpack.c.l.b16 %v4510
        %v4528 = vunpack.c.l.b16 %v4511
        %v4529 = vunpack.c.l.b16 %v4512
        %v4530 = vunpack.c.l.b16 %v4513
        %v4531 = vunpack.c.l.b16 %v4514
        %v4532 = vunpack.c.l.b16 %v4515
        %v4533 = vunpack.c.l.b16 %v4516
        %v4534 = vunpack.c.l.b16 %v4517
        %v4535 = vpack.c.b16 %v4528, %v4527
        %v4536 = vpack.c.b16 %v4530, %v4529
        %v4537 = vpack.c.b16 %v4532, %v4531
        %v4538 = vpack.c.b16 %v4534, %v4533
        %v4544 = vsel %vm4320, %v4518, 0
        %4546 = vmatprep.subr.bf16.mxu0 0
        %4547 = vmatpush1.bf16.msra.mxu0 0
        %4548 = vmatprep.subr.bf16.mxu0 0
        %4549 = vmatpush1.bf16.msra.mxu0 0
        %4550 = vmatprep.subr.bf16.mxu0 0
        %4551 = vmatpush1.bf16.msra.mxu0 0
        %4552 = vmatprep.subr.bf16.mxu0 0
        %4553 = vmatpush1.bf16.msra.mxu0 0
        %4554 = vmatprep.subr.bf16.mxu0 0
        %4555 = vmatpush1.bf16.msra.mxu0 %v4538
        %4556 = vmatprep.subr.bf16.mxu0 0
        %4557 = vmatpush1.bf16.msra.mxu0 %v4537
        %4558 = vmatprep.subr.bf16.mxu0 0
        %4559 = vmatpush1.bf16.msra.mxu0 %v4536
        %4560 = vmatprep.subr.bf16.mxu0 0
        %4561 = vmatpush1.bf16.msra.mxu0 %v4535
        %4562 = vmatprep.subr.bf16.mxu0 0
        %4563 = vmatpush2.bf16.msra.mxu0 0
        %4564 = vmatprep.subr.bf16.mxu0 0
        %4565 = vmatpush2.bf16.msra.mxu0 0
        %4566 = vmatprep.subr.bf16.mxu0 0
        %4567 = vmatpush2.bf16.msra.mxu0 0
        %4568 = vmatprep.subr.bf16.mxu0 0
        %4569 = vmatpush2.bf16.msra.mxu0 0
        %4570 = vmatprep.subr.bf16.mxu0 0
        %4571 = vmatpush2.bf16.msra.mxu0 0
        %4572 = vmatprep.subr.bf16.mxu0 0
        %4573 = vmatpush2.bf16.msra.mxu0 0
        %4574 = vmatprep.subr.bf16.mxu0 0
        %4575 = vmatpush2.bf16.msra.mxu0 0
        %4576 = vmatprep.subr.bf16.mxu0 0
        %4577 = vmatpush2.bf16.msra.mxu0 0
        %4578 = vmatprep.mubr.bf16.mxu0 0
        %4579 = vmatmul.mubr.bf16.gmra.mxu0 %v4544
        %v4580 = vpop.f32.mrf.mxu0
        %v4581 = vadd.f32 0.0, %v4580
        %v4582 = vpop.f32.mrf.mxu0
        %v4583 = vpop.f32.mrf.mxu0
        %v4584 = vpop.f32.mrf.mxu0
        %4585 = vdwg.mxu0
        %v4586 = vadd.f32 %v4508, %v4581
        %v4588 = vrot.slane %v4243, 1
        %v4590 = vmax.f32 %v4243, %v4588
        %v4591 = vmul.f32 %v4590, %v4257
        %v4592 = vadd.f32 %v4591, %v4259
        %v4593 = vpack.c.bf16 %v4592, %v4592
        %s4594 = scalar_lea.vmem %s10, 128
        %v4595 = vld [vmem:[%s4594] sm:$0xf]
        %v4596 = vld [vmem:[%s4594 + $0x4] sm:$0xf]
        %v4597 = vld [vmem:[%s4594 + $0x8] sm:$0xf]
        %v4598 = vld [vmem:[%s4594 + $0xc] sm:$0xf]
        %v4599 = vld [vmem:[%s4594 + $0x10] sm:$0xf]
        %v4600 = vld [vmem:[%s4594 + $0x14] sm:$0xf]
        %v4601 = vld [vmem:[%s4594 + $0x18] sm:$0xf]
        %v4602 = vld [vmem:[%s4594 + $0x1c] sm:$0xf]
        %v4611 = vunpack.c.l.b16 %v4595
        %v4612 = vunpack.c.l.b16 %v4596
        %v4613 = vunpack.c.l.b16 %v4597
        %v4614 = vunpack.c.l.b16 %v4598
        %v4615 = vunpack.c.l.b16 %v4599
        %v4616 = vunpack.c.l.b16 %v4600
        %v4617 = vunpack.c.l.b16 %v4601
        %v4618 = vunpack.c.l.b16 %v4602
        %v4619 = vpack.c.b16 %v4612, %v4611
        %v4620 = vpack.c.b16 %v4614, %v4613
        %v4621 = vpack.c.b16 %v4616, %v4615
        %v4622 = vpack.c.b16 %v4618, %v4617
        %v4628 = vsel %vm4320, %v4593, 0
        %4630 = vmatprep.subr.bf16.mxu0 0
        %4631 = vmatpush1.bf16.msra.mxu0 0
        %4632 = vmatprep.subr.bf16.mxu0 0
        %4633 = vmatpush1.bf16.msra.mxu0 0
        %4634 = vmatprep.subr.bf16.mxu0 0
        %4635 = vmatpush1.bf16.msra.mxu0 0
        %4636 = vmatprep.subr.bf16.mxu0 0
        %4637 = vmatpush1.bf16.msra.mxu0 0
        %4638 = vmatprep.subr.bf16.mxu0 0
        %4639 = vmatpush1.bf16.msra.mxu0 %v4622
        %4640 = vmatprep.subr.bf16.mxu0 0
        %4641 = vmatpush1.bf16.msra.mxu0 %v4621
        %4642 = vmatprep.subr.bf16.mxu0 0
        %4643 = vmatpush1.bf16.msra.mxu0 %v4620
        %4644 = vmatprep.subr.bf16.mxu0 0
        %4645 = vmatpush1.bf16.msra.mxu0 %v4619
        %4646 = vmatprep.subr.bf16.mxu0 0
        %4647 = vmatpush2.bf16.msra.mxu0 0
        %4648 = vmatprep.subr.bf16.mxu0 0
        %4649 = vmatpush2.bf16.msra.mxu0 0
        %4650 = vmatprep.subr.bf16.mxu0 0
        %4651 = vmatpush2.bf16.msra.mxu0 0
        %4652 = vmatprep.subr.bf16.mxu0 0
        %4653 = vmatpush2.bf16.msra.mxu0 0
        %4654 = vmatprep.subr.bf16.mxu0 0
        %4655 = vmatpush2.bf16.msra.mxu0 0
        %4656 = vmatprep.subr.bf16.mxu0 0
        %4657 = vmatpush2.bf16.msra.mxu0 0
        %4658 = vmatprep.subr.bf16.mxu0 0
        %4659 = vmatpush2.bf16.msra.mxu0 0
        %4660 = vmatprep.subr.bf16.mxu0 0
        %4661 = vmatpush2.bf16.msra.mxu0 0
        %4662 = vmatprep.mubr.bf16.mxu0 0
        %4663 = vmatmul.mubr.bf16.gmra.mxu0 %v4628
        %v4664 = vpop.f32.mrf.mxu0
        %v4665 = vadd.f32 0.0, %v4664
        %v4666 = vpop.f32.mrf.mxu0
        %v4667 = vpop.f32.mrf.mxu0
        %v4668 = vpop.f32.mrf.mxu0
        %4669 = vdwg.mxu0
        %v4670 = vadd.f32 %v4586, %v4665
        %v4671 = vmul.f32 %v4590, %v4274
        %v4672 = vadd.f32 %v4671, %v4281
        %v4673 = vpack.c.bf16 %v4672, %v4672
        %s4674 = scalar_lea.vmem %s10, 160
        %v4675 = vld [vmem:[%s4674] sm:$0xf]
        %v4676 = vld [vmem:[%s4674 + $0x4] sm:$0xf]
        %v4677 = vld [vmem:[%s4674 + $0x8] sm:$0xf]
        %v4678 = vld [vmem:[%s4674 + $0xc] sm:$0xf]
        %v4679 = vld [vmem:[%s4674 + $0x10] sm:$0xf]
        %v4680 = vld [vmem:[%s4674 + $0x14] sm:$0xf]
        %v4681 = vld [vmem:[%s4674 + $0x18] sm:$0xf]
        %v4682 = vld [vmem:[%s4674 + $0x1c] sm:$0xf]
        %v4684 = vrot.slane %v4673, 1
        %v4693 = vunpack.c.l.b16 %v4675
        %v4694 = vunpack.c.l.b16 %v4676
        %v4695 = vunpack.c.l.b16 %v4677
        %v4696 = vunpack.c.l.b16 %v4678
        %v4697 = vunpack.c.l.b16 %v4679
        %v4698 = vunpack.c.l.b16 %v4680
        %v4699 = vunpack.c.l.b16 %v4681
        %v4700 = vunpack.c.l.b16 %v4682
        %v4701 = vpack.c.b16 %v4694, %v4693
        %v4702 = vpack.c.b16 %v4696, %v4695
        %v4703 = vpack.c.b16 %v4698, %v4697
        %v4704 = vpack.c.b16 %v4700, %v4699
        %v4710 = vsel %vm4320, %v4684, 0
        %4712 = vmatprep.subr.bf16.mxu0 0
        %4713 = vmatpush1.bf16.msra.mxu0 0
        %4714 = vmatprep.subr.bf16.mxu0 0
        %4715 = vmatpush1.bf16.msra.mxu0 0
        %4716 = vmatprep.subr.bf16.mxu0 0
        %4717 = vmatpush1.bf16.msra.mxu0 0
        %4718 = vmatprep.subr.bf16.mxu0 0
        %4719 = vmatpush1.bf16.msra.mxu0 0
        %4720 = vmatprep.subr.bf16.mxu0 0
        %4721 = vmatpush1.bf16.msra.mxu0 %v4704
        %4722 = vmatprep.subr.bf16.mxu0 0
        %4723 = vmatpush1.bf16.msra.mxu0 %v4703
        %4724 = vmatprep.subr.bf16.mxu0 0
        %4725 = vmatpush1.bf16.msra.mxu0 %v4702
        %4726 = vmatprep.subr.bf16.mxu0 0
        %4727 = vmatpush1.bf16.msra.mxu0 %v4701
        %4728 = vmatprep.subr.bf16.mxu0 0
        %4729 = vmatpush2.bf16.msra.mxu0 0
        %4730 = vmatprep.subr.bf16.mxu0 0
        %4731 = vmatpush2.bf16.msra.mxu0 0
        %4732 = vmatprep.subr.bf16.mxu0 0
        %4733 = vmatpush2.bf16.msra.mxu0 0
        %4734 = vmatprep.subr.bf16.mxu0 0
        %4735 = vmatpush2.bf16.msra.mxu0 0
        %4736 = vmatprep.subr.bf16.mxu0 0
        %4737 = vmatpush2.bf16.msra.mxu0 0
        %4738 = vmatprep.subr.bf16.mxu0 0
        %4739 = vmatpush2.bf16.msra.mxu0 0
        %4740 = vmatprep.subr.bf16.mxu0 0
        %4741 = vmatpush2.bf16.msra.mxu0 0
        %4742 = vmatprep.subr.bf16.mxu0 0
        %4743 = vmatpush2.bf16.msra.mxu0 0
        %4744 = vmatprep.mubr.bf16.mxu0 0
        %4745 = vmatmul.mubr.bf16.gmra.mxu0 %v4710
        %v4746 = vpop.f32.mrf.mxu0
        %v4747 = vadd.f32 0.0, %v4746
        %v4748 = vpop.f32.mrf.mxu0
        %v4749 = vpop.f32.mrf.mxu0
        %v4750 = vpop.f32.mrf.mxu0
        %4751 = vdwg.mxu0
        %v4752 = vadd.f32 %v4670, %v4747
        %v4754 = vrot.slane %v4251, 1
        %v4756 = vmax.f32 %v4251, %v4754
        %v4757 = vmul.f32 %v4756, %v4257
        %v4758 = vadd.f32 %v4757, %v4259
        %v4759 = vpack.c.bf16 %v4758, %v4758
        %s4760 = scalar_lea.vmem %s10, 192
        %v4761 = vld [vmem:[%s4760] sm:$0xf]
        %v4762 = vld [vmem:[%s4760 + $0x4] sm:$0xf]
        %v4763 = vld [vmem:[%s4760 + $0x8] sm:$0xf]
        %v4764 = vld [vmem:[%s4760 + $0xc] sm:$0xf]
        %v4765 = vld [vmem:[%s4760 + $0x10] sm:$0xf]
        %v4766 = vld [vmem:[%s4760 + $0x14] sm:$0xf]
        %v4767 = vld [vmem:[%s4760 + $0x18] sm:$0xf]
        %v4768 = vld [vmem:[%s4760 + $0x1c] sm:$0xf]
        %v4777 = vunpack.c.l.b16 %v4761
        %v4778 = vunpack.c.l.b16 %v4762
        %v4779 = vunpack.c.l.b16 %v4763
        %v4780 = vunpack.c.l.b16 %v4764
        %v4781 = vunpack.c.l.b16 %v4765
        %v4782 = vunpack.c.l.b16 %v4766
        %v4783 = vunpack.c.l.b16 %v4767
        %v4784 = vunpack.c.l.b16 %v4768
        %v4785 = vpack.c.b16 %v4778, %v4777
        %v4786 = vpack.c.b16 %v4780, %v4779
        %v4787 = vpack.c.b16 %v4782, %v4781
        %v4788 = vpack.c.b16 %v4784, %v4783
        %v4794 = vsel %vm4320, %v4759, 0
        %4796 = vmatprep.subr.bf16.mxu0 0
        %4797 = vmatpush1.bf16.msra.mxu0 0
        %4798 = vmatprep.subr.bf16.mxu0 0
        %4799 = vmatpush1.bf16.msra.mxu0 0
        %4800 = vmatprep.subr.bf16.mxu0 0
        %4801 = vmatpush1.bf16.msra.mxu0 0
        %4802 = vmatprep.subr.bf16.mxu0 0
        %4803 = vmatpush1.bf16.msra.mxu0 0
        %4804 = vmatprep.subr.bf16.mxu0 0
        %4805 = vmatpush1.bf16.msra.mxu0 %v4788
        %4806 = vmatprep.subr.bf16.mxu0 0
        %4807 = vmatpush1.bf16.msra.mxu0 %v4787
        %4808 = vmatprep.subr.bf16.mxu0 0
        %4809 = vmatpush1.bf16.msra.mxu0 %v4786
        %4810 = vmatprep.subr.bf16.mxu0 0
        %4811 = vmatpush1.bf16.msra.mxu0 %v4785
        %4812 = vmatprep.subr.bf16.mxu0 0
        %4813 = vmatpush2.bf16.msra.mxu0 0
        %4814 = vmatprep.subr.bf16.mxu0 0
        %4815 = vmatpush2.bf16.msra.mxu0 0
        %4816 = vmatprep.subr.bf16.mxu0 0
        %4817 = vmatpush2.bf16.msra.mxu0 0
        %4818 = vmatprep.subr.bf16.mxu0 0
        %4819 = vmatpush2.bf16.msra.mxu0 0
        %4820 = vmatprep.subr.bf16.mxu0 0
        %4821 = vmatpush2.bf16.msra.mxu0 0
        %4822 = vmatprep.subr.bf16.mxu0 0
        %4823 = vmatpush2.bf16.msra.mxu0 0
        %4824 = vmatprep.subr.bf16.mxu0 0
        %4825 = vmatpush2.bf16.msra.mxu0 0
        %4826 = vmatprep.subr.bf16.mxu0 0
        %4827 = vmatpush2.bf16.msra.mxu0 0
        %4828 = vmatprep.mubr.bf16.mxu0 0
        %4829 = vmatmul.mubr.bf16.gmra.mxu0 %v4794
        %v4830 = vpop.f32.mrf.mxu0
        %v4831 = vadd.f32 0.0, %v4830
        %v4832 = vpop.f32.mrf.mxu0
        %v4833 = vpop.f32.mrf.mxu0
        %v4834 = vpop.f32.mrf.mxu0
        %4835 = vdwg.mxu0
        %v4836 = vadd.f32 %v4752, %v4831
        %v4837 = vmul.f32 %v4756, %v4274
        %v4838 = vadd.f32 %v4837, %v4281
        %v4839 = vpack.c.bf16 %v4838, %v4838
        %s4840 = scalar_lea.vmem %s10, 224
        %v4841 = vld [vmem:[%s4840] sm:$0xf]
        %v4842 = vld [vmem:[%s4840 + $0x4] sm:$0xf]
        %v4843 = vld [vmem:[%s4840 + $0x8] sm:$0xf]
        %v4844 = vld [vmem:[%s4840 + $0xc] sm:$0xf]
        %v4845 = vld [vmem:[%s4840 + $0x10] sm:$0xf]
        %v4846 = vld [vmem:[%s4840 + $0x14] sm:$0xf]
        %v4847 = vld [vmem:[%s4840 + $0x18] sm:$0xf]
        %v4848 = vld [vmem:[%s4840 + $0x1c] sm:$0xf]
        %v4850 = vrot.slane %v4839, 1
        %v4859 = vunpack.c.l.b16 %v4841
        %v4860 = vunpack.c.l.b16 %v4842
        %v4861 = vunpack.c.l.b16 %v4843
        %v4862 = vunpack.c.l.b16 %v4844
        %v4863 = vunpack.c.l.b16 %v4845
        %v4864 = vunpack.c.l.b16 %v4846
        %v4865 = vunpack.c.l.b16 %v4847
        %v4866 = vunpack.c.l.b16 %v4848
        %v4867 = vpack.c.b16 %v4860, %v4859
        %v4868 = vpack.c.b16 %v4862, %v4861
        %v4869 = vpack.c.b16 %v4864, %v4863
        %v4870 = vpack.c.b16 %v4866, %v4865
        %v4876 = vsel %vm4320, %v4850, 0
        %4878 = vmatprep.subr.bf16.mxu0 0
        %4879 = vmatpush1.bf16.msra.mxu0 0
        %4880 = vmatprep.subr.bf16.mxu0 0
        %4881 = vmatpush1.bf16.msra.mxu0 0
        %4882 = vmatprep.subr.bf16.mxu0 0
        %4883 = vmatpush1.bf16.msra.mxu0 0
        %4884 = vmatprep.subr.bf16.mxu0 0
        %4885 = vmatpush1.bf16.msra.mxu0 0
        %4886 = vmatprep.subr.bf16.mxu0 0
        %4887 = vmatpush1.bf16.msra.mxu0 %v4870
        %4888 = vmatprep.subr.bf16.mxu0 0
        %4889 = vmatpush1.bf16.msra.mxu0 %v4869
        %4890 = vmatprep.subr.bf16.mxu0 0
        %4891 = vmatpush1.bf16.msra.mxu0 %v4868
        %4892 = vmatprep.subr.bf16.mxu0 0
        %4893 = vmatpush1.bf16.msra.mxu0 %v4867
        %4894 = vmatprep.subr.bf16.mxu0 0
        %4895 = vmatpush2.bf16.msra.mxu0 0
        %4896 = vmatprep.subr.bf16.mxu0 0
        %4897 = vmatpush2.bf16.msra.mxu0 0
        %4898 = vmatprep.subr.bf16.mxu0 0
        %4899 = vmatpush2.bf16.msra.mxu0 0
        %4900 = vmatprep.subr.bf16.mxu0 0
        %4901 = vmatpush2.bf16.msra.mxu0 0
        %4902 = vmatprep.subr.bf16.mxu0 0
        %4903 = vmatpush2.bf16.msra.mxu0 0
        %4904 = vmatprep.subr.bf16.mxu0 0
        %4905 = vmatpush2.bf16.msra.mxu0 0
        %4906 = vmatprep.subr.bf16.mxu0 0
        %4907 = vmatpush2.bf16.msra.mxu0 0
        %4908 = vmatprep.subr.bf16.mxu0 0
        %4909 = vmatpush2.bf16.msra.mxu0 0
        %4910 = vmatprep.mubr.bf16.mxu0 0
        %4911 = vmatmul.mubr.bf16.gmra.mxu0 %v4876
        %v4912 = vpop.f32.mrf.mxu0
        %v4913 = vadd.f32 0.0, %v4912
        %v4914 = vpop.f32.mrf.mxu0
        %v4915 = vpop.f32.mrf.mxu0
        %v4916 = vpop.f32.mrf.mxu0
        %4917 = vdwg.mxu0
        %v4918 = vadd.f32 %v4836, %v4913
        %s4919 = scalar_lea.vmem %s10, 256
        %v4920 = vld [vmem:[%s4919] sm:$0xf]
        %v4921 = vld [vmem:[%s4919 + $0x4] sm:$0xf]
        %v4922 = vld [vmem:[%s4919 + $0x8] sm:$0xf]
        %v4923 = vld [vmem:[%s4919 + $0xc] sm:$0xf]
        %v4924 = vld [vmem:[%s4919 + $0x10] sm:$0xf]
        %v4925 = vld [vmem:[%s4919 + $0x14] sm:$0xf]
        %v4926 = vld [vmem:[%s4919 + $0x18] sm:$0xf]
        %v4927 = vld [vmem:[%s4919 + $0x1c] sm:$0xf]
        %v4928 = vrot.slane %v4839, 2
        %v4937 = vunpack.c.l.b16 %v4920
        %v4938 = vunpack.c.l.b16 %v4921
        %v4939 = vunpack.c.l.b16 %v4922
        %v4940 = vunpack.c.l.b16 %v4923
        %v4941 = vunpack.c.l.b16 %v4924
        %v4942 = vunpack.c.l.b16 %v4925
        %v4943 = vunpack.c.l.b16 %v4926
        %v4944 = vunpack.c.l.b16 %v4927
        %v4945 = vpack.c.b16 %v4938, %v4937
        %v4946 = vpack.c.b16 %v4940, %v4939
        %v4947 = vpack.c.b16 %v4942, %v4941
        %v4948 = vpack.c.b16 %v4944, %v4943
        %v4954 = vsel %vm4320, %v4928, 0
        %4956 = vmatprep.subr.bf16.mxu0 0
        %4957 = vmatpush1.bf16.msra.mxu0 0
        %4958 = vmatprep.subr.bf16.mxu0 0
        %4959 = vmatpush1.bf16.msra.mxu0 0
        %4960 = vmatprep.subr.bf16.mxu0 0
        %4961 = vmatpush1.bf16.msra.mxu0 0
        %4962 = vmatprep.subr.bf16.mxu0 0
        %4963 = vmatpush1.bf16.msra.mxu0 0
        %4964 = vmatprep.subr.bf16.mxu0 0
        %4965 = vmatpush1.bf16.msra.mxu0 %v4948
        %4966 = vmatprep.subr.bf16.mxu0 0
        %4967 = vmatpush1.bf16.msra.mxu0 %v4947
        %4968 = vmatprep.subr.bf16.mxu0 0
        %4969 = vmatpush1.bf16.msra.mxu0 %v4946
        %4970 = vmatprep.subr.bf16.mxu0 0
        %4971 = vmatpush1.bf16.msra.mxu0 %v4945
        %4972 = vmatprep.subr.bf16.mxu0 0
        %4973 = vmatpush2.bf16.msra.mxu0 0
        %4974 = vmatprep.subr.bf16.mxu0 0
        %4975 = vmatpush2.bf16.msra.mxu0 0
        %4976 = vmatprep.subr.bf16.mxu0 0
        %4977 = vmatpush2.bf16.msra.mxu0 0
        %4978 = vmatprep.subr.bf16.mxu0 0
        %4979 = vmatpush2.bf16.msra.mxu0 0
        %4980 = vmatprep.subr.bf16.mxu0 0
        %4981 = vmatpush2.bf16.msra.mxu0 0
        %4982 = vmatprep.subr.bf16.mxu0 0
        %4983 = vmatpush2.bf16.msra.mxu0 0
        %4984 = vmatprep.subr.bf16.mxu0 0
        %4985 = vmatpush2.bf16.msra.mxu0 0
        %4986 = vmatprep.subr.bf16.mxu0 0
        %4987 = vmatpush2.bf16.msra.mxu0 0
        %4988 = vmatprep.mubr.bf16.mxu0 0
        %4989 = vmatmul.mubr.bf16.gmra.mxu0 %v4954
        %v4990 = vpop.f32.mrf.mxu0
        %v4991 = vadd.f32 0.0, %v4990
        %v4992 = vpop.f32.mrf.mxu0
        %v4993 = vpop.f32.mrf.mxu0
        %v4994 = vpop.f32.mrf.mxu0
        %4995 = vdwg.mxu0
        %v4996 = vadd.f32 %v4918, %v4991
        %s4997 = scalar_lea.vmem %s10, 288
        %v4998 = vld [vmem:[%s4997] sm:$0xf]
        %v4999 = vld [vmem:[%s4997 + $0x4] sm:$0xf]
        %v5000 = vld [vmem:[%s4997 + $0x8] sm:$0xf]
        %v5001 = vld [vmem:[%s4997 + $0xc] sm:$0xf]
        %v5002 = vld [vmem:[%s4997 + $0x10] sm:$0xf]
        %v5003 = vld [vmem:[%s4997 + $0x14] sm:$0xf]
        %v5004 = vld [vmem:[%s4997 + $0x18] sm:$0xf]
        %v5005 = vld [vmem:[%s4997 + $0x1c] sm:$0xf]
        %v5006 = vrot.slane %v4839, 3
        %v5015 = vunpack.c.l.b16 %v4998
        %v5016 = vunpack.c.l.b16 %v4999
        %v5017 = vunpack.c.l.b16 %v5000
        %v5018 = vunpack.c.l.b16 %v5001
        %v5019 = vunpack.c.l.b16 %v5002
        %v5020 = vunpack.c.l.b16 %v5003
        %v5021 = vunpack.c.l.b16 %v5004
        %v5022 = vunpack.c.l.b16 %v5005
        %v5023 = vpack.c.b16 %v5016, %v5015
        %v5024 = vpack.c.b16 %v5018, %v5017
        %v5025 = vpack.c.b16 %v5020, %v5019
        %v5026 = vpack.c.b16 %v5022, %v5021
        %v5032 = vsel %vm4320, %v5006, 0
        %5034 = vmatprep.subr.bf16.mxu0 0
        %5035 = vmatpush1.bf16.msra.mxu0 0
        %5036 = vmatprep.subr.bf16.mxu0 0
        %5037 = vmatpush1.bf16.msra.mxu0 0
        %5038 = vmatprep.subr.bf16.mxu0 0
        %5039 = vmatpush1.bf16.msra.mxu0 0
        %5040 = vmatprep.subr.bf16.mxu0 0
        %5041 = vmatpush1.bf16.msra.mxu0 0
        %5042 = vmatprep.subr.bf16.mxu0 0
        %5043 = vmatpush1.bf16.msra.mxu0 %v5026
        %5044 = vmatprep.subr.bf16.mxu0 0
        %5045 = vmatpush1.bf16.msra.mxu0 %v5025
        %5046 = vmatprep.subr.bf16.mxu0 0
        %5047 = vmatpush1.bf16.msra.mxu0 %v5024
        %5048 = vmatprep.subr.bf16.mxu0 0
        %5049 = vmatpush1.bf16.msra.mxu0 %v5023
        %5050 = vmatprep.subr.bf16.mxu0 0
        %5051 = vmatpush2.bf16.msra.mxu0 0
        %5052 = vmatprep.subr.bf16.mxu0 0
        %5053 = vmatpush2.bf16.msra.mxu0 0
        %5054 = vmatprep.subr.bf16.mxu0 0
        %5055 = vmatpush2.bf16.msra.mxu0 0
        %5056 = vmatprep.subr.bf16.mxu0 0
        %5057 = vmatpush2.bf16.msra.mxu0 0
        %5058 = vmatprep.subr.bf16.mxu0 0
        %5059 = vmatpush2.bf16.msra.mxu0 0
        %5060 = vmatprep.subr.bf16.mxu0 0
        %5061 = vmatpush2.bf16.msra.mxu0 0
        %5062 = vmatprep.subr.bf16.mxu0 0
        %5063 = vmatpush2.bf16.msra.mxu0 0
        %5064 = vmatprep.subr.bf16.mxu0 0
        %5065 = vmatpush2.bf16.msra.mxu0 0
        %5066 = vmatprep.mubr.bf16.mxu0 0
        %5067 = vmatmul.mubr.bf16.gmra.mxu0 %v5032
        %v5068 = vpop.f32.mrf.mxu0
        %v5069 = vadd.f32 0.0, %v5068
        %v5070 = vpop.f32.mrf.mxu0
        %v5071 = vpop.f32.mrf.mxu0
        %v5072 = vpop.f32.mrf.mxu0
        %5073 = vdwg.mxu0
        %v5074 = vadd.f32 %v4996, %v5069
        %v5076 = vrot.slane %v4252, 1
        %v5078 = vmax.f32 %v4252, %v5076
        %v5079 = vmul.f32 %v5078, %v4257
        %v5080 = vadd.f32 %v5079, %v4259
        %v5081 = vpack.c.bf16 %v5080, %v5080
        %s5082 = scalar_lea.vmem %s10, 320
        %v5083 = vld [vmem:[%s5082] sm:$0xf]
        %v5084 = vld [vmem:[%s5082 + $0x4] sm:$0xf]
        %v5085 = vld [vmem:[%s5082 + $0x8] sm:$0xf]
        %v5086 = vld [vmem:[%s5082 + $0xc] sm:$0xf]
        %v5087 = vld [vmem:[%s5082 + $0x10] sm:$0xf]
        %v5088 = vld [vmem:[%s5082 + $0x14] sm:$0xf]
        %v5089 = vld [vmem:[%s5082 + $0x18] sm:$0xf]
        %v5090 = vld [vmem:[%s5082 + $0x1c] sm:$0xf]
        %v5099 = vunpack.c.l.b16 %v5083
        %v5100 = vunpack.c.l.b16 %v5084
        %v5101 = vunpack.c.l.b16 %v5085
        %v5102 = vunpack.c.l.b16 %v5086
        %v5103 = vunpack.c.l.b16 %v5087
        %v5104 = vunpack.c.l.b16 %v5088
        %v5105 = vunpack.c.l.b16 %v5089
        %v5106 = vunpack.c.l.b16 %v5090
        %v5107 = vpack.c.b16 %v5100, %v5099
        %v5108 = vpack.c.b16 %v5102, %v5101
        %v5109 = vpack.c.b16 %v5104, %v5103
        %v5110 = vpack.c.b16 %v5106, %v5105
        %v5116 = vsel %vm4320, %v5081, 0
        %5118 = vmatprep.subr.bf16.mxu0 0
        %5119 = vmatpush1.bf16.msra.mxu0 0
        %5120 = vmatprep.subr.bf16.mxu0 0
        %5121 = vmatpush1.bf16.msra.mxu0 0
        %5122 = vmatprep.subr.bf16.mxu0 0
        %5123 = vmatpush1.bf16.msra.mxu0 0
        %5124 = vmatprep.subr.bf16.mxu0 0
        %5125 = vmatpush1.bf16.msra.mxu0 0
        %5126 = vmatprep.subr.bf16.mxu0 0
        %5127 = vmatpush1.bf16.msra.mxu0 %v5110
        %5128 = vmatprep.subr.bf16.mxu0 0
        %5129 = vmatpush1.bf16.msra.mxu0 %v5109
        %5130 = vmatprep.subr.bf16.mxu0 0
        %5131 = vmatpush1.bf16.msra.mxu0 %v5108
        %5132 = vmatprep.subr.bf16.mxu0 0
        %5133 = vmatpush1.bf16.msra.mxu0 %v5107
        %5134 = vmatprep.subr.bf16.mxu0 0
        %5135 = vmatpush2.bf16.msra.mxu0 0
        %5136 = vmatprep.subr.bf16.mxu0 0
        %5137 = vmatpush2.bf16.msra.mxu0 0
        %5138 = vmatprep.subr.bf16.mxu0 0
        %5139 = vmatpush2.bf16.msra.mxu0 0
        %5140 = vmatprep.subr.bf16.mxu0 0
        %5141 = vmatpush2.bf16.msra.mxu0 0
        %5142 = vmatprep.subr.bf16.mxu0 0
        %5143 = vmatpush2.bf16.msra.mxu0 0
        %5144 = vmatprep.subr.bf16.mxu0 0
        %5145 = vmatpush2.bf16.msra.mxu0 0
        %5146 = vmatprep.subr.bf16.mxu0 0
        %5147 = vmatpush2.bf16.msra.mxu0 0
        %5148 = vmatprep.subr.bf16.mxu0 0
        %5149 = vmatpush2.bf16.msra.mxu0 0
        %5150 = vmatprep.mubr.bf16.mxu0 0
        %5151 = vmatmul.mubr.bf16.gmra.mxu0 %v5116
        %v5152 = vpop.f32.mrf.mxu0
        %v5153 = vadd.f32 0.0, %v5152
        %v5154 = vpop.f32.mrf.mxu0
        %v5155 = vpop.f32.mrf.mxu0
        %v5156 = vpop.f32.mrf.mxu0
        %5157 = vdwg.mxu0
        %v5158 = vadd.f32 %v5074, %v5153
        %v5159 = vmul.f32 %v5078, %v4274
        %v5160 = vadd.f32 %v5159, %v4281
        %v5161 = vpack.c.bf16 %v5160, %v5160
        %s5162 = scalar_lea.vmem %s10, 352
        %v5163 = vld [vmem:[%s5162] sm:$0xf]
        %v5164 = vld [vmem:[%s5162 + $0x4] sm:$0xf]
        %v5165 = vld [vmem:[%s5162 + $0x8] sm:$0xf]
        %v5166 = vld [vmem:[%s5162 + $0xc] sm:$0xf]
        %v5167 = vld [vmem:[%s5162 + $0x10] sm:$0xf]
        %v5168 = vld [vmem:[%s5162 + $0x14] sm:$0xf]
        %v5169 = vld [vmem:[%s5162 + $0x18] sm:$0xf]
        %v5170 = vld [vmem:[%s5162 + $0x1c] sm:$0xf]
        %v5172 = vrot.slane %v5161, 1
        %v5181 = vunpack.c.l.b16 %v5163
        %v5182 = vunpack.c.l.b16 %v5164
        %v5183 = vunpack.c.l.b16 %v5165
        %v5184 = vunpack.c.l.b16 %v5166
        %v5185 = vunpack.c.l.b16 %v5167
        %v5186 = vunpack.c.l.b16 %v5168
        %v5187 = vunpack.c.l.b16 %v5169
        %v5188 = vunpack.c.l.b16 %v5170
        %v5189 = vpack.c.b16 %v5182, %v5181
        %v5190 = vpack.c.b16 %v5184, %v5183
        %v5191 = vpack.c.b16 %v5186, %v5185
        %v5192 = vpack.c.b16 %v5188, %v5187
        %v5198 = vsel %vm4320, %v5172, 0
        %5200 = vmatprep.subr.bf16.mxu0 0
        %5201 = vmatpush1.bf16.msra.mxu0 0
        %5202 = vmatprep.subr.bf16.mxu0 0
        %5203 = vmatpush1.bf16.msra.mxu0 0
        %5204 = vmatprep.subr.bf16.mxu0 0
        %5205 = vmatpush1.bf16.msra.mxu0 0
        %5206 = vmatprep.subr.bf16.mxu0 0
        %5207 = vmatpush1.bf16.msra.mxu0 0
        %5208 = vmatprep.subr.bf16.mxu0 0
        %5209 = vmatpush1.bf16.msra.mxu0 %v5192
        %5210 = vmatprep.subr.bf16.mxu0 0
        %5211 = vmatpush1.bf16.msra.mxu0 %v5191
        %5212 = vmatprep.subr.bf16.mxu0 0
        %5213 = vmatpush1.bf16.msra.mxu0 %v5190
        %5214 = vmatprep.subr.bf16.mxu0 0
        %5215 = vmatpush1.bf16.msra.mxu0 %v5189
        %5216 = vmatprep.subr.bf16.mxu0 0
        %5217 = vmatpush2.bf16.msra.mxu0 0
        %5218 = vmatprep.subr.bf16.mxu0 0
        %5219 = vmatpush2.bf16.msra.mxu0 0
        %5220 = vmatprep.subr.bf16.mxu0 0
        %5221 = vmatpush2.bf16.msra.mxu0 0
        %5222 = vmatprep.subr.bf16.mxu0 0
        %5223 = vmatpush2.bf16.msra.mxu0 0
        %5224 = vmatprep.subr.bf16.mxu0 0
        %5225 = vmatpush2.bf16.msra.mxu0 0
        %5226 = vmatprep.subr.bf16.mxu0 0
        %5227 = vmatpush2.bf16.msra.mxu0 0
        %5228 = vmatprep.subr.bf16.mxu0 0
        %5229 = vmatpush2.bf16.msra.mxu0 0
        %5230 = vmatprep.subr.bf16.mxu0 0
        %5231 = vmatpush2.bf16.msra.mxu0 0
        %5232 = vmatprep.mubr.bf16.mxu0 0
        %5233 = vmatmul.mubr.bf16.gmra.mxu0 %v5198
        %v5234 = vpop.f32.mrf.mxu0
        %v5235 = vadd.f32 0.0, %v5234
        %v5236 = vpop.f32.mrf.mxu0
        %v5237 = vpop.f32.mrf.mxu0
        %v5238 = vpop.f32.mrf.mxu0
        %5239 = vdwg.mxu0
        %v5240 = vadd.f32 %v5158, %v5235
        %v5241 = vld [vmem:[%s11] sm:$0x1]
        %v5242 = vadd.f32 %v5240, %v5241
        %v5243 = vmax.f32 %v5242, 0.0
        %v5244 = vpack.c.bf16 %v5243, %v5243
        %v5245 = vld [vmem:[%s12] sm:$0xf]
        %v5246 = vld [vmem:[%s12 + $0x4] sm:$0xf]
        %v5247 = vld [vmem:[%s12 + $0x8] sm:$0xf]
        %v5248 = vld [vmem:[%s12 + $0xc] sm:$0xf]
        %v5249 = vld [vmem:[%s12 + $0x10] sm:$0xf]
        %v5250 = vld [vmem:[%s12 + $0x14] sm:$0xf]
        %v5251 = vld [vmem:[%s12 + $0x18] sm:$0xf]
        %v5252 = vld [vmem:[%s12 + $0x1c] sm:$0xf]
        %v5253 = vld [vmem:[%s12 + $0x20] sm:$0xf]
        %v5254 = vld [vmem:[%s12 + $0x24] sm:$0xf]
        %v5255 = vld [vmem:[%s12 + $0x28] sm:$0xf]
        %v5256 = vld [vmem:[%s12 + $0x2c] sm:$0xf]
        %v5257 = vld [vmem:[%s12 + $0x30] sm:$0xf]
        %v5258 = vld [vmem:[%s12 + $0x34] sm:$0xf]
        %v5259 = vld [vmem:[%s12 + $0x38] sm:$0xf]
        %v5260 = vld [vmem:[%s12 + $0x3c] sm:$0xf]
        %v5261 = vld [vmem:[%s13] sm:$0x1]
        %v5278 = vunpack.c.l.b16 %v5245
        %v5279 = vunpack.c.l.b16 %v5246
        %v5280 = vunpack.c.l.b16 %v5247
        %v5281 = vunpack.c.l.b16 %v5248
        %v5282 = vunpack.c.l.b16 %v5249
        %v5283 = vunpack.c.l.b16 %v5250
        %v5284 = vunpack.c.l.b16 %v5251
        %v5285 = vunpack.c.l.b16 %v5252
        %v5286 = vunpack.c.l.b16 %v5253
        %v5287 = vunpack.c.l.b16 %v5254
        %v5288 = vunpack.c.l.b16 %v5255
        %v5289 = vunpack.c.l.b16 %v5256
        %v5290 = vunpack.c.l.b16 %v5257
        %v5291 = vunpack.c.l.b16 %v5258
        %v5292 = vunpack.c.l.b16 %v5259
        %v5293 = vunpack.c.l.b16 %v5260
        %v5294 = vpack.c.b16 %v5279, %v5278
        %v5295 = vpack.c.b16 %v5281, %v5280
        %v5296 = vpack.c.b16 %v5283, %v5282
        %v5297 = vpack.c.b16 %v5285, %v5284
        %v5298 = vpack.c.b16 %v5287, %v5286
        %v5299 = vpack.c.b16 %v5289, %v5288
        %v5300 = vpack.c.b16 %v5291, %v5290
        %v5301 = vpack.c.b16 %v5293, %v5292
        %5310 = vmatprep.subr.bf16.mxu0 0
        %5311 = vmatpush1.bf16.msra.mxu0 %v5301
        %5312 = vmatprep.subr.bf16.mxu0 0
        %5313 = vmatpush1.bf16.msra.mxu0 %v5300
        %5314 = vmatprep.subr.bf16.mxu0 0
        %5315 = vmatpush1.bf16.msra.mxu0 %v5299
        %5316 = vmatprep.subr.bf16.mxu0 0
        %5317 = vmatpush1.bf16.msra.mxu0 %v5298
        %5318 = vmatprep.subr.bf16.mxu0 0
        %5319 = vmatpush1.bf16.msra.mxu0 %v5297
        %5320 = vmatprep.subr.bf16.mxu0 0
        %5321 = vmatpush1.bf16.msra.mxu0 %v5296
        %5322 = vmatprep.subr.bf16.mxu0 0
        %5323 = vmatpush1.bf16.msra.mxu0 %v5295
        %5324 = vmatprep.subr.bf16.mxu0 0
        %5325 = vmatpush1.bf16.msra.mxu0 %v5294
        %5326 = vmatprep.subr.bf16.mxu0 0
        %5327 = vmatpush2.bf16.msra.mxu0 0
        %5328 = vmatprep.subr.bf16.mxu0 0
        %5329 = vmatpush2.bf16.msra.mxu0 0
        %5330 = vmatprep.subr.bf16.mxu0 0
        %5331 = vmatpush2.bf16.msra.mxu0 0
        %5332 = vmatprep.subr.bf16.mxu0 0
        %5333 = vmatpush2.bf16.msra.mxu0 0
        %5334 = vmatprep.subr.bf16.mxu0 0
        %5335 = vmatpush2.bf16.msra.mxu0 0
        %5336 = vmatprep.subr.bf16.mxu0 0
        %5337 = vmatpush2.bf16.msra.mxu0 0
        %5338 = vmatprep.subr.bf16.mxu0 0
        %5339 = vmatpush2.bf16.msra.mxu0 0
        %5340 = vmatprep.subr.bf16.mxu0 0
        %5341 = vmatpush2.bf16.msra.mxu0 0
        %5342 = vmatprep.mubr.bf16.mxu0 0
        %5343 = vmatmul.mubr.bf16.gmra.mxu0 %v5244
        %v5344 = vpop.f32.mrf.mxu0
        %v5345 = vadd.f32 %v5261, %v5344
        %v5346 = vpop.f32.mrf.mxu0
        %v5347 = vpop.f32.mrf.mxu0
        %v5348 = vpop.f32.mrf.mxu0
        %5349 = vdwg.mxu0
        %vm5350 = vcmask 16384
        %5351 = vst.msk [vmem:[%s459] sm:$0x1] %vm5350, %v5345
        %s5352 = sand.u32 %s335, 1
        %s5353 = scalar_lea.sflag [#allocation5], %s5352
        %s5354 = sand.u32 %s335, 1
        %s5355 = scalar_lea.vmem [#allocation4], %s5354
        // Predicated region
        $region77: #{cnn_forward.1} parent=75 // pred_check
          %p5356 = pneg %p345
        $region78: #{cnn_forward.1} parent=75 // pred_check_branch
          %5358 = sbr.rel (%p5356) target = $region80
        $region79: #{cnn_forward.1} parent=75 // pred_region
          %s5360 = ssub.s32 16, 16
          %5361 = vsyncadd %s5353, %s5360
          %s5362 = smul.addr %s28, 16
          %s5363 = scalar_lea.hbm %s14, %s5362
          %s5365 = sshll.u32 %s5355, 4
          %s5366 = int_to_ptr.vmem [resolvable:$true] %s5365
          %5368 = dma.vmem_to_hbm [thread:$0]  %s5366, 16, %s5363, %s5353
        $region80: #{cnn_forward.1} parent=75 // pred_fallthru
          _
      $region76: #{cnn_forward.1} parent=5 // pred_fallthru
        _
      %p5369 = scmp.le.s32.totalorder 2, %s23
      // Predicated region
      $region81: #{cnn_forward.1} parent=5 // pred_check
        %p5370 = pneg %p5369
      $region82: #{cnn_forward.1} parent=5 // pred_check_branch
        %5372 = sbr.rel (%p5370) target = $region84
      $region83: #{cnn_forward.1} parent=5 // pred_region
        %s5373 = ssub.s32 %s23, 2
        // Predicated region
        $region85: #{cnn_forward.1} parent=83 // pred_check
          %p5374 = pneg %p351
        $region86: #{cnn_forward.1} parent=83 // pred_check_branch
          %5376 = sbr.rel (%p5374) target = $region88
        $region87: #{cnn_forward.1} parent=83 // pred_region
          %s5377 = sand.u32 %s336, 1
          %s5378 = scalar_lea.sflag [#allocation5], %s5377
          %s5379 = sand.u32 %s336, 1
          %s5380 = scalar_lea.vmem [#allocation4], %s5379
          %5381 = dma.done %s5378, 16
        $region88: #{cnn_forward.1} parent=83 // pred_fallthru
          _
      $region84: #{cnn_forward.1} parent=5 // pred_fallthru
        _
    $region6: #{cnn_forward.1} parent=1 // loop_footer
      %s27 = sadd.s32 1, %s23
    $region7: #{cnn_forward.1} parent=1 // loop_footer_branch
      %22 = sbr.rel target = $region3
    $region8: #{cnn_forward.1} parent=1 // loop_exit
      _
    %5382 = vsyncpa [#allocation5], 1
    %s5383 = scalar_lea.sflag [#allocation5], 1
    %5384 = vsyncpa %s5383, 1

</llo_original>
